<compile_context>
chip_gen: v5e
topology: v5e:2x2
jax: 0.10.0
libtpu: 0.0.40
codegen_flags: <defaults>
</compile_context>

<pallas_src>
import functools
import math

import jax
import jax.numpy as jnp
from jax.experimental import pallas as pl
from jax.experimental.pallas import tpu as pltpu


# ---------------------------------------------------------------------------
# In-kernel helpers
# ---------------------------------------------------------------------------
def _layer_norm(x, w, b, eps=1e-6):
    mu = jnp.mean(x, axis=-1, keepdims=True)
    var = jnp.mean((x - mu) ** 2, axis=-1, keepdims=True)
    return (x - mu) * jax.lax.rsqrt(var + eps) * w + b


def _gelu_exact(x):
    # torch.nn.GELU() default = exact erf-based GELU
    return 0.5 * x * (1.0 + jax.lax.erf(x * (1.0 / math.sqrt(2.0))))


# ---------------------------------------------------------------------------
# Fused per-batch Pallas kernel: patch-embed -> L encoder layers -> LN -> head
# ---------------------------------------------------------------------------
def vit_kernel(
    patches_ref, pw_ref, tokadd_ref,
    ln1w_ref, ln1b_ref,
    wq_ref, bq_ref, wk_ref, bk_ref, wv_ref, bv_ref, wo_ref, bo_ref,
    ln2w_ref, ln2b_ref,
    w1_ref, b1_ref, w2_ref, b2_ref,
    lnfw_ref, lnfb_ref, hw_ref, hb_ref,
    o_ref,
    *, S, D, H, L,
):
    Dh = D // H
    scale = 1.0 / math.sqrt(Dh)

    # --- Patch embedding + token assembly: one matmul + one add -------------
    # patches block has a zero row at the cls position; tok_add already holds
    # pos + [cls ; patch_bias], so t is the fully assembled (S, D) token slab.
    t = (jnp.dot(patches_ref[0], pw_ref[...],
                 preferred_element_type=jnp.float32) + tokadd_ref[...])

    # --- Encoder layers (static unroll, stacked weights indexed by layer) ---
    for l in range(L):
        # Multi-head self-attention sub-block (pre-LN), head-major weights.
        h1 = _layer_norm(t, ln1w_ref[l], ln1b_ref[l])            # (S, D)
        h1b = jnp.broadcast_to(h1, (H, S, D))                    # (H, S, D)
        qh = jnp.einsum("hnd,hde->hne", h1b, wq_ref[l],
                        preferred_element_type=jnp.float32) + bq_ref[l]
        kh = jnp.einsum("hnd,hde->hne", h1b, wk_ref[l],
                        preferred_element_type=jnp.float32) + bk_ref[l]
        vh = jnp.einsum("hnd,hde->hne", h1b, wv_ref[l],
                        preferred_element_type=jnp.float32) + bv_ref[l]

        s = jnp.einsum("hqd,hkd->hqk", qh, kh,
                       preferred_element_type=jnp.float32) * scale   # (H,S,S)
        s = s - jnp.max(s, axis=-1, keepdims=True)
        p = jnp.exp(s)
        p = p / jnp.sum(p, axis=-1, keepdims=True)                    # exact
        ctx = jnp.einsum("hqk,hkd->hqd", p, vh,
                         preferred_element_type=jnp.float32)          # (H,S,Dh)

        # Head merge folded into the output projection: per-head (Dh x D)
        # matmul, sum over heads -- no lane concats.
        attn = jnp.sum(
            jnp.einsum("hqd,hde->hqe", ctx, wo_ref[l],
                       preferred_element_type=jnp.float32),
            axis=0) + bo_ref[l]
        y = t + attn                          # residual (dropout = identity)

        # MLP sub-block (pre-LN); hidden dim is zero-padded to 128 lanes.
        h2 = _layer_norm(y, ln2w_ref[l], ln2b_ref[l])
        a = jnp.dot(h2, w1_ref[l], preferred_element_type=jnp.float32) + b1_ref[l]
        a = _gelu_exact(a)
        m = jnp.dot(a, w2_ref[l], preferred_element_type=jnp.float32) + b2_ref[l]
        t = y + m

    # --- x[:, 0] (row 0 of this batch's block) -> final LN -> head ----------
    hf = _layer_norm(t[0:1, :], lnfw_ref[...], lnfb_ref[...])     # (1, D)
    o_ref[0] = (jnp.dot(hf, hw_ref[...], preferred_element_type=jnp.float32)
                + hb_ref[...])                                    # (1, NCP)


def _full_spec(a):
    nd = a.ndim
    return pl.BlockSpec(a.shape, lambda b: (0,) * nd)


def vit_forward(x, params, *, P, num_heads):
    B, C, Himg, Wimg = x.shape
    n_h, n_w = Himg // P, Wimg // P
    NP = n_h * n_w
    CPP = C * P * P
    D = params["patch_w"].shape[1]
    S = NP + 1
    L = params["wq"].shape[0]
    H = num_heads
    Dh = D // H
    NC = params["head_w"].shape[1]
    MLP = params["w1"].shape[2]
    MLPP = ((MLP + 127) // 128) * 128       # lane-dense MLP hidden dim
    NCP = ((NC + 127) // 128) * 128         # lane-dense classifier output

    # ---- wrapper-side layout plumbing (tiny, one-time XLA ops) -------------
    # Patch unfold (Conv2d stride=P) as a rearrangement; zero row at the cls
    # position so in-kernel token assembly is a single matmul + add.
    patches = x.reshape(B, C, n_h, P, n_w, P).transpose(0, 2, 4, 1, 3, 5)
    patches = patches.reshape(B, NP, CPP)
    patches_pad = jnp.concatenate(
        [jnp.zeros((B, 1, CPP), jnp.float32), patches], axis=1)   # (B, S, CPP)
    tok_add = params["pos_embedding"] + jnp.concatenate(
        [params["class_token"],
         jnp.broadcast_to(params["patch_b"], (NP, D))], axis=0)   # (S, D)

    # Head-major attention weights: kills in-kernel head split / merge.
    wq = params["wq"].reshape(L, D, H, Dh).transpose(0, 2, 1, 3)  # (L,H,D,Dh)
    wk = params["wk"].reshape(L, D, H, Dh).transpose(0, 2, 1, 3)
    wv = params["wv"].reshape(L, D, H, Dh).transpose(0, 2, 1, 3)
    bq = params["bq"].reshape(L, 1, H, Dh).transpose(0, 2, 1, 3)  # (L,H,1,Dh)
    bk = params["bk"].reshape(L, 1, H, Dh).transpose(0, 2, 1, 3)
    bv = params["bv"].reshape(L, 1, H, Dh).transpose(0, 2, 1, 3)
    wo = params["wo"].reshape(L, H, Dh, D)                        # (L,H,Dh,D)

    # Zero-pad MLP hidden dim and classifier output to 128 lanes (safe:
    # GELU(0)=0 and padded rows/cols are zero -> no contribution).
    def pad_last(a, to):
        return jnp.pad(a, [(0, 0)] * (a.ndim - 1) + [(0, to - a.shape[-1])])

    w1 = pad_last(params["w1"], MLPP)
    b1 = pad_last(params["b1"], MLPP)
    w2 = jnp.pad(params["w2"], ((0, 0), (0, MLPP - MLP), (0, 0)))
    hw = pad_last(params["head_w"], NCP)
    hb = pad_last(params["head_b"], NCP)

    inputs = [
        patches_pad, params["patch_w"], tok_add,
        params["ln1_w"], params["ln1_b"],
        wq, bq, wk, bk, wv, bv, wo, params["bo"],
        params["ln2_w"], params["ln2_b"],
        w1, b1, w2, params["b2"],
        params["ln_f_w"], params["ln_f_b"],
        hw, hb,
    ]

    in_specs = ([pl.BlockSpec((1, S, CPP), lambda b: (b, 0, 0))]
                + [_full_spec(a) for a in inputs[1:]])

    kern = functools.partial(vit_kernel, S=S, D=D, H=H, L=L)

    out = pl.pallas_call(
        kern,
        grid=(B,),
        out_shape=jax.ShapeDtypeStruct((B, 1, NCP), jnp.float32),
        in_specs=in_specs,
        out_specs=pl.BlockSpec((1, 1, NCP), lambda b: (b, 0, 0)),
        compiler_params=pltpu.CompilerParams(
            dimension_semantics=("parallel",)),
    )(*inputs)
    return out[:, 0, :NC]


# ---------------------------------------------------------------------------
# Parameter init (deterministic, synthetic; not a checkpoint load)
# ---------------------------------------------------------------------------
def init_params(key, *, C, P, D, mlp_dim, num_layers, num_classes, seq_len):
    ks = jax.random.split(key, 18)
    L = num_layers

    def nrm(k, shape, scale=0.02):
        return scale * jax.random.normal(k, shape, dtype=jnp.float32)

    return {
        "patch_w": nrm(ks[0], (C * P * P, D)),     # Conv2d(C,D,P,P) reshaped
        "patch_b": nrm(ks[1], (1, D)),
        "class_token": nrm(ks[2], (1, D)),
        "pos_embedding": nrm(ks[3], (seq_len, D)),
        "ln1_w": jnp.ones((L, 1, D), jnp.float32),
        "ln1_b": jnp.zeros((L, 1, D), jnp.float32),
        "wq": nrm(ks[4], (L, D, D)), "bq": nrm(ks[5], (L, 1, D)),
        "wk": nrm(ks[6], (L, D, D)), "bk": nrm(ks[7], (L, 1, D)),
        "wv": nrm(ks[8], (L, D, D)), "bv": nrm(ks[9], (L, 1, D)),
        "wo": nrm(ks[10], (L, D, D)), "bo": nrm(ks[11], (L, 1, D)),
        "ln2_w": jnp.ones((L, 1, D), jnp.float32),
        "ln2_b": jnp.zeros((L, 1, D), jnp.float32),
        "w1": nrm(ks[12], (L, D, mlp_dim)), "b1": nrm(ks[13], (L, 1, mlp_dim)),
        "w2": nrm(ks[14], (L, mlp_dim, D)), "b2": nrm(ks[15], (L, 1, D)),
        "ln_f_w": jnp.ones((1, D), jnp.float32),
        "ln_f_b": jnp.zeros((1, D), jnp.float32),
        "head_w": nrm(ks[16], (D, num_classes)),   # new_heads Linear
        "head_b": nrm(ks[17], (1, num_classes)),
    }


# ---------------------------------------------------------------------------
# Pure-JAX reference (numerical sanity check)
# ---------------------------------------------------------------------------
def _ln_ref(x, w, b, eps=1e-6):
    mu = jnp.mean(x, axis=-1, keepdims=True)
    var = jnp.mean((x - mu) ** 2, axis=-1, keepdims=True)
    return (x - mu) / jnp.sqrt(var + eps) * w + b


def vit_reference(x, params, *, P, num_heads):
    B, C, Himg, Wimg = x.shape
    n_h, n_w = Himg // P, Wimg // P
    NP = n_h * n_w
    D = params["patch_w"].shape[1]
    L = params["wq"].shape[0]
    Dh = D // num_heads

    patches = x.reshape(B, C, n_h, P, n_w, P).transpose(0, 2, 4, 1, 3, 5)
    patches = patches.reshape(B, NP, C * P * P)
    tok = patches @ params["patch_w"] + params["patch_b"][0]
    cls = jnp.broadcast_to(params["class_token"][None], (B, 1, D))
    t = jnp.concatenate([cls, tok], axis=1) + params["pos_embedding"][None]
    S = t.shape[1]

    for l in range(L):
        h = _ln_ref(t, params["ln1_w"][l, 0], params["ln1_b"][l, 0])
        q = h @ params["wq"][l] + params["bq"][l, 0]
        k = h @ params["wk"][l] + params["bk"][l, 0]
        v = h @ params["wv"][l] + params["bv"][l, 0]
        sh = lambda a: a.reshape(B, S, num_heads, Dh).transpose(0, 2, 1, 3)
        qh, kh, vh = sh(q), sh(k), sh(v)
        s = jnp.einsum("bhqd,bhkd->bhqk", qh, kh) / math.sqrt(Dh)
        p = jax.nn.softmax(s, axis=-1)
        a = jnp.einsum("bhqk,bhkd->bhqd", p, vh).transpose(0, 2, 1, 3)
        t = t + (a.reshape(B, S, D) @ params["wo"][l] + params["bo"][l, 0])
        h2 = _ln_ref(t, params["ln2_w"][l, 0], params["ln2_b"][l, 0])
        m = jax.nn.gelu(h2 @ params["w1"][l] + params["b1"][l, 0],
                        approximate=False)
        t = t + (m @ params["w2"][l] + params["b2"][l, 0])

    cls_out = _ln_ref(t[:, 0, :], params["ln_f_w"][0], params["ln_f_b"][0])
    return cls_out @ params["head_w"] + params["head_b"][0]


if __name__ == "__main__":
    B, C, IMG, P = 2, 3, 32, 16
    D, num_heads, mlp_dim, num_layers, num_classes = 32, 4, 64, 2, 10
    n_patches = (IMG // P) ** 2
    seq_len = n_patches + 1

    key = jax.random.PRNGKey(0)
    pkey, xkey = jax.random.split(key)
    params = init_params(pkey, C=C, P=P, D=D, mlp_dim=mlp_dim,
                         num_layers=num_layers, num_classes=num_classes,
                         seq_len=seq_len)
    x = jax.random.normal(xkey, (B, C, IMG, IMG), dtype=jnp.float32)

    fwd = jax.jit(functools.partial(vit_forward, P=P, num_heads=num_heads))
    out = jax.block_until_ready(fwd(x, params))
    ref = jax.block_until_ready(vit_reference(x, params, P=P, num_heads=num_heads))

    assert out.shape == (B, num_classes)
    assert jnp.allclose(out, ref, rtol=2e-3, atol=2e-3), float(
        jnp.max(jnp.abs(out - ref)))
    print("KERNEL_OK")
</pallas_src>

<mosaic_0001>
module attributes {stable_mosaic.version = 11 : i64} {
  func.func @vit_kernel(%arg0: i32, %arg1: memref<1x5x768xf32, #tpu.memory_space<vmem>>, %arg2: memref<768x32xf32, #tpu.memory_space<vmem>>, %arg3: memref<5x32xf32, #tpu.memory_space<vmem>>, %arg4: memref<2x1x32xf32, #tpu.memory_space<vmem>>, %arg5: memref<2x1x32xf32, #tpu.memory_space<vmem>>, %arg6: memref<2x4x32x8xf32, #tpu.memory_space<vmem>>, %arg7: memref<2x4x1x8xf32, #tpu.memory_space<vmem>>, %arg8: memref<2x4x32x8xf32, #tpu.memory_space<vmem>>, %arg9: memref<2x4x1x8xf32, #tpu.memory_space<vmem>>, %arg10: memref<2x4x32x8xf32, #tpu.memory_space<vmem>>, %arg11: memref<2x4x1x8xf32, #tpu.memory_space<vmem>>, %arg12: memref<2x4x8x32xf32, #tpu.memory_space<vmem>>, %arg13: memref<2x1x32xf32, #tpu.memory_space<vmem>>, %arg14: memref<2x1x32xf32, #tpu.memory_space<vmem>>, %arg15: memref<2x1x32xf32, #tpu.memory_space<vmem>>, %arg16: memref<2x32x128xf32, #tpu.memory_space<vmem>>, %arg17: memref<2x1x128xf32, #tpu.memory_space<vmem>>, %arg18: memref<2x128x32xf32, #tpu.memory_space<vmem>>, %arg19: memref<2x1x32xf32, #tpu.memory_space<vmem>>, %arg20: memref<1x32xf32, #tpu.memory_space<vmem>>, %arg21: memref<1x32xf32, #tpu.memory_space<vmem>>, %arg22: memref<32x128xf32, #tpu.memory_space<vmem>>, %arg23: memref<1x128xf32, #tpu.memory_space<vmem>>, %arg24: memref<1x1x128xf32, #tpu.memory_space<vmem>>) attributes {dimension_semantics = [#tpu.dimension_semantics<parallel>], iteration_bounds = array<i64: 2>, scalar_prefetch = 0 : i64, scratch_operands = 0 : i64, tpu.core_type = #tpu.core_type<tc>, window_params = [{transform_indices = @transform_0, window_bounds = array<i64: 1, 5, 768>}, {pipeline_mode = #tpu.pipeline_mode<synchronous>, transform_indices = @transform_1, window_bounds = array<i64: 768, 32>}, {pipeline_mode = #tpu.pipeline_mode<synchronous>, transform_indices = @transform_2, window_bounds = array<i64: 5, 32>}, {pipeline_mode = #tpu.pipeline_mode<synchronous>, transform_indices = @transform_3, window_bounds = array<i64: 2, 1, 32>}, {pipeline_mode = #tpu.pipeline_mode<synchronous>, transform_indices = @transform_4, window_bounds = array<i64: 2, 1, 32>}, {pipeline_mode = #tpu.pipeline_mode<synchronous>, transform_indices = @transform_5, window_bounds = array<i64: 2, 4, 32, 8>}, {pipeline_mode = #tpu.pipeline_mode<synchronous>, transform_indices = @transform_6, window_bounds = array<i64: 2, 4, 1, 8>}, {pipeline_mode = #tpu.pipeline_mode<synchronous>, transform_indices = @transform_7, window_bounds = array<i64: 2, 4, 32, 8>}, {pipeline_mode = #tpu.pipeline_mode<synchronous>, transform_indices = @transform_8, window_bounds = array<i64: 2, 4, 1, 8>}, {pipeline_mode = #tpu.pipeline_mode<synchronous>, transform_indices = @transform_9, window_bounds = array<i64: 2, 4, 32, 8>}, {pipeline_mode = #tpu.pipeline_mode<synchronous>, transform_indices = @transform_10, window_bounds = array<i64: 2, 4, 1, 8>}, {pipeline_mode = #tpu.pipeline_mode<synchronous>, transform_indices = @transform_11, window_bounds = array<i64: 2, 4, 8, 32>}, {pipeline_mode = #tpu.pipeline_mode<synchronous>, transform_indices = @transform_12, window_bounds = array<i64: 2, 1, 32>}, {pipeline_mode = #tpu.pipeline_mode<synchronous>, transform_indices = @transform_13, window_bounds = array<i64: 2, 1, 32>}, {pipeline_mode = #tpu.pipeline_mode<synchronous>, transform_indices = @transform_14, window_bounds = array<i64: 2, 1, 32>}, {pipeline_mode = #tpu.pipeline_mode<synchronous>, transform_indices = @transform_15, window_bounds = array<i64: 2, 32, 128>}, {pipeline_mode = #tpu.pipeline_mode<synchronous>, transform_indices = @transform_16, window_bounds = array<i64: 2, 1, 128>}, {pipeline_mode = #tpu.pipeline_mode<synchronous>, transform_indices = @transform_17, window_bounds = array<i64: 2, 128, 32>}, {pipeline_mode = #tpu.pipeline_mode<synchronous>, transform_indices = @transform_18, window_bounds = array<i64: 2, 1, 32>}, {pipeline_mode = #tpu.pipeline_mode<synchronous>, transform_indices = @transform_19, window_bounds = array<i64: 1, 32>}, {pipeline_mode = #tpu.pipeline_mode<synchronous>, transform_indices = @transform_20, window_bounds = array<i64: 1, 32>}, {pipeline_mode = #tpu.pipeline_mode<synchronous>, transform_indices = @transform_21, window_bounds = array<i64: 32, 128>}, {pipeline_mode = #tpu.pipeline_mode<synchronous>, transform_indices = @transform_22, window_bounds = array<i64: 1, 128>}, {transform_indices = @transform_23, window_bounds = array<i64: 1, 1, 128>}]} {
    %c0 = arith.constant 0 : index
    %c0_0 = arith.constant 0 : index
    %c0_1 = arith.constant 0 : index
    %0 = vector.load %arg1[%c0, %c0_0, %c0_1] : memref<1x5x768xf32, #tpu.memory_space<vmem>>, vector<1x5x768xf32>
    %1 = vector.shape_cast %0 : vector<1x5x768xf32> to vector<5x768xf32>
    %c0_2 = arith.constant 0 : index
    %c0_3 = arith.constant 0 : index
    %2 = vector.load %arg2[%c0_2, %c0_3] : memref<768x32xf32, #tpu.memory_space<vmem>>, vector<768x32xf32>
    %cst = arith.constant dense<0.000000e+00> : vector<5x32xf32>
    %3 = tpu.matmul %1, %2, %cst {dimension_numbers = #tpu.dot_dimension_numbers<[1], [0], [0], [1], [0, 0, 1, 1], [], []>} : vector<5x768xf32>, vector<768x32xf32>, vector<5x32xf32> -> vector<5x32xf32>
    %c0_4 = arith.constant 0 : index
    %c0_5 = arith.constant 0 : index
    %4 = vector.load %arg3[%c0_4, %c0_5] : memref<5x32xf32, #tpu.memory_space<vmem>>, vector<5x32xf32>
    %5 = arith.addf %3, %4 : vector<5x32xf32>
    %c0_6 = arith.constant 0 : index
    %c0_7 = arith.constant 0 : index
    %c0_8 = arith.constant 0 : index
    %6 = vector.load %arg4[%c0_6, %c0_7, %c0_8] : memref<2x1x32xf32, #tpu.memory_space<vmem>>, vector<1x1x32xf32>
    %7 = vector.shape_cast %6 : vector<1x1x32xf32> to vector<1x32xf32>
    %c0_9 = arith.constant 0 : index
    %c0_10 = arith.constant 0 : index
    %c0_11 = arith.constant 0 : index
    %8 = vector.load %arg5[%c0_9, %c0_10, %c0_11] : memref<2x1x32xf32, #tpu.memory_space<vmem>>, vector<1x1x32xf32>
    %9 = vector.shape_cast %8 : vector<1x1x32xf32> to vector<1x32xf32>
    %cst_12 = arith.constant dense<0.000000e+00> : vector<5xf32>
    %10 = vector.multi_reduction <add>, %5, %cst_12 [1] : vector<5x32xf32> to vector<5xf32>
    %11 = vector.shape_cast %10 : vector<5xf32> to vector<5x1xf32>
    %cst_13 = arith.constant 3.200000e+01 : f32
    %12 = vector.broadcast %cst_13 : f32 to vector<5x1xf32>
    %13 = arith.divf %11, %12 : vector<5x1xf32>
    %14 = vector.broadcast %13 : vector<5x1xf32> to vector<5x32xf32>
    %15 = arith.subf %5, %14 : vector<5x32xf32>
    %16 = arith.mulf %15, %15 : vector<5x32xf32>
    %cst_14 = arith.constant dense<0.000000e+00> : vector<5xf32>
    %17 = vector.multi_reduction <add>, %16, %cst_14 [1] : vector<5x32xf32> to vector<5xf32>
    %18 = vector.shape_cast %17 : vector<5xf32> to vector<5x1xf32>
    %cst_15 = arith.constant 3.200000e+01 : f32
    %19 = vector.broadcast %cst_15 : f32 to vector<5x1xf32>
    %20 = arith.divf %18, %19 : vector<5x1xf32>
    %21 = vector.broadcast %13 : vector<5x1xf32> to vector<5x32xf32>
    %22 = arith.subf %5, %21 : vector<5x32xf32>
    %cst_16 = arith.constant 9.99999997E-7 : f32
    %23 = vector.broadcast %cst_16 : f32 to vector<5x1xf32>
    %24 = arith.addf %20, %23 : vector<5x1xf32>
    %25 = math.rsqrt %24 : vector<5x1xf32>
    %26 = vector.broadcast %25 : vector<5x1xf32> to vector<5x32xf32>
    %27 = arith.mulf %22, %26 : vector<5x32xf32>
    %28 = vector.broadcast %7 : vector<1x32xf32> to vector<5x32xf32>
    %29 = arith.mulf %27, %28 : vector<5x32xf32>
    %30 = vector.broadcast %9 : vector<1x32xf32> to vector<5x32xf32>
    %31 = arith.addf %29, %30 : vector<5x32xf32>
    %32 = vector.shape_cast %31 : vector<5x32xf32> to vector<1x5x32xf32>
    %33 = vector.broadcast %32 : vector<1x5x32xf32> to vector<4x5x32xf32>
    %c0_17 = arith.constant 0 : index
    %c0_18 = arith.constant 0 : index
    %c0_19 = arith.constant 0 : index
    %c0_20 = arith.constant 0 : index
    %34 = vector.load %arg6[%c0_17, %c0_18, %c0_19, %c0_20] : memref<2x4x32x8xf32, #tpu.memory_space<vmem>>, vector<1x4x32x8xf32>
    %35 = vector.shape_cast %34 : vector<1x4x32x8xf32> to vector<4x32x8xf32>
    "tpu.trace_start"() <{level = 10 : i32, message = "hnd,hde->hne"}> : () -> ()
    %cst_21 = arith.constant dense<0.000000e+00> : vector<4x5x8xf32>
    %36 = tpu.matmul %33, %35, %cst_21 {dimension_numbers = #tpu.dot_dimension_numbers<[2], [1], [1], [2], [0, 0, 0, 1, 1, 2], [0], [0]>} : vector<4x5x32xf32>, vector<4x32x8xf32>, vector<4x5x8xf32> -> vector<4x5x8xf32>
    "tpu.trace_stop"() : () -> ()
    %c0_22 = arith.constant 0 : index
    %c0_23 = arith.constant 0 : index
    %c0_24 = arith.constant 0 : index
    %c0_25 = arith.constant 0 : index
    %37 = vector.load %arg7[%c0_22, %c0_23, %c0_24, %c0_25] : memref<2x4x1x8xf32, #tpu.memory_space<vmem>>, vector<1x4x1x8xf32>
    %38 = vector.shape_cast %37 : vector<1x4x1x8xf32> to vector<4x1x8xf32>
    %39 = vector.broadcast %38 : vector<4x1x8xf32> to vector<4x5x8xf32>
    %40 = arith.addf %36, %39 : vector<4x5x8xf32>
    %c0_26 = arith.constant 0 : index
    %c0_27 = arith.constant 0 : index
    %c0_28 = arith.constant 0 : index
    %c0_29 = arith.constant 0 : index
    %41 = vector.load %arg8[%c0_26, %c0_27, %c0_28, %c0_29] : memref<2x4x32x8xf32, #tpu.memory_space<vmem>>, vector<1x4x32x8xf32>
    %42 = vector.shape_cast %41 : vector<1x4x32x8xf32> to vector<4x32x8xf32>
    "tpu.trace_start"() <{level = 10 : i32, message = "hnd,hde->hne"}> : () -> ()
    %cst_30 = arith.constant dense<0.000000e+00> : vector<4x5x8xf32>
    %43 = tpu.matmul %33, %42, %cst_30 {dimension_numbers = #tpu.dot_dimension_numbers<[2], [1], [1], [2], [0, 0, 0, 1, 1, 2], [0], [0]>} : vector<4x5x32xf32>, vector<4x32x8xf32>, vector<4x5x8xf32> -> vector<4x5x8xf32>
    "tpu.trace_stop"() : () -> ()
    %c0_31 = arith.constant 0 : index
    %c0_32 = arith.constant 0 : index
    %c0_33 = arith.constant 0 : index
    %c0_34 = arith.constant 0 : index
    %44 = vector.load %arg9[%c0_31, %c0_32, %c0_33, %c0_34] : memref<2x4x1x8xf32, #tpu.memory_space<vmem>>, vector<1x4x1x8xf32>
    %45 = vector.shape_cast %44 : vector<1x4x1x8xf32> to vector<4x1x8xf32>
    %46 = vector.broadcast %45 : vector<4x1x8xf32> to vector<4x5x8xf32>
    %47 = arith.addf %43, %46 : vector<4x5x8xf32>
    %c0_35 = arith.constant 0 : index
    %c0_36 = arith.constant 0 : index
    %c0_37 = arith.constant 0 : index
    %c0_38 = arith.constant 0 : index
    %48 = vector.load %arg10[%c0_35, %c0_36, %c0_37, %c0_38] : memref<2x4x32x8xf32, #tpu.memory_space<vmem>>, vector<1x4x32x8xf32>
    %49 = vector.shape_cast %48 : vector<1x4x32x8xf32> to vector<4x32x8xf32>
    "tpu.trace_start"() <{level = 10 : i32, message = "hnd,hde->hne"}> : () -> ()
    %cst_39 = arith.constant dense<0.000000e+00> : vector<4x5x8xf32>
    %50 = tpu.matmul %33, %49, %cst_39 {dimension_numbers = #tpu.dot_dimension_numbers<[2], [1], [1], [2], [0, 0, 0, 1, 1, 2], [0], [0]>} : vector<4x5x32xf32>, vector<4x32x8xf32>, vector<4x5x8xf32> -> vector<4x5x8xf32>
    "tpu.trace_stop"() : () -> ()
    %c0_40 = arith.constant 0 : index
    %c0_41 = arith.constant 0 : index
    %c0_42 = arith.constant 0 : index
    %c0_43 = arith.constant 0 : index
    %51 = vector.load %arg11[%c0_40, %c0_41, %c0_42, %c0_43] : memref<2x4x1x8xf32, #tpu.memory_space<vmem>>, vector<1x4x1x8xf32>
    %52 = vector.shape_cast %51 : vector<1x4x1x8xf32> to vector<4x1x8xf32>
    %53 = vector.broadcast %52 : vector<4x1x8xf32> to vector<4x5x8xf32>
    %54 = arith.addf %50, %53 : vector<4x5x8xf32>
    "tpu.trace_start"() <{level = 10 : i32, message = "hqd,hkd->hqk"}> : () -> ()
    %cst_44 = arith.constant dense<0.000000e+00> : vector<4x5x5xf32>
    %55 = tpu.matmul %40, %47, %cst_44 {dimension_numbers = #tpu.dot_dimension_numbers<[2], [2], [1], [1], [0, 0, 0, 1, 1, 1], [0], [0]>} : vector<4x5x8xf32>, vector<4x5x8xf32>, vector<4x5x5xf32> -> vector<4x5x5xf32>
    "tpu.trace_stop"() : () -> ()
    %cst_45 = arith.constant 0.353553385 : f32
    %56 = vector.broadcast %cst_45 : f32 to vector<4x5x5xf32>
    %57 = arith.mulf %55, %56 : vector<4x5x5xf32>
    %cst_46 = arith.constant dense<0xFF800000> : vector<4x5xf32>
    %58 = vector.multi_reduction <maximumf>, %57, %cst_46 [2] : vector<4x5x5xf32> to vector<4x5xf32>
    %59 = vector.shape_cast %58 : vector<4x5xf32> to vector<4x5x1xf32>
    %60 = vector.broadcast %59 : vector<4x5x1xf32> to vector<4x5x5xf32>
    %61 = arith.subf %57, %60 : vector<4x5x5xf32>
    %62 = math.exp %61 : vector<4x5x5xf32>
    %cst_47 = arith.constant dense<0.000000e+00> : vector<4x5xf32>
    %63 = vector.multi_reduction <add>, %62, %cst_47 [2] : vector<4x5x5xf32> to vector<4x5xf32>
    %64 = vector.shape_cast %63 : vector<4x5xf32> to vector<4x5x1xf32>
    %65 = vector.broadcast %64 : vector<4x5x1xf32> to vector<4x5x5xf32>
    %66 = arith.divf %62, %65 : vector<4x5x5xf32>
    "tpu.trace_start"() <{level = 10 : i32, message = "hqk,hkd->hqd"}> : () -> ()
    %cst_48 = arith.constant dense<0.000000e+00> : vector<4x5x8xf32>
    %67 = tpu.matmul %66, %54, %cst_48 {dimension_numbers = #tpu.dot_dimension_numbers<[2], [1], [1], [2], [0, 0, 0, 1, 1, 2], [0], [0]>} : vector<4x5x5xf32>, vector<4x5x8xf32>, vector<4x5x8xf32> -> vector<4x5x8xf32>
    "tpu.trace_stop"() : () -> ()
    %c0_49 = arith.constant 0 : index
    %c0_50 = arith.constant 0 : index
    %c0_51 = arith.constant 0 : index
    %c0_52 = arith.constant 0 : index
    %68 = vector.load %arg12[%c0_49, %c0_50, %c0_51, %c0_52] : memref<2x4x8x32xf32, #tpu.memory_space<vmem>>, vector<1x4x8x32xf32>
    %69 = vector.shape_cast %68 : vector<1x4x8x32xf32> to vector<4x8x32xf32>
    "tpu.trace_start"() <{level = 10 : i32, message = "hqd,hde->hqe"}> : () -> ()
    %cst_53 = arith.constant dense<0.000000e+00> : vector<4x5x32xf32>
    %70 = tpu.matmul %67, %69, %cst_53 {dimension_numbers = #tpu.dot_dimension_numbers<[2], [1], [1], [2], [0, 0, 0, 1, 1, 2], [0], [0]>} : vector<4x5x8xf32>, vector<4x8x32xf32>, vector<4x5x32xf32> -> vector<4x5x32xf32>
    "tpu.trace_stop"() : () -> ()
    %cst_54 = arith.constant dense<0.000000e+00> : vector<5x32xf32>
    %71 = vector.multi_reduction <add>, %70, %cst_54 [0] : vector<4x5x32xf32> to vector<5x32xf32>
    %c0_55 = arith.constant 0 : index
    %c0_56 = arith.constant 0 : index
    %c0_57 = arith.constant 0 : index
    %72 = vector.load %arg13[%c0_55, %c0_56, %c0_57] : memref<2x1x32xf32, #tpu.memory_space<vmem>>, vector<1x1x32xf32>
    %73 = vector.shape_cast %72 : vector<1x1x32xf32> to vector<1x32xf32>
    %74 = vector.broadcast %73 : vector<1x32xf32> to vector<5x32xf32>
    %75 = arith.addf %71, %74 : vector<5x32xf32>
    %76 = arith.addf %5, %75 : vector<5x32xf32>
    %c0_58 = arith.constant 0 : index
    %c0_59 = arith.constant 0 : index
    %c0_60 = arith.constant 0 : index
    %77 = vector.load %arg14[%c0_58, %c0_59, %c0_60] : memref<2x1x32xf32, #tpu.memory_space<vmem>>, vector<1x1x32xf32>
    %78 = vector.shape_cast %77 : vector<1x1x32xf32> to vector<1x32xf32>
    %c0_61 = arith.constant 0 : index
    %c0_62 = arith.constant 0 : index
    %c0_63 = arith.constant 0 : index
    %79 = vector.load %arg15[%c0_61, %c0_62, %c0_63] : memref<2x1x32xf32, #tpu.memory_space<vmem>>, vector<1x1x32xf32>
    %80 = vector.shape_cast %79 : vector<1x1x32xf32> to vector<1x32xf32>
    %cst_64 = arith.constant dense<0.000000e+00> : vector<5xf32>
    %81 = vector.multi_reduction <add>, %76, %cst_64 [1] : vector<5x32xf32> to vector<5xf32>
    %82 = vector.shape_cast %81 : vector<5xf32> to vector<5x1xf32>
    %cst_65 = arith.constant 3.200000e+01 : f32
    %83 = vector.broadcast %cst_65 : f32 to vector<5x1xf32>
    %84 = arith.divf %82, %83 : vector<5x1xf32>
    %85 = vector.broadcast %84 : vector<5x1xf32> to vector<5x32xf32>
    %86 = arith.subf %76, %85 : vector<5x32xf32>
    %87 = arith.mulf %86, %86 : vector<5x32xf32>
    %cst_66 = arith.constant dense<0.000000e+00> : vector<5xf32>
    %88 = vector.multi_reduction <add>, %87, %cst_66 [1] : vector<5x32xf32> to vector<5xf32>
    %89 = vector.shape_cast %88 : vector<5xf32> to vector<5x1xf32>
    %cst_67 = arith.constant 3.200000e+01 : f32
    %90 = vector.broadcast %cst_67 : f32 to vector<5x1xf32>
    %91 = arith.divf %89, %90 : vector<5x1xf32>
    %92 = vector.broadcast %84 : vector<5x1xf32> to vector<5x32xf32>
    %93 = arith.subf %76, %92 : vector<5x32xf32>
    %cst_68 = arith.constant 9.99999997E-7 : f32
    %94 = vector.broadcast %cst_68 : f32 to vector<5x1xf32>
    %95 = arith.addf %91, %94 : vector<5x1xf32>
    %96 = math.rsqrt %95 : vector<5x1xf32>
    %97 = vector.broadcast %96 : vector<5x1xf32> to vector<5x32xf32>
    %98 = arith.mulf %93, %97 : vector<5x32xf32>
    %99 = vector.broadcast %78 : vector<1x32xf32> to vector<5x32xf32>
    %100 = arith.mulf %98, %99 : vector<5x32xf32>
    %101 = vector.broadcast %80 : vector<1x32xf32> to vector<5x32xf32>
    %102 = arith.addf %100, %101 : vector<5x32xf32>
    %c0_69 = arith.constant 0 : index
    %c0_70 = arith.constant 0 : index
    %c0_71 = arith.constant 0 : index
    %103 = vector.load %arg16[%c0_69, %c0_70, %c0_71] : memref<2x32x128xf32, #tpu.memory_space<vmem>>, vector<1x32x128xf32>
    %104 = vector.shape_cast %103 : vector<1x32x128xf32> to vector<32x128xf32>
    %cst_72 = arith.constant dense<0.000000e+00> : vector<5x128xf32>
    %105 = tpu.matmul %102, %104, %cst_72 {dimension_numbers = #tpu.dot_dimension_numbers<[1], [0], [0], [1], [0, 0, 1, 1], [], []>} : vector<5x32xf32>, vector<32x128xf32>, vector<5x128xf32> -> vector<5x128xf32>
    %c0_73 = arith.constant 0 : index
    %c0_74 = arith.constant 0 : index
    %c0_75 = arith.constant 0 : index
    %106 = vector.load %arg17[%c0_73, %c0_74, %c0_75] : memref<2x1x128xf32, #tpu.memory_space<vmem>>, vector<1x1x128xf32>
    %107 = vector.shape_cast %106 : vector<1x1x128xf32> to vector<1x128xf32>
    %108 = vector.broadcast %107 : vector<1x128xf32> to vector<5x128xf32>
    %109 = arith.addf %105, %108 : vector<5x128xf32>
    %cst_76 = arith.constant 5.000000e-01 : f32
    %110 = vector.broadcast %cst_76 : f32 to vector<5x128xf32>
    %111 = arith.mulf %110, %109 : vector<5x128xf32>
    %cst_77 = arith.constant 0.707106769 : f32
    %112 = vector.broadcast %cst_77 : f32 to vector<5x128xf32>
    %113 = arith.mulf %109, %112 : vector<5x128xf32>
    %114 = math.erf %113 : vector<5x128xf32>
    %cst_78 = arith.constant 1.000000e+00 : f32
    %115 = vector.broadcast %cst_78 : f32 to vector<5x128xf32>
    %116 = arith.addf %115, %114 : vector<5x128xf32>
    %117 = arith.mulf %111, %116 : vector<5x128xf32>
    %c0_79 = arith.constant 0 : index
    %c0_80 = arith.constant 0 : index
    %c0_81 = arith.constant 0 : index
    %118 = vector.load %arg18[%c0_79, %c0_80, %c0_81] : memref<2x128x32xf32, #tpu.memory_space<vmem>>, vector<1x128x32xf32>
    %119 = vector.shape_cast %118 : vector<1x128x32xf32> to vector<128x32xf32>
    %cst_82 = arith.constant dense<0.000000e+00> : vector<5x32xf32>
    %120 = tpu.matmul %117, %119, %cst_82 {dimension_numbers = #tpu.dot_dimension_numbers<[1], [0], [0], [1], [0, 0, 1, 1], [], []>} : vector<5x128xf32>, vector<128x32xf32>, vector<5x32xf32> -> vector<5x32xf32>
    %c0_83 = arith.constant 0 : index
    %c0_84 = arith.constant 0 : index
    %c0_85 = arith.constant 0 : index
    %121 = vector.load %arg19[%c0_83, %c0_84, %c0_85] : memref<2x1x32xf32, #tpu.memory_space<vmem>>, vector<1x1x32xf32>
    %122 = vector.shape_cast %121 : vector<1x1x32xf32> to vector<1x32xf32>
    %123 = vector.broadcast %122 : vector<1x32xf32> to vector<5x32xf32>
    %124 = arith.addf %120, %123 : vector<5x32xf32>
    %125 = arith.addf %76, %124 : vector<5x32xf32>
    %c1 = arith.constant 1 : index
    %c0_86 = arith.constant 0 : index
    %c0_87 = arith.constant 0 : index
    %126 = vector.load %arg4[%c1, %c0_86, %c0_87] : memref<2x1x32xf32, #tpu.memory_space<vmem>>, vector<1x1x32xf32>
    %127 = vector.shape_cast %126 : vector<1x1x32xf32> to vector<1x32xf32>
    %c1_88 = arith.constant 1 : index
    %c0_89 = arith.constant 0 : index
    %c0_90 = arith.constant 0 : index
    %128 = vector.load %arg5[%c1_88, %c0_89, %c0_90] : memref<2x1x32xf32, #tpu.memory_space<vmem>>, vector<1x1x32xf32>
    %129 = vector.shape_cast %128 : vector<1x1x32xf32> to vector<1x32xf32>
    %cst_91 = arith.constant dense<0.000000e+00> : vector<5xf32>
    %130 = vector.multi_reduction <add>, %125, %cst_91 [1] : vector<5x32xf32> to vector<5xf32>
    %131 = vector.shape_cast %130 : vector<5xf32> to vector<5x1xf32>
    %cst_92 = arith.constant 3.200000e+01 : f32
    %132 = vector.broadcast %cst_92 : f32 to vector<5x1xf32>
    %133 = arith.divf %131, %132 : vector<5x1xf32>
    %134 = vector.broadcast %133 : vector<5x1xf32> to vector<5x32xf32>
    %135 = arith.subf %125, %134 : vector<5x32xf32>
    %136 = arith.mulf %135, %135 : vector<5x32xf32>
    %cst_93 = arith.constant dense<0.000000e+00> : vector<5xf32>
    %137 = vector.multi_reduction <add>, %136, %cst_93 [1] : vector<5x32xf32> to vector<5xf32>
    %138 = vector.shape_cast %137 : vector<5xf32> to vector<5x1xf32>
    %cst_94 = arith.constant 3.200000e+01 : f32
    %139 = vector.broadcast %cst_94 : f32 to vector<5x1xf32>
    %140 = arith.divf %138, %139 : vector<5x1xf32>
    %141 = vector.broadcast %133 : vector<5x1xf32> to vector<5x32xf32>
    %142 = arith.subf %125, %141 : vector<5x32xf32>
    %cst_95 = arith.constant 9.99999997E-7 : f32
    %143 = vector.broadcast %cst_95 : f32 to vector<5x1xf32>
    %144 = arith.addf %140, %143 : vector<5x1xf32>
    %145 = math.rsqrt %144 : vector<5x1xf32>
    %146 = vector.broadcast %145 : vector<5x1xf32> to vector<5x32xf32>
    %147 = arith.mulf %142, %146 : vector<5x32xf32>
    %148 = vector.broadcast %127 : vector<1x32xf32> to vector<5x32xf32>
    %149 = arith.mulf %147, %148 : vector<5x32xf32>
    %150 = vector.broadcast %129 : vector<1x32xf32> to vector<5x32xf32>
    %151 = arith.addf %149, %150 : vector<5x32xf32>
    %152 = vector.shape_cast %151 : vector<5x32xf32> to vector<1x5x32xf32>
    %153 = vector.broadcast %152 : vector<1x5x32xf32> to vector<4x5x32xf32>
    %c1_96 = arith.constant 1 : index
    %c0_97 = arith.constant 0 : index
    %c0_98 = arith.constant 0 : index
    %c0_99 = arith.constant 0 : index
    %154 = vector.load %arg6[%c1_96, %c0_97, %c0_98, %c0_99] : memref<2x4x32x8xf32, #tpu.memory_space<vmem>>, vector<1x4x32x8xf32>
    %155 = vector.shape_cast %154 : vector<1x4x32x8xf32> to vector<4x32x8xf32>
    "tpu.trace_start"() <{level = 10 : i32, message = "hnd,hde->hne"}> : () -> ()
    %cst_100 = arith.constant dense<0.000000e+00> : vector<4x5x8xf32>
    %156 = tpu.matmul %153, %155, %cst_100 {dimension_numbers = #tpu.dot_dimension_numbers<[2], [1], [1], [2], [0, 0, 0, 1, 1, 2], [0], [0]>} : vector<4x5x32xf32>, vector<4x32x8xf32>, vector<4x5x8xf32> -> vector<4x5x8xf32>
    "tpu.trace_stop"() : () -> ()
    %c1_101 = arith.constant 1 : index
    %c0_102 = arith.constant 0 : index
    %c0_103 = arith.constant 0 : index
    %c0_104 = arith.constant 0 : index
    %157 = vector.load %arg7[%c1_101, %c0_102, %c0_103, %c0_104] : memref<2x4x1x8xf32, #tpu.memory_space<vmem>>, vector<1x4x1x8xf32>
    %158 = vector.shape_cast %157 : vector<1x4x1x8xf32> to vector<4x1x8xf32>
    %159 = vector.broadcast %158 : vector<4x1x8xf32> to vector<4x5x8xf32>
    %160 = arith.addf %156, %159 : vector<4x5x8xf32>
    %c1_105 = arith.constant 1 : index
    %c0_106 = arith.constant 0 : index
    %c0_107 = arith.constant 0 : index
    %c0_108 = arith.constant 0 : index
    %161 = vector.load %arg8[%c1_105, %c0_106, %c0_107, %c0_108] : memref<2x4x32x8xf32, #tpu.memory_space<vmem>>, vector<1x4x32x8xf32>
    %162 = vector.shape_cast %161 : vector<1x4x32x8xf32> to vector<4x32x8xf32>
    "tpu.trace_start"() <{level = 10 : i32, message = "hnd,hde->hne"}> : () -> ()
    %cst_109 = arith.constant dense<0.000000e+00> : vector<4x5x8xf32>
    %163 = tpu.matmul %153, %162, %cst_109 {dimension_numbers = #tpu.dot_dimension_numbers<[2], [1], [1], [2], [0, 0, 0, 1, 1, 2], [0], [0]>} : vector<4x5x32xf32>, vector<4x32x8xf32>, vector<4x5x8xf32> -> vector<4x5x8xf32>
    "tpu.trace_stop"() : () -> ()
    %c1_110 = arith.constant 1 : index
    %c0_111 = arith.constant 0 : index
    %c0_112 = arith.constant 0 : index
    %c0_113 = arith.constant 0 : index
    %164 = vector.load %arg9[%c1_110, %c0_111, %c0_112, %c0_113] : memref<2x4x1x8xf32, #tpu.memory_space<vmem>>, vector<1x4x1x8xf32>
    %165 = vector.shape_cast %164 : vector<1x4x1x8xf32> to vector<4x1x8xf32>
    %166 = vector.broadcast %165 : vector<4x1x8xf32> to vector<4x5x8xf32>
    %167 = arith.addf %163, %166 : vector<4x5x8xf32>
    %c1_114 = arith.constant 1 : index
    %c0_115 = arith.constant 0 : index
    %c0_116 = arith.constant 0 : index
    %c0_117 = arith.constant 0 : index
    %168 = vector.load %arg10[%c1_114, %c0_115, %c0_116, %c0_117] : memref<2x4x32x8xf32, #tpu.memory_space<vmem>>, vector<1x4x32x8xf32>
    %169 = vector.shape_cast %168 : vector<1x4x32x8xf32> to vector<4x32x8xf32>
    "tpu.trace_start"() <{level = 10 : i32, message = "hnd,hde->hne"}> : () -> ()
    %cst_118 = arith.constant dense<0.000000e+00> : vector<4x5x8xf32>
    %170 = tpu.matmul %153, %169, %cst_118 {dimension_numbers = #tpu.dot_dimension_numbers<[2], [1], [1], [2], [0, 0, 0, 1, 1, 2], [0], [0]>} : vector<4x5x32xf32>, vector<4x32x8xf32>, vector<4x5x8xf32> -> vector<4x5x8xf32>
    "tpu.trace_stop"() : () -> ()
    %c1_119 = arith.constant 1 : index
    %c0_120 = arith.constant 0 : index
    %c0_121 = arith.constant 0 : index
    %c0_122 = arith.constant 0 : index
    %171 = vector.load %arg11[%c1_119, %c0_120, %c0_121, %c0_122] : memref<2x4x1x8xf32, #tpu.memory_space<vmem>>, vector<1x4x1x8xf32>
    %172 = vector.shape_cast %171 : vector<1x4x1x8xf32> to vector<4x1x8xf32>
    %173 = vector.broadcast %172 : vector<4x1x8xf32> to vector<4x5x8xf32>
    %174 = arith.addf %170, %173 : vector<4x5x8xf32>
    "tpu.trace_start"() <{level = 10 : i32, message = "hqd,hkd->hqk"}> : () -> ()
    %cst_123 = arith.constant dense<0.000000e+00> : vector<4x5x5xf32>
    %175 = tpu.matmul %160, %167, %cst_123 {dimension_numbers = #tpu.dot_dimension_numbers<[2], [2], [1], [1], [0, 0, 0, 1, 1, 1], [0], [0]>} : vector<4x5x8xf32>, vector<4x5x8xf32>, vector<4x5x5xf32> -> vector<4x5x5xf32>
    "tpu.trace_stop"() : () -> ()
    %cst_124 = arith.constant 0.353553385 : f32
    %176 = vector.broadcast %cst_124 : f32 to vector<4x5x5xf32>
    %177 = arith.mulf %175, %176 : vector<4x5x5xf32>
    %cst_125 = arith.constant dense<0xFF800000> : vector<4x5xf32>
    %178 = vector.multi_reduction <maximumf>, %177, %cst_125 [2] : vector<4x5x5xf32> to vector<4x5xf32>
    %179 = vector.shape_cast %178 : vector<4x5xf32> to vector<4x5x1xf32>
    %180 = vector.broadcast %179 : vector<4x5x1xf32> to vector<4x5x5xf32>
    %181 = arith.subf %177, %180 : vector<4x5x5xf32>
    %182 = math.exp %181 : vector<4x5x5xf32>
    %cst_126 = arith.constant dense<0.000000e+00> : vector<4x5xf32>
    %183 = vector.multi_reduction <add>, %182, %cst_126 [2] : vector<4x5x5xf32> to vector<4x5xf32>
    %184 = vector.shape_cast %183 : vector<4x5xf32> to vector<4x5x1xf32>
    %185 = vector.broadcast %184 : vector<4x5x1xf32> to vector<4x5x5xf32>
    %186 = arith.divf %182, %185 : vector<4x5x5xf32>
    "tpu.trace_start"() <{level = 10 : i32, message = "hqk,hkd->hqd"}> : () -> ()
    %cst_127 = arith.constant dense<0.000000e+00> : vector<4x5x8xf32>
    %187 = tpu.matmul %186, %174, %cst_127 {dimension_numbers = #tpu.dot_dimension_numbers<[2], [1], [1], [2], [0, 0, 0, 1, 1, 2], [0], [0]>} : vector<4x5x5xf32>, vector<4x5x8xf32>, vector<4x5x8xf32> -> vector<4x5x8xf32>
    "tpu.trace_stop"() : () -> ()
    %c1_128 = arith.constant 1 : index
    %c0_129 = arith.constant 0 : index
    %c0_130 = arith.constant 0 : index
    %c0_131 = arith.constant 0 : index
    %188 = vector.load %arg12[%c1_128, %c0_129, %c0_130, %c0_131] : memref<2x4x8x32xf32, #tpu.memory_space<vmem>>, vector<1x4x8x32xf32>
    %189 = vector.shape_cast %188 : vector<1x4x8x32xf32> to vector<4x8x32xf32>
    "tpu.trace_start"() <{level = 10 : i32, message = "hqd,hde->hqe"}> : () -> ()
    %cst_132 = arith.constant dense<0.000000e+00> : vector<4x5x32xf32>
    %190 = tpu.matmul %187, %189, %cst_132 {dimension_numbers = #tpu.dot_dimension_numbers<[2], [1], [1], [2], [0, 0, 0, 1, 1, 2], [0], [0]>} : vector<4x5x8xf32>, vector<4x8x32xf32>, vector<4x5x32xf32> -> vector<4x5x32xf32>
    "tpu.trace_stop"() : () -> ()
    %cst_133 = arith.constant dense<0.000000e+00> : vector<5x32xf32>
    %191 = vector.multi_reduction <add>, %190, %cst_133 [0] : vector<4x5x32xf32> to vector<5x32xf32>
    %c1_134 = arith.constant 1 : index
    %c0_135 = arith.constant 0 : index
    %c0_136 = arith.constant 0 : index
    %192 = vector.load %arg13[%c1_134, %c0_135, %c0_136] : memref<2x1x32xf32, #tpu.memory_space<vmem>>, vector<1x1x32xf32>
    %193 = vector.shape_cast %192 : vector<1x1x32xf32> to vector<1x32xf32>
    %194 = vector.broadcast %193 : vector<1x32xf32> to vector<5x32xf32>
    %195 = arith.addf %191, %194 : vector<5x32xf32>
    %196 = arith.addf %125, %195 : vector<5x32xf32>
    %c1_137 = arith.constant 1 : index
    %c0_138 = arith.constant 0 : index
    %c0_139 = arith.constant 0 : index
    %197 = vector.load %arg14[%c1_137, %c0_138, %c0_139] : memref<2x1x32xf32, #tpu.memory_space<vmem>>, vector<1x1x32xf32>
    %198 = vector.shape_cast %197 : vector<1x1x32xf32> to vector<1x32xf32>
    %c1_140 = arith.constant 1 : index
    %c0_141 = arith.constant 0 : index
    %c0_142 = arith.constant 0 : index
    %199 = vector.load %arg15[%c1_140, %c0_141, %c0_142] : memref<2x1x32xf32, #tpu.memory_space<vmem>>, vector<1x1x32xf32>
    %200 = vector.shape_cast %199 : vector<1x1x32xf32> to vector<1x32xf32>
    %cst_143 = arith.constant dense<0.000000e+00> : vector<5xf32>
    %201 = vector.multi_reduction <add>, %196, %cst_143 [1] : vector<5x32xf32> to vector<5xf32>
    %202 = vector.shape_cast %201 : vector<5xf32> to vector<5x1xf32>
    %cst_144 = arith.constant 3.200000e+01 : f32
    %203 = vector.broadcast %cst_144 : f32 to vector<5x1xf32>
    %204 = arith.divf %202, %203 : vector<5x1xf32>
    %205 = vector.broadcast %204 : vector<5x1xf32> to vector<5x32xf32>
    %206 = arith.subf %196, %205 : vector<5x32xf32>
    %207 = arith.mulf %206, %206 : vector<5x32xf32>
    %cst_145 = arith.constant dense<0.000000e+00> : vector<5xf32>
    %208 = vector.multi_reduction <add>, %207, %cst_145 [1] : vector<5x32xf32> to vector<5xf32>
    %209 = vector.shape_cast %208 : vector<5xf32> to vector<5x1xf32>
    %cst_146 = arith.constant 3.200000e+01 : f32
    %210 = vector.broadcast %cst_146 : f32 to vector<5x1xf32>
    %211 = arith.divf %209, %210 : vector<5x1xf32>
    %212 = vector.broadcast %204 : vector<5x1xf32> to vector<5x32xf32>
    %213 = arith.subf %196, %212 : vector<5x32xf32>
    %cst_147 = arith.constant 9.99999997E-7 : f32
    %214 = vector.broadcast %cst_147 : f32 to vector<5x1xf32>
    %215 = arith.addf %211, %214 : vector<5x1xf32>
    %216 = math.rsqrt %215 : vector<5x1xf32>
    %217 = vector.broadcast %216 : vector<5x1xf32> to vector<5x32xf32>
    %218 = arith.mulf %213, %217 : vector<5x32xf32>
    %219 = vector.broadcast %198 : vector<1x32xf32> to vector<5x32xf32>
    %220 = arith.mulf %218, %219 : vector<5x32xf32>
    %221 = vector.broadcast %200 : vector<1x32xf32> to vector<5x32xf32>
    %222 = arith.addf %220, %221 : vector<5x32xf32>
    %c1_148 = arith.constant 1 : index
    %c0_149 = arith.constant 0 : index
    %c0_150 = arith.constant 0 : index
    %223 = vector.load %arg16[%c1_148, %c0_149, %c0_150] : memref<2x32x128xf32, #tpu.memory_space<vmem>>, vector<1x32x128xf32>
    %224 = vector.shape_cast %223 : vector<1x32x128xf32> to vector<32x128xf32>
    %cst_151 = arith.constant dense<0.000000e+00> : vector<5x128xf32>
    %225 = tpu.matmul %222, %224, %cst_151 {dimension_numbers = #tpu.dot_dimension_numbers<[1], [0], [0], [1], [0, 0, 1, 1], [], []>} : vector<5x32xf32>, vector<32x128xf32>, vector<5x128xf32> -> vector<5x128xf32>
    %c1_152 = arith.constant 1 : index
    %c0_153 = arith.constant 0 : index
    %c0_154 = arith.constant 0 : index
    %226 = vector.load %arg17[%c1_152, %c0_153, %c0_154] : memref<2x1x128xf32, #tpu.memory_space<vmem>>, vector<1x1x128xf32>
    %227 = vector.shape_cast %226 : vector<1x1x128xf32> to vector<1x128xf32>
    %228 = vector.broadcast %227 : vector<1x128xf32> to vector<5x128xf32>
    %229 = arith.addf %225, %228 : vector<5x128xf32>
    %cst_155 = arith.constant 5.000000e-01 : f32
    %230 = vector.broadcast %cst_155 : f32 to vector<5x128xf32>
    %231 = arith.mulf %230, %229 : vector<5x128xf32>
    %cst_156 = arith.constant 0.707106769 : f32
    %232 = vector.broadcast %cst_156 : f32 to vector<5x128xf32>
    %233 = arith.mulf %229, %232 : vector<5x128xf32>
    %234 = math.erf %233 : vector<5x128xf32>
    %cst_157 = arith.constant 1.000000e+00 : f32
    %235 = vector.broadcast %cst_157 : f32 to vector<5x128xf32>
    %236 = arith.addf %235, %234 : vector<5x128xf32>
    %237 = arith.mulf %231, %236 : vector<5x128xf32>
    %c1_158 = arith.constant 1 : index
    %c0_159 = arith.constant 0 : index
    %c0_160 = arith.constant 0 : index
    %238 = vector.load %arg18[%c1_158, %c0_159, %c0_160] : memref<2x128x32xf32, #tpu.memory_space<vmem>>, vector<1x128x32xf32>
    %239 = vector.shape_cast %238 : vector<1x128x32xf32> to vector<128x32xf32>
    %cst_161 = arith.constant dense<0.000000e+00> : vector<5x32xf32>
    %240 = tpu.matmul %237, %239, %cst_161 {dimension_numbers = #tpu.dot_dimension_numbers<[1], [0], [0], [1], [0, 0, 1, 1], [], []>} : vector<5x128xf32>, vector<128x32xf32>, vector<5x32xf32> -> vector<5x32xf32>
    %c1_162 = arith.constant 1 : index
    %c0_163 = arith.constant 0 : index
    %c0_164 = arith.constant 0 : index
    %241 = vector.load %arg19[%c1_162, %c0_163, %c0_164] : memref<2x1x32xf32, #tpu.memory_space<vmem>>, vector<1x1x32xf32>
    %242 = vector.shape_cast %241 : vector<1x1x32xf32> to vector<1x32xf32>
    %243 = vector.broadcast %242 : vector<1x32xf32> to vector<5x32xf32>
    %244 = arith.addf %240, %243 : vector<5x32xf32>
    %245 = arith.addf %196, %244 : vector<5x32xf32>
    %246 = vector.extract_strided_slice %245 {offsets = [0, 0], sizes = [1, 32], strides = [1, 1]} : vector<5x32xf32> to vector<1x32xf32>
    %c0_165 = arith.constant 0 : index
    %c0_166 = arith.constant 0 : index
    %247 = vector.load %arg20[%c0_165, %c0_166] : memref<1x32xf32, #tpu.memory_space<vmem>>, vector<1x32xf32>
    %c0_167 = arith.constant 0 : index
    %c0_168 = arith.constant 0 : index
    %248 = vector.load %arg21[%c0_167, %c0_168] : memref<1x32xf32, #tpu.memory_space<vmem>>, vector<1x32xf32>
    %cst_169 = arith.constant dense<0.000000e+00> : vector<1xf32>
    %249 = vector.multi_reduction <add>, %246, %cst_169 [1] : vector<1x32xf32> to vector<1xf32>
    %250 = vector.shape_cast %249 : vector<1xf32> to vector<1x1xf32>
    %cst_170 = arith.constant 3.200000e+01 : f32
    %251 = vector.broadcast %cst_170 : f32 to vector<1x1xf32>
    %252 = arith.divf %250, %251 : vector<1x1xf32>
    %253 = vector.broadcast %252 : vector<1x1xf32> to vector<1x32xf32>
    %254 = arith.subf %246, %253 : vector<1x32xf32>
    %255 = arith.mulf %254, %254 : vector<1x32xf32>
    %cst_171 = arith.constant dense<0.000000e+00> : vector<1xf32>
    %256 = vector.multi_reduction <add>, %255, %cst_171 [1] : vector<1x32xf32> to vector<1xf32>
    %257 = vector.shape_cast %256 : vector<1xf32> to vector<1x1xf32>
    %cst_172 = arith.constant 3.200000e+01 : f32
    %258 = vector.broadcast %cst_172 : f32 to vector<1x1xf32>
    %259 = arith.divf %257, %258 : vector<1x1xf32>
    %260 = vector.broadcast %252 : vector<1x1xf32> to vector<1x32xf32>
    %261 = arith.subf %246, %260 : vector<1x32xf32>
    %cst_173 = arith.constant 9.99999997E-7 : f32
    %262 = vector.broadcast %cst_173 : f32 to vector<1x1xf32>
    %263 = arith.addf %259, %262 : vector<1x1xf32>
    %264 = math.rsqrt %263 : vector<1x1xf32>
    %265 = vector.broadcast %264 : vector<1x1xf32> to vector<1x32xf32>
    %266 = arith.mulf %261, %265 : vector<1x32xf32>
    %267 = arith.mulf %266, %247 : vector<1x32xf32>
    %268 = arith.addf %267, %248 : vector<1x32xf32>
    %c0_174 = arith.constant 0 : index
    %c0_175 = arith.constant 0 : index
    %269 = vector.load %arg22[%c0_174, %c0_175] : memref<32x128xf32, #tpu.memory_space<vmem>>, vector<32x128xf32>
    %cst_176 = arith.constant dense<0.000000e+00> : vector<1x128xf32>
    %270 = tpu.matmul %268, %269, %cst_176 {dimension_numbers = #tpu.dot_dimension_numbers<[1], [0], [0], [1], [0, 0, 1, 1], [], []>} : vector<1x32xf32>, vector<32x128xf32>, vector<1x128xf32> -> vector<1x128xf32>
    %c0_177 = arith.constant 0 : index
    %c0_178 = arith.constant 0 : index
    %271 = vector.load %arg23[%c0_177, %c0_178] : memref<1x128xf32, #tpu.memory_space<vmem>>, vector<1x128xf32>
    %272 = arith.addf %270, %271 : vector<1x128xf32>
    %c0_179 = arith.constant 0 : index
    %c0_180 = arith.constant 0 : index
    %c0_181 = arith.constant 0 : index
    %273 = vector.load %arg24[%c0_179, %c0_180, %c0_181] : memref<1x1x128xf32, #tpu.memory_space<vmem>>, vector<1x1x128xf32>
    %274 = vector.shape_cast %273 : vector<1x1x128xf32> to vector<1x128xf32>
    %275 = vector.shape_cast %272 : vector<1x128xf32> to vector<1x1x128xf32>
    tpu.vector_store %arg24[%c0_179, %c0_180, %c0_181], %275 {strides = array<i32>} : memref<1x1x128xf32, #tpu.memory_space<vmem>>, vector<1x1x128xf32>,
    return
  }
  func.func @transform_0(%arg0: i32) -> (i32, i32, i32) {
    %c0_i32 = arith.constant 0 : i32
    %c0_i32_0 = arith.constant 0 : i32
    %c0_i32_1 = arith.constant 0 : i32
    return %arg0, %c0_i32, %c0_i32_0 : i32, i32, i32
  }
  func.func @transform_1(%arg0: i32) -> (i32, i32) {
    %c0_i32 = arith.constant 0 : i32
    %c0_i32_0 = arith.constant 0 : i32
    %c0_i32_1 = arith.constant 0 : i32
    return %c0_i32, %c0_i32_0 : i32, i32
  }
  func.func @transform_2(%arg0: i32) -> (i32, i32) {
    %c0_i32 = arith.constant 0 : i32
    %c0_i32_0 = arith.constant 0 : i32
    %c0_i32_1 = arith.constant 0 : i32
    return %c0_i32, %c0_i32_0 : i32, i32
  }
  func.func @transform_3(%arg0: i32) -> (i32, i32, i32) {
    %c0_i32 = arith.constant 0 : i32
    %c0_i32_0 = arith.constant 0 : i32
    %c0_i32_1 = arith.constant 0 : i32
    %c0_i32_2 = arith.constant 0 : i32
    return %c0_i32, %c0_i32_0, %c0_i32_1 : i32, i32, i32
  }
  func.func @transform_4(%arg0: i32) -> (i32, i32, i32) {
    %c0_i32 = arith.constant 0 : i32
    %c0_i32_0 = arith.constant 0 : i32
    %c0_i32_1 = arith.constant 0 : i32
    %c0_i32_2 = arith.constant 0 : i32
    return %c0_i32, %c0_i32_0, %c0_i32_1 : i32, i32, i32
  }
  func.func @transform_5(%arg0: i32) -> (i32, i32, i32, i32) {
    %c0_i32 = arith.constant 0 : i32
    %c0_i32_0 = arith.constant 0 : i32
    %c0_i32_1 = arith.constant 0 : i32
    %c0_i32_2 = arith.constant 0 : i32
    %c0_i32_3 = arith.constant 0 : i32
    return %c0_i32, %c0_i32_0, %c0_i32_1, %c0_i32_2 : i32, i32, i32, i32
  }
  func.func @transform_6(%arg0: i32) -> (i32, i32, i32, i32) {
    %c0_i32 = arith.constant 0 : i32
    %c0_i32_0 = arith.constant 0 : i32
    %c0_i32_1 = arith.constant 0 : i32
    %c0_i32_2 = arith.constant 0 : i32
    %c0_i32_3 = arith.constant 0 : i32
    return %c0_i32, %c0_i32_0, %c0_i32_1, %c0_i32_2 : i32, i32, i32, i32
  }
  func.func @transform_7(%arg0: i32) -> (i32, i32, i32, i32) {
    %c0_i32 = arith.constant 0 : i32
    %c0_i32_0 = arith.constant 0 : i32
    %c0_i32_1 = arith.constant 0 : i32
    %c0_i32_2 = arith.constant 0 : i32
    %c0_i32_3 = arith.constant 0 : i32
    return %c0_i32, %c0_i32_0, %c0_i32_1, %c0_i32_2 : i32, i32, i32, i32
  }
  func.func @transform_8(%arg0: i32) -> (i32, i32, i32, i32) {
    %c0_i32 = arith.constant 0 : i32
    %c0_i32_0 = arith.constant 0 : i32
    %c0_i32_1 = arith.constant 0 : i32
    %c0_i32_2 = arith.constant 0 : i32
    %c0_i32_3 = arith.constant 0 : i32
    return %c0_i32, %c0_i32_0, %c0_i32_1, %c0_i32_2 : i32, i32, i32, i32
  }
  func.func @transform_9(%arg0: i32) -> (i32, i32, i32, i32) {
    %c0_i32 = arith.constant 0 : i32
    %c0_i32_0 = arith.constant 0 : i32
    %c0_i32_1 = arith.constant 0 : i32
    %c0_i32_2 = arith.constant 0 : i32
    %c0_i32_3 = arith.constant 0 : i32
    return %c0_i32, %c0_i32_0, %c0_i32_1, %c0_i32_2 : i32, i32, i32, i32
  }
  func.func @transform_10(%arg0: i32) -> (i32, i32, i32, i32) {
    %c0_i32 = arith.constant 0 : i32
    %c0_i32_0 = arith.constant 0 : i32
    %c0_i32_1 = arith.constant 0 : i32
    %c0_i32_2 = arith.constant 0 : i32
    %c0_i32_3 = arith.constant 0 : i32
    return %c0_i32, %c0_i32_0, %c0_i32_1, %c0_i32_2 : i32, i32, i32, i32
  }
  func.func @transform_11(%arg0: i32) -> (i32, i32, i32, i32) {
    %c0_i32 = arith.constant 0 : i32
    %c0_i32_0 = arith.constant 0 : i32
    %c0_i32_1 = arith.constant 0 : i32
    %c0_i32_2 = arith.constant 0 : i32
    %c0_i32_3 = arith.constant 0 : i32
    return %c0_i32, %c0_i32_0, %c0_i32_1, %c0_i32_2 : i32, i32, i32, i32
  }
  func.func @transform_12(%arg0: i32) -> (i32, i32, i32) {
    %c0_i32 = arith.constant 0 : i32
    %c0_i32_0 = arith.constant 0 : i32
    %c0_i32_1 = arith.constant 0 : i32
    %c0_i32_2 = arith.constant 0 : i32
    return %c0_i32, %c0_i32_0, %c0_i32_1 : i32, i32, i32
  }
  func.func @transform_13(%arg0: i32) -> (i32, i32, i32) {
    %c0_i32 = arith.constant 0 : i32
    %c0_i32_0 = arith.constant 0 : i32
    %c0_i32_1 = arith.constant 0 : i32
    %c0_i32_2 = arith.constant 0 : i32
    return %c0_i32, %c0_i32_0, %c0_i32_1 : i32, i32, i32
  }
  func.func @transform_14(%arg0: i32) -> (i32, i32, i32) {
    %c0_i32 = arith.constant 0 : i32
    %c0_i32_0 = arith.constant 0 : i32
    %c0_i32_1 = arith.constant 0 : i32
    %c0_i32_2 = arith.constant 0 : i32
    return %c0_i32, %c0_i32_0, %c0_i32_1 : i32, i32, i32
  }
  func.func @transform_15(%arg0: i32) -> (i32, i32, i32) {
    %c0_i32 = arith.constant 0 : i32
    %c0_i32_0 = arith.constant 0 : i32
    %c0_i32_1 = arith.constant 0 : i32
    %c0_i32_2 = arith.constant 0 : i32
    return %c0_i32, %c0_i32_0, %c0_i32_1 : i32, i32, i32
  }
  func.func @transform_16(%arg0: i32) -> (i32, i32, i32) {
    %c0_i32 = arith.constant 0 : i32
    %c0_i32_0 = arith.constant 0 : i32
    %c0_i32_1 = arith.constant 0 : i32
    %c0_i32_2 = arith.constant 0 : i32
    return %c0_i32, %c0_i32_0, %c0_i32_1 : i32, i32, i32
  }
  func.func @transform_17(%arg0: i32) -> (i32, i32, i32) {
    %c0_i32 = arith.constant 0 : i32
    %c0_i32_0 = arith.constant 0 : i32
    %c0_i32_1 = arith.constant 0 : i32
    %c0_i32_2 = arith.constant 0 : i32
    return %c0_i32, %c0_i32_0, %c0_i32_1 : i32, i32, i32
  }
  func.func @transform_18(%arg0: i32) -> (i32, i32, i32) {
    %c0_i32 = arith.constant 0 : i32
    %c0_i32_0 = arith.constant 0 : i32
    %c0_i32_1 = arith.constant 0 : i32
    %c0_i32_2 = arith.constant 0 : i32
    return %c0_i32, %c0_i32_0, %c0_i32_1 : i32, i32, i32
  }
  func.func @transform_19(%arg0: i32) -> (i32, i32) {
    %c0_i32 = arith.constant 0 : i32
    %c0_i32_0 = arith.constant 0 : i32
    %c0_i32_1 = arith.constant 0 : i32
    return %c0_i32, %c0_i32_0 : i32, i32
  }
  func.func @transform_20(%arg0: i32) -> (i32, i32) {
    %c0_i32 = arith.constant 0 : i32
    %c0_i32_0 = arith.constant 0 : i32
    %c0_i32_1 = arith.constant 0 : i32
    return %c0_i32, %c0_i32_0 : i32, i32
  }
  func.func @transform_21(%arg0: i32) -> (i32, i32) {
    %c0_i32 = arith.constant 0 : i32
    %c0_i32_0 = arith.constant 0 : i32
    %c0_i32_1 = arith.constant 0 : i32
    return %c0_i32, %c0_i32_0 : i32, i32
  }
  func.func @transform_22(%arg0: i32) -> (i32, i32) {
    %c0_i32 = arith.constant 0 : i32
    %c0_i32_0 = arith.constant 0 : i32
    %c0_i32_1 = arith.constant 0 : i32
    return %c0_i32, %c0_i32_0 : i32, i32
  }
  func.func @transform_23(%arg0: i32) -> (i32, i32, i32) {
    %c0_i32 = arith.constant 0 : i32
    %c0_i32_0 = arith.constant 0 : i32
    %c0_i32_1 = arith.constant 0 : i32
    return %arg0, %c0_i32, %c0_i32_0 : i32, i32, i32
  }
}

</mosaic_0001>

<llo_original>
// kernel: vit_forward.1
$region0: #{vit_forward.1}
  #allocation0 [shape = 'u32[]', space=smem, size = 0x4, offset = 0x4, fixed_abs, tag = 'smem constant byte address 0x4 - core index']
  #allocation1 [shape = 'u32[72,128]{1,0:T(1,128)}', space=vmem, size = 0x9000, scoped, tag = 'internal scratch']
  %s0 = inlined_call_operand.vmem [shape: f32[2,5,768], index: 0, kind: input, shape index: {}]
  %s1 = inlined_call_operand.vmem [shape: f32[768,32], index: 1, kind: input, shape index: {}]
  %s2 = inlined_call_operand.vmem [shape: f32[5,32], index: 2, kind: input, shape index: {}]
  %s3 = inlined_call_operand.vmem [shape: f32[2,1,32], index: 3, kind: input, shape index: {}]
  %s4 = inlined_call_operand.vmem [shape: f32[2,1,32], index: 4, kind: input, shape index: {}]
  %s5 = inlined_call_operand.vmem [shape: f32[2,4,32,8], index: 5, kind: input, shape index: {}]
  %s6 = inlined_call_operand.vmem [shape: f32[2,4,1,8], index: 6, kind: input, shape index: {}]
  %s7 = inlined_call_operand.vmem [shape: f32[2,4,32,8], index: 7, kind: input, shape index: {}]
  %s8 = inlined_call_operand.vmem [shape: f32[2,4,1,8], index: 8, kind: input, shape index: {}]
  %s9 = inlined_call_operand.vmem [shape: f32[2,4,32,8], index: 9, kind: input, shape index: {}]
  %s10 = inlined_call_operand.vmem [shape: f32[2,4,1,8], index: 10, kind: input, shape index: {}]
  %s11 = inlined_call_operand.vmem [shape: f32[2,4,8,32], index: 11, kind: input, shape index: {}]
  %s12 = inlined_call_operand.vmem [shape: f32[2,1,32], index: 12, kind: input, shape index: {}]
  %s13 = inlined_call_operand.vmem [shape: f32[2,1,32], index: 13, kind: input, shape index: {}]
  %s14 = inlined_call_operand.vmem [shape: f32[2,1,32], index: 14, kind: input, shape index: {}]
  %s15 = inlined_call_operand.vmem [shape: f32[2,32,128], index: 15, kind: input, shape index: {}]
  %s16 = inlined_call_operand.vmem [shape: f32[2,1,128], index: 16, kind: input, shape index: {}]
  %s17 = inlined_call_operand.vmem [shape: f32[2,128,32], index: 17, kind: input, shape index: {}]
  %s18 = inlined_call_operand.vmem [shape: f32[2,1,32], index: 18, kind: input, shape index: {}]
  %s19 = inlined_call_operand.vmem [shape: f32[1,32], index: 19, kind: input, shape index: {}]
  %s20 = inlined_call_operand.vmem [shape: f32[1,32], index: 20, kind: input, shape index: {}]
  %s21 = inlined_call_operand.vmem [shape: f32[32,128], index: 21, kind: input, shape index: {}]
  %s22 = inlined_call_operand.vmem [shape: f32[1,128], index: 22, kind: input, shape index: {}]
  %s23 = inlined_call_operand.hbm [shape: f32[2,1,128], index: 23, kind: output, shape index: {}]
  %s24 = sld [smem:[#allocation0]]
  $region125: #{vit_forward.1} parent=0
    _
  %s26 = ssub.s32 1, %s24
  %s27 = scalar_select 0, %s26, %s24
  $region1: #{vit_forward.1} parent=0
    #allocation2 [shape = 'u8[1024]{0}', space=vmem, size = 0x400, scoped, tag = 'output window, operand 0']
    #allocation3 [shape = 's32[2]{0}', space=sflag, size = 0x8, scoped, tag = 'scoped memory for vit_forward.1']
    %28 = vsyncpa [#allocation3], 0
    %s29 = scalar_lea.sflag [#allocation3], 1
    %30 = vsyncpa %s29, 0
    loop: start=0, step=1, limit=4
    $region2: #{vit_forward.1} parent=1 // loop_pre_header
      _
    $region3: #{vit_forward.1} parent=1 // loop_header
      %s32 = sphi 0, %s36
      %p33 = scmp.ge.s32.totalorder %s32, 4
      %s42 = sphi 0, %s44
      %s45 = sphi 0, %s42
      %s46 = sphi 0, %s45
      %s62 = sphi 0, %s46
      %s66 = sphi 0, %s66
      %s68 = sphi 0, %s66
      %s69 = sphi 0, %s68
      %s83 = sphi 0, %s69
      %s87 = sphi 0, %s87
      %s89 = sphi 0, %s87
      %s90 = sphi 0, %s89
      %s104 = sphi 0, %s90
      %s108 = sphi 0, %s108
      %s110 = sphi 0, %s108
      %s111 = sphi 0, %s110
      %s125 = sphi 0, %s111
      %s129 = sphi 0, %s129
      %s131 = sphi 0, %s129
      %s132 = sphi 0, %s131
      %s146 = sphi 0, %s132
      %s150 = sphi 0, %s150
      %s152 = sphi 0, %s150
      %s153 = sphi 0, %s152
      %s167 = sphi 0, %s153
      %s171 = sphi 0, %s171
      %s173 = sphi 0, %s171
      %s174 = sphi 0, %s173
      %s188 = sphi 0, %s174
      %s192 = sphi 0, %s192
      %s194 = sphi 0, %s192
      %s195 = sphi 0, %s194
      %s209 = sphi 0, %s195
      %s213 = sphi 0, %s213
      %s215 = sphi 0, %s213
      %s216 = sphi 0, %s215
      %s230 = sphi 0, %s216
      %s234 = sphi 0, %s234
      %s236 = sphi 0, %s234
      %s237 = sphi 0, %s236
      %s251 = sphi 0, %s237
      %s255 = sphi 0, %s255
      %s257 = sphi 0, %s255
      %s258 = sphi 0, %s257
      %s272 = sphi 0, %s258
      %s276 = sphi 0, %s276
      %s278 = sphi 0, %s276
      %s279 = sphi 0, %s278
      %s293 = sphi 0, %s279
      %s297 = sphi 0, %s297
      %s299 = sphi 0, %s297
      %s300 = sphi 0, %s299
      %s314 = sphi 0, %s300
      %s318 = sphi 0, %s318
      %s320 = sphi 0, %s318
      %s321 = sphi 0, %s320
      %s335 = sphi 0, %s321
      %s339 = sphi 0, %s339
      %s341 = sphi 0, %s339
      %s342 = sphi 0, %s341
      %s356 = sphi 0, %s342
      %s360 = sphi 0, %s360
      %s362 = sphi 0, %s360
      %s363 = sphi 0, %s362
      %s377 = sphi 0, %s363
      %s381 = sphi 0, %s381
      %s383 = sphi 0, %s381
      %s384 = sphi 0, %s383
      %s398 = sphi 0, %s384
      %s402 = sphi 0, %s402
      %s404 = sphi 0, %s402
      %s405 = sphi 0, %s404
      %s419 = sphi 0, %s405
      %s423 = sphi 0, %s423
      %s425 = sphi 0, %s423
      %s426 = sphi 0, %s425
      %s440 = sphi 0, %s426
      %s444 = sphi 0, %s444
      %s446 = sphi 0, %s444
      %s447 = sphi 0, %s446
      %s461 = sphi 0, %s447
      %s465 = sphi 0, %s465
      %s467 = sphi 0, %s465
      %s468 = sphi 0, %s467
      %s482 = sphi 0, %s468
      %s486 = sphi 0, %s486
      %s488 = sphi 0, %s486
      %s489 = sphi 0, %s488
      %s503 = sphi 0, %s489
      %s507 = sphi 0, %s507
      %s509 = sphi 0, %s507
      %s510 = sphi 0, %s509
      %s524 = sphi 0, %s510
      %s530 = sphi 0, %s532
      %s533 = sphi 0, %s530
      %s534 = sphi 0, %s533
      %s550 = sphi 0, %s534
    $region4: #{vit_forward.1} parent=1 // loop_header_branch
      %35 = sbr.rel (%p33) target = $region8
    $region5: #{vit_forward.1} parent=1 // loop_body
      %s37 = ssub.s32 %s32, 1
      %s38 = ssub.s32 %s32, 2
      %s39 = sadd.s32 %s32, 1
      %s40 = ssub.s32 %s32, %s39
      %p41 = scmp.eq.s32.totalorder %s40, 0
      %s43 = sadd.s32 %s42, 1
      %s44 = scalar_select %p41, %s42, %s43
      %p47 = pneg %p41
      %p48 = scmp.eq.s32.totalorder %s32, 1
      %p49 = por %p47, %p48
      %p50 = scmp.ne.s32.totalorder %s42, %s45
      %p51 = scmp.eq.s32.totalorder %s32, 0
      %p52 = por %p50, %p51
      %p53 = scmp.ne.s32.totalorder %s42, %s45
      %p54 = scmp.eq.s32.totalorder %s37, 1
      %p55 = por %p53, %p54
      %p56 = scmp.ne.s32.totalorder %s45, %s46
      %p57 = scmp.eq.s32.totalorder %s37, 0
      %p58 = por %p56, %p57
      %p59 = scmp.ne.s32.totalorder %s45, %s46
      %p60 = scmp.eq.s32.totalorder %s38, 1
      %p61 = por %p59, %p60
      %p63 = scmp.ne.s32.totalorder %s46, %s62
      %p64 = scmp.eq.s32.totalorder %s38, 0
      %p65 = por %p63, %p64
      %s67 = sadd.s32 %s66, 1
      %p70 = scmp.eq.s32.totalorder %s32, 1
      %p71 = scmp.ne.s32.totalorder %s66, %s68
      %p72 = scmp.eq.s32.totalorder %s32, 0
      %p73 = por %p71, %p72
      %p74 = scmp.ne.s32.totalorder %s66, %s68
      %p75 = scmp.eq.s32.totalorder %s37, 1
      %p76 = por %p74, %p75
      %p77 = scmp.ne.s32.totalorder %s68, %s69
      %p78 = scmp.eq.s32.totalorder %s37, 0
      %p79 = por %p77, %p78
      %p80 = scmp.ne.s32.totalorder %s68, %s69
      %p81 = scmp.eq.s32.totalorder %s38, 1
      %p82 = por %p80, %p81
      %p84 = scmp.ne.s32.totalorder %s69, %s83
      %p85 = scmp.eq.s32.totalorder %s38, 0
      %p86 = por %p84, %p85
      %s88 = sadd.s32 %s87, 1
      %p91 = scmp.eq.s32.totalorder %s32, 1
      %p92 = scmp.ne.s32.totalorder %s87, %s89
      %p93 = scmp.eq.s32.totalorder %s32, 0
      %p94 = por %p92, %p93
      %p95 = scmp.ne.s32.totalorder %s87, %s89
      %p96 = scmp.eq.s32.totalorder %s37, 1
      %p97 = por %p95, %p96
      %p98 = scmp.ne.s32.totalorder %s89, %s90
      %p99 = scmp.eq.s32.totalorder %s37, 0
      %p100 = por %p98, %p99
      %p101 = scmp.ne.s32.totalorder %s89, %s90
      %p102 = scmp.eq.s32.totalorder %s38, 1
      %p103 = por %p101, %p102
      %p105 = scmp.ne.s32.totalorder %s90, %s104
      %p106 = scmp.eq.s32.totalorder %s38, 0
      %p107 = por %p105, %p106
      %s109 = sadd.s32 %s108, 1
      %p112 = scmp.eq.s32.totalorder %s32, 1
      %p113 = scmp.ne.s32.totalorder %s108, %s110
      %p114 = scmp.eq.s32.totalorder %s32, 0
      %p115 = por %p113, %p114
      %p116 = scmp.ne.s32.totalorder %s108, %s110
      %p117 = scmp.eq.s32.totalorder %s37, 1
      %p118 = por %p116, %p117
      %p119 = scmp.ne.s32.totalorder %s110, %s111
      %p120 = scmp.eq.s32.totalorder %s37, 0
      %p121 = por %p119, %p120
      %p122 = scmp.ne.s32.totalorder %s110, %s111
      %p123 = scmp.eq.s32.totalorder %s38, 1
      %p124 = por %p122, %p123
      %p126 = scmp.ne.s32.totalorder %s111, %s125
      %p127 = scmp.eq.s32.totalorder %s38, 0
      %p128 = por %p126, %p127
      %s130 = sadd.s32 %s129, 1
      %p133 = scmp.eq.s32.totalorder %s32, 1
      %p134 = scmp.ne.s32.totalorder %s129, %s131
      %p135 = scmp.eq.s32.totalorder %s32, 0
      %p136 = por %p134, %p135
      %p137 = scmp.ne.s32.totalorder %s129, %s131
      %p138 = scmp.eq.s32.totalorder %s37, 1
      %p139 = por %p137, %p138
      %p140 = scmp.ne.s32.totalorder %s131, %s132
      %p141 = scmp.eq.s32.totalorder %s37, 0
      %p142 = por %p140, %p141
      %p143 = scmp.ne.s32.totalorder %s131, %s132
      %p144 = scmp.eq.s32.totalorder %s38, 1
      %p145 = por %p143, %p144
      %p147 = scmp.ne.s32.totalorder %s132, %s146
      %p148 = scmp.eq.s32.totalorder %s38, 0
      %p149 = por %p147, %p148
      %s151 = sadd.s32 %s150, 1
      %p154 = scmp.eq.s32.totalorder %s32, 1
      %p155 = scmp.ne.s32.totalorder %s150, %s152
      %p156 = scmp.eq.s32.totalorder %s32, 0
      %p157 = por %p155, %p156
      %p158 = scmp.ne.s32.totalorder %s150, %s152
      %p159 = scmp.eq.s32.totalorder %s37, 1
      %p160 = por %p158, %p159
      %p161 = scmp.ne.s32.totalorder %s152, %s153
      %p162 = scmp.eq.s32.totalorder %s37, 0
      %p163 = por %p161, %p162
      %p164 = scmp.ne.s32.totalorder %s152, %s153
      %p165 = scmp.eq.s32.totalorder %s38, 1
      %p166 = por %p164, %p165
      %p168 = scmp.ne.s32.totalorder %s153, %s167
      %p169 = scmp.eq.s32.totalorder %s38, 0
      %p170 = por %p168, %p169
      %s172 = sadd.s32 %s171, 1
      %p175 = scmp.eq.s32.totalorder %s32, 1
      %p176 = scmp.ne.s32.totalorder %s171, %s173
      %p177 = scmp.eq.s32.totalorder %s32, 0
      %p178 = por %p176, %p177
      %p179 = scmp.ne.s32.totalorder %s171, %s173
      %p180 = scmp.eq.s32.totalorder %s37, 1
      %p181 = por %p179, %p180
      %p182 = scmp.ne.s32.totalorder %s173, %s174
      %p183 = scmp.eq.s32.totalorder %s37, 0
      %p184 = por %p182, %p183
      %p185 = scmp.ne.s32.totalorder %s173, %s174
      %p186 = scmp.eq.s32.totalorder %s38, 1
      %p187 = por %p185, %p186
      %p189 = scmp.ne.s32.totalorder %s174, %s188
      %p190 = scmp.eq.s32.totalorder %s38, 0
      %p191 = por %p189, %p190
      %s193 = sadd.s32 %s192, 1
      %p196 = scmp.eq.s32.totalorder %s32, 1
      %p197 = scmp.ne.s32.totalorder %s192, %s194
      %p198 = scmp.eq.s32.totalorder %s32, 0
      %p199 = por %p197, %p198
      %p200 = scmp.ne.s32.totalorder %s192, %s194
      %p201 = scmp.eq.s32.totalorder %s37, 1
      %p202 = por %p200, %p201
      %p203 = scmp.ne.s32.totalorder %s194, %s195
      %p204 = scmp.eq.s32.totalorder %s37, 0
      %p205 = por %p203, %p204
      %p206 = scmp.ne.s32.totalorder %s194, %s195
      %p207 = scmp.eq.s32.totalorder %s38, 1
      %p208 = por %p206, %p207
      %p210 = scmp.ne.s32.totalorder %s195, %s209
      %p211 = scmp.eq.s32.totalorder %s38, 0
      %p212 = por %p210, %p211
      %s214 = sadd.s32 %s213, 1
      %p217 = scmp.eq.s32.totalorder %s32, 1
      %p218 = scmp.ne.s32.totalorder %s213, %s215
      %p219 = scmp.eq.s32.totalorder %s32, 0
      %p220 = por %p218, %p219
      %p221 = scmp.ne.s32.totalorder %s213, %s215
      %p222 = scmp.eq.s32.totalorder %s37, 1
      %p223 = por %p221, %p222
      %p224 = scmp.ne.s32.totalorder %s215, %s216
      %p225 = scmp.eq.s32.totalorder %s37, 0
      %p226 = por %p224, %p225
      %p227 = scmp.ne.s32.totalorder %s215, %s216
      %p228 = scmp.eq.s32.totalorder %s38, 1
      %p229 = por %p227, %p228
      %p231 = scmp.ne.s32.totalorder %s216, %s230
      %p232 = scmp.eq.s32.totalorder %s38, 0
      %p233 = por %p231, %p232
      %s235 = sadd.s32 %s234, 1
      %p238 = scmp.eq.s32.totalorder %s32, 1
      %p239 = scmp.ne.s32.totalorder %s234, %s236
      %p240 = scmp.eq.s32.totalorder %s32, 0
      %p241 = por %p239, %p240
      %p242 = scmp.ne.s32.totalorder %s234, %s236
      %p243 = scmp.eq.s32.totalorder %s37, 1
      %p244 = por %p242, %p243
      %p245 = scmp.ne.s32.totalorder %s236, %s237
      %p246 = scmp.eq.s32.totalorder %s37, 0
      %p247 = por %p245, %p246
      %p248 = scmp.ne.s32.totalorder %s236, %s237
      %p249 = scmp.eq.s32.totalorder %s38, 1
      %p250 = por %p248, %p249
      %p252 = scmp.ne.s32.totalorder %s237, %s251
      %p253 = scmp.eq.s32.totalorder %s38, 0
      %p254 = por %p252, %p253
      %s256 = sadd.s32 %s255, 1
      %p259 = scmp.eq.s32.totalorder %s32, 1
      %p260 = scmp.ne.s32.totalorder %s255, %s257
      %p261 = scmp.eq.s32.totalorder %s32, 0
      %p262 = por %p260, %p261
      %p263 = scmp.ne.s32.totalorder %s255, %s257
      %p264 = scmp.eq.s32.totalorder %s37, 1
      %p265 = por %p263, %p264
      %p266 = scmp.ne.s32.totalorder %s257, %s258
      %p267 = scmp.eq.s32.totalorder %s37, 0
      %p268 = por %p266, %p267
      %p269 = scmp.ne.s32.totalorder %s257, %s258
      %p270 = scmp.eq.s32.totalorder %s38, 1
      %p271 = por %p269, %p270
      %p273 = scmp.ne.s32.totalorder %s258, %s272
      %p274 = scmp.eq.s32.totalorder %s38, 0
      %p275 = por %p273, %p274
      %s277 = sadd.s32 %s276, 1
      %p280 = scmp.eq.s32.totalorder %s32, 1
      %p281 = scmp.ne.s32.totalorder %s276, %s278
      %p282 = scmp.eq.s32.totalorder %s32, 0
      %p283 = por %p281, %p282
      %p284 = scmp.ne.s32.totalorder %s276, %s278
      %p285 = scmp.eq.s32.totalorder %s37, 1
      %p286 = por %p284, %p285
      %p287 = scmp.ne.s32.totalorder %s278, %s279
      %p288 = scmp.eq.s32.totalorder %s37, 0
      %p289 = por %p287, %p288
      %p290 = scmp.ne.s32.totalorder %s278, %s279
      %p291 = scmp.eq.s32.totalorder %s38, 1
      %p292 = por %p290, %p291
      %p294 = scmp.ne.s32.totalorder %s279, %s293
      %p295 = scmp.eq.s32.totalorder %s38, 0
      %p296 = por %p294, %p295
      %s298 = sadd.s32 %s297, 1
      %p301 = scmp.eq.s32.totalorder %s32, 1
      %p302 = scmp.ne.s32.totalorder %s297, %s299
      %p303 = scmp.eq.s32.totalorder %s32, 0
      %p304 = por %p302, %p303
      %p305 = scmp.ne.s32.totalorder %s297, %s299
      %p306 = scmp.eq.s32.totalorder %s37, 1
      %p307 = por %p305, %p306
      %p308 = scmp.ne.s32.totalorder %s299, %s300
      %p309 = scmp.eq.s32.totalorder %s37, 0
      %p310 = por %p308, %p309
      %p311 = scmp.ne.s32.totalorder %s299, %s300
      %p312 = scmp.eq.s32.totalorder %s38, 1
      %p313 = por %p311, %p312
      %p315 = scmp.ne.s32.totalorder %s300, %s314
      %p316 = scmp.eq.s32.totalorder %s38, 0
      %p317 = por %p315, %p316
      %s319 = sadd.s32 %s318, 1
      %p322 = scmp.eq.s32.totalorder %s32, 1
      %p323 = scmp.ne.s32.totalorder %s318, %s320
      %p324 = scmp.eq.s32.totalorder %s32, 0
      %p325 = por %p323, %p324
      %p326 = scmp.ne.s32.totalorder %s318, %s320
      %p327 = scmp.eq.s32.totalorder %s37, 1
      %p328 = por %p326, %p327
      %p329 = scmp.ne.s32.totalorder %s320, %s321
      %p330 = scmp.eq.s32.totalorder %s37, 0
      %p331 = por %p329, %p330
      %p332 = scmp.ne.s32.totalorder %s320, %s321
      %p333 = scmp.eq.s32.totalorder %s38, 1
      %p334 = por %p332, %p333
      %p336 = scmp.ne.s32.totalorder %s321, %s335
      %p337 = scmp.eq.s32.totalorder %s38, 0
      %p338 = por %p336, %p337
      %s340 = sadd.s32 %s339, 1
      %p343 = scmp.eq.s32.totalorder %s32, 1
      %p344 = scmp.ne.s32.totalorder %s339, %s341
      %p345 = scmp.eq.s32.totalorder %s32, 0
      %p346 = por %p344, %p345
      %p347 = scmp.ne.s32.totalorder %s339, %s341
      %p348 = scmp.eq.s32.totalorder %s37, 1
      %p349 = por %p347, %p348
      %p350 = scmp.ne.s32.totalorder %s341, %s342
      %p351 = scmp.eq.s32.totalorder %s37, 0
      %p352 = por %p350, %p351
      %p353 = scmp.ne.s32.totalorder %s341, %s342
      %p354 = scmp.eq.s32.totalorder %s38, 1
      %p355 = por %p353, %p354
      %p357 = scmp.ne.s32.totalorder %s342, %s356
      %p358 = scmp.eq.s32.totalorder %s38, 0
      %p359 = por %p357, %p358
      %s361 = sadd.s32 %s360, 1
      %p364 = scmp.eq.s32.totalorder %s32, 1
      %p365 = scmp.ne.s32.totalorder %s360, %s362
      %p366 = scmp.eq.s32.totalorder %s32, 0
      %p367 = por %p365, %p366
      %p368 = scmp.ne.s32.totalorder %s360, %s362
      %p369 = scmp.eq.s32.totalorder %s37, 1
      %p370 = por %p368, %p369
      %p371 = scmp.ne.s32.totalorder %s362, %s363
      %p372 = scmp.eq.s32.totalorder %s37, 0
      %p373 = por %p371, %p372
      %p374 = scmp.ne.s32.totalorder %s362, %s363
      %p375 = scmp.eq.s32.totalorder %s38, 1
      %p376 = por %p374, %p375
      %p378 = scmp.ne.s32.totalorder %s363, %s377
      %p379 = scmp.eq.s32.totalorder %s38, 0
      %p380 = por %p378, %p379
      %s382 = sadd.s32 %s381, 1
      %p385 = scmp.eq.s32.totalorder %s32, 1
      %p386 = scmp.ne.s32.totalorder %s381, %s383
      %p387 = scmp.eq.s32.totalorder %s32, 0
      %p388 = por %p386, %p387
      %p389 = scmp.ne.s32.totalorder %s381, %s383
      %p390 = scmp.eq.s32.totalorder %s37, 1
      %p391 = por %p389, %p390
      %p392 = scmp.ne.s32.totalorder %s383, %s384
      %p393 = scmp.eq.s32.totalorder %s37, 0
      %p394 = por %p392, %p393
      %p395 = scmp.ne.s32.totalorder %s383, %s384
      %p396 = scmp.eq.s32.totalorder %s38, 1
      %p397 = por %p395, %p396
      %p399 = scmp.ne.s32.totalorder %s384, %s398
      %p400 = scmp.eq.s32.totalorder %s38, 0
      %p401 = por %p399, %p400
      %s403 = sadd.s32 %s402, 1
      %p406 = scmp.eq.s32.totalorder %s32, 1
      %p407 = scmp.ne.s32.totalorder %s402, %s404
      %p408 = scmp.eq.s32.totalorder %s32, 0
      %p409 = por %p407, %p408
      %p410 = scmp.ne.s32.totalorder %s402, %s404
      %p411 = scmp.eq.s32.totalorder %s37, 1
      %p412 = por %p410, %p411
      %p413 = scmp.ne.s32.totalorder %s404, %s405
      %p414 = scmp.eq.s32.totalorder %s37, 0
      %p415 = por %p413, %p414
      %p416 = scmp.ne.s32.totalorder %s404, %s405
      %p417 = scmp.eq.s32.totalorder %s38, 1
      %p418 = por %p416, %p417
      %p420 = scmp.ne.s32.totalorder %s405, %s419
      %p421 = scmp.eq.s32.totalorder %s38, 0
      %p422 = por %p420, %p421
      %s424 = sadd.s32 %s423, 1
      %p427 = scmp.eq.s32.totalorder %s32, 1
      %p428 = scmp.ne.s32.totalorder %s423, %s425
      %p429 = scmp.eq.s32.totalorder %s32, 0
      %p430 = por %p428, %p429
      %p431 = scmp.ne.s32.totalorder %s423, %s425
      %p432 = scmp.eq.s32.totalorder %s37, 1
      %p433 = por %p431, %p432
      %p434 = scmp.ne.s32.totalorder %s425, %s426
      %p435 = scmp.eq.s32.totalorder %s37, 0
      %p436 = por %p434, %p435
      %p437 = scmp.ne.s32.totalorder %s425, %s426
      %p438 = scmp.eq.s32.totalorder %s38, 1
      %p439 = por %p437, %p438
      %p441 = scmp.ne.s32.totalorder %s426, %s440
      %p442 = scmp.eq.s32.totalorder %s38, 0
      %p443 = por %p441, %p442
      %s445 = sadd.s32 %s444, 1
      %p448 = scmp.eq.s32.totalorder %s32, 1
      %p449 = scmp.ne.s32.totalorder %s444, %s446
      %p450 = scmp.eq.s32.totalorder %s32, 0
      %p451 = por %p449, %p450
      %p452 = scmp.ne.s32.totalorder %s444, %s446
      %p453 = scmp.eq.s32.totalorder %s37, 1
      %p454 = por %p452, %p453
      %p455 = scmp.ne.s32.totalorder %s446, %s447
      %p456 = scmp.eq.s32.totalorder %s37, 0
      %p457 = por %p455, %p456
      %p458 = scmp.ne.s32.totalorder %s446, %s447
      %p459 = scmp.eq.s32.totalorder %s38, 1
      %p460 = por %p458, %p459
      %p462 = scmp.ne.s32.totalorder %s447, %s461
      %p463 = scmp.eq.s32.totalorder %s38, 0
      %p464 = por %p462, %p463
      %s466 = sadd.s32 %s465, 1
      %p469 = scmp.eq.s32.totalorder %s32, 1
      %p470 = scmp.ne.s32.totalorder %s465, %s467
      %p471 = scmp.eq.s32.totalorder %s32, 0
      %p472 = por %p470, %p471
      %p473 = scmp.ne.s32.totalorder %s465, %s467
      %p474 = scmp.eq.s32.totalorder %s37, 1
      %p475 = por %p473, %p474
      %p476 = scmp.ne.s32.totalorder %s467, %s468
      %p477 = scmp.eq.s32.totalorder %s37, 0
      %p478 = por %p476, %p477
      %p479 = scmp.ne.s32.totalorder %s467, %s468
      %p480 = scmp.eq.s32.totalorder %s38, 1
      %p481 = por %p479, %p480
      %p483 = scmp.ne.s32.totalorder %s468, %s482
      %p484 = scmp.eq.s32.totalorder %s38, 0
      %p485 = por %p483, %p484
      %s487 = sadd.s32 %s486, 1
      %p490 = scmp.eq.s32.totalorder %s32, 1
      %p491 = scmp.ne.s32.totalorder %s486, %s488
      %p492 = scmp.eq.s32.totalorder %s32, 0
      %p493 = por %p491, %p492
      %p494 = scmp.ne.s32.totalorder %s486, %s488
      %p495 = scmp.eq.s32.totalorder %s37, 1
      %p496 = por %p494, %p495
      %p497 = scmp.ne.s32.totalorder %s488, %s489
      %p498 = scmp.eq.s32.totalorder %s37, 0
      %p499 = por %p497, %p498
      %p500 = scmp.ne.s32.totalorder %s488, %s489
      %p501 = scmp.eq.s32.totalorder %s38, 1
      %p502 = por %p500, %p501
      %p504 = scmp.ne.s32.totalorder %s489, %s503
      %p505 = scmp.eq.s32.totalorder %s38, 0
      %p506 = por %p504, %p505
      %s508 = sadd.s32 %s507, 1
      %p511 = scmp.eq.s32.totalorder %s32, 1
      %p512 = scmp.ne.s32.totalorder %s507, %s509
      %p513 = scmp.eq.s32.totalorder %s32, 0
      %p514 = por %p512, %p513
      %p515 = scmp.ne.s32.totalorder %s507, %s509
      %p516 = scmp.eq.s32.totalorder %s37, 1
      %p517 = por %p515, %p516
      %p518 = scmp.ne.s32.totalorder %s509, %s510
      %p519 = scmp.eq.s32.totalorder %s37, 0
      %p520 = por %p518, %p519
      %p521 = scmp.ne.s32.totalorder %s509, %s510
      %p522 = scmp.eq.s32.totalorder %s38, 1
      %p523 = por %p521, %p522
      %p525 = scmp.ne.s32.totalorder %s510, %s524
      %p526 = scmp.eq.s32.totalorder %s38, 0
      %p527 = por %p525, %p526
      %s528 = ssub.s32 %s32, %s39
      %p529 = scmp.eq.s32.totalorder %s528, 0
      %s531 = sadd.s32 %s530, 1
      %s532 = scalar_select %p529, %s530, %s531
      %p535 = pneg %p529
      %p536 = scmp.eq.s32.totalorder %s32, 1
      %p537 = por %p535, %p536
      %p538 = scmp.ne.s32.totalorder %s530, %s533
      %p539 = scmp.eq.s32.totalorder %s32, 0
      %p540 = por %p538, %p539
      %p541 = scmp.ne.s32.totalorder %s530, %s533
      %p542 = scmp.eq.s32.totalorder %s37, 1
      %p543 = por %p541, %p542
      %p544 = scmp.ne.s32.totalorder %s533, %s534
      %p545 = scmp.eq.s32.totalorder %s37, 0
      %p546 = por %p544, %p545
      %p547 = scmp.ne.s32.totalorder %s533, %s534
      %p548 = scmp.eq.s32.totalorder %s38, 1
      %p549 = por %p547, %p548
      %p551 = scmp.ne.s32.totalorder %s534, %s550
      %p552 = scmp.eq.s32.totalorder %s38, 0
      %p553 = por %p551, %p552
      %p554 = scmp.le.s32.totalorder 1, %s32
      %p555 = scmp.lt.s32.totalorder %s32, 3
      %p556 = pnand %p554, %p555
      %p557 = pneg %p556
      // Predicated region
      $region9: #{vit_forward.1} parent=5 // pred_check
        _
      $region10: #{vit_forward.1} parent=5 // pred_check_branch
        %559 = sbr.rel (%p556) target = $region12
      $region11: #{vit_forward.1} parent=5 // pred_region
        %s560 = ssub.s32 %s32, 1
        // Predicated region
        $region13: #{vit_forward.1} parent=11 // pred_check
          %p561 = pneg %p79
        $region14: #{vit_forward.1} parent=11 // pred_check_branch
          %563 = sbr.rel (%p561) target = $region16
        $region15: #{vit_forward.1} parent=11 // pred_region
          _
        $region16: #{vit_forward.1} parent=11 // pred_fallthru
          _
        // Predicated region
        $region17: #{vit_forward.1} parent=11 // pred_check
          %p564 = pneg %p100
        $region18: #{vit_forward.1} parent=11 // pred_check_branch
          %566 = sbr.rel (%p564) target = $region20
        $region19: #{vit_forward.1} parent=11 // pred_region
          _
        $region20: #{vit_forward.1} parent=11 // pred_fallthru
          _
        // Predicated region
        $region21: #{vit_forward.1} parent=11 // pred_check
          %p567 = pneg %p121
        $region22: #{vit_forward.1} parent=11 // pred_check_branch
          %569 = sbr.rel (%p567) target = $region24
        $region23: #{vit_forward.1} parent=11 // pred_region
          _
        $region24: #{vit_forward.1} parent=11 // pred_fallthru
          _
        // Predicated region
        $region25: #{vit_forward.1} parent=11 // pred_check
          %p570 = pneg %p142
        $region26: #{vit_forward.1} parent=11 // pred_check_branch
          %572 = sbr.rel (%p570) target = $region28
        $region27: #{vit_forward.1} parent=11 // pred_region
          _
        $region28: #{vit_forward.1} parent=11 // pred_fallthru
          _
        // Predicated region
        $region29: #{vit_forward.1} parent=11 // pred_check
          %p573 = pneg %p163
        $region30: #{vit_forward.1} parent=11 // pred_check_branch
          %575 = sbr.rel (%p573) target = $region32
        $region31: #{vit_forward.1} parent=11 // pred_region
          _
        $region32: #{vit_forward.1} parent=11 // pred_fallthru
          _
        // Predicated region
        $region33: #{vit_forward.1} parent=11 // pred_check
          %p576 = pneg %p184
        $region34: #{vit_forward.1} parent=11 // pred_check_branch
          %578 = sbr.rel (%p576) target = $region36
        $region35: #{vit_forward.1} parent=11 // pred_region
          _
        $region36: #{vit_forward.1} parent=11 // pred_fallthru
          _
        // Predicated region
        $region37: #{vit_forward.1} parent=11 // pred_check
          %p579 = pneg %p205
        $region38: #{vit_forward.1} parent=11 // pred_check_branch
          %581 = sbr.rel (%p579) target = $region40
        $region39: #{vit_forward.1} parent=11 // pred_region
          _
        $region40: #{vit_forward.1} parent=11 // pred_fallthru
          _
        // Predicated region
        $region41: #{vit_forward.1} parent=11 // pred_check
          %p582 = pneg %p226
        $region42: #{vit_forward.1} parent=11 // pred_check_branch
          %584 = sbr.rel (%p582) target = $region44
        $region43: #{vit_forward.1} parent=11 // pred_region
          _
        $region44: #{vit_forward.1} parent=11 // pred_fallthru
          _
        // Predicated region
        $region45: #{vit_forward.1} parent=11 // pred_check
          %p585 = pneg %p247
        $region46: #{vit_forward.1} parent=11 // pred_check_branch
          %587 = sbr.rel (%p585) target = $region48
        $region47: #{vit_forward.1} parent=11 // pred_region
          _
        $region48: #{vit_forward.1} parent=11 // pred_fallthru
          _
        // Predicated region
        $region49: #{vit_forward.1} parent=11 // pred_check
          %p588 = pneg %p268
        $region50: #{vit_forward.1} parent=11 // pred_check_branch
          %590 = sbr.rel (%p588) target = $region52
        $region51: #{vit_forward.1} parent=11 // pred_region
          _
        $region52: #{vit_forward.1} parent=11 // pred_fallthru
          _
        // Predicated region
        $region53: #{vit_forward.1} parent=11 // pred_check
          %p591 = pneg %p289
        $region54: #{vit_forward.1} parent=11 // pred_check_branch
          %593 = sbr.rel (%p591) target = $region56
        $region55: #{vit_forward.1} parent=11 // pred_region
          _
        $region56: #{vit_forward.1} parent=11 // pred_fallthru
          _
        // Predicated region
        $region57: #{vit_forward.1} parent=11 // pred_check
          %p594 = pneg %p310
        $region58: #{vit_forward.1} parent=11 // pred_check_branch
          %596 = sbr.rel (%p594) target = $region60
        $region59: #{vit_forward.1} parent=11 // pred_region
          _
        $region60: #{vit_forward.1} parent=11 // pred_fallthru
          _
        // Predicated region
        $region61: #{vit_forward.1} parent=11 // pred_check
          %p597 = pneg %p331
        $region62: #{vit_forward.1} parent=11 // pred_check_branch
          %599 = sbr.rel (%p597) target = $region64
        $region63: #{vit_forward.1} parent=11 // pred_region
          _
        $region64: #{vit_forward.1} parent=11 // pred_fallthru
          _
        // Predicated region
        $region65: #{vit_forward.1} parent=11 // pred_check
          %p600 = pneg %p352
        $region66: #{vit_forward.1} parent=11 // pred_check_branch
          %602 = sbr.rel (%p600) target = $region68
        $region67: #{vit_forward.1} parent=11 // pred_region
          _
        $region68: #{vit_forward.1} parent=11 // pred_fallthru
          _
        // Predicated region
        $region69: #{vit_forward.1} parent=11 // pred_check
          %p603 = pneg %p373
        $region70: #{vit_forward.1} parent=11 // pred_check_branch
          %605 = sbr.rel (%p603) target = $region72
        $region71: #{vit_forward.1} parent=11 // pred_region
          _
        $region72: #{vit_forward.1} parent=11 // pred_fallthru
          _
        // Predicated region
        $region73: #{vit_forward.1} parent=11 // pred_check
          %p606 = pneg %p394
        $region74: #{vit_forward.1} parent=11 // pred_check_branch
          %608 = sbr.rel (%p606) target = $region76
        $region75: #{vit_forward.1} parent=11 // pred_region
          _
        $region76: #{vit_forward.1} parent=11 // pred_fallthru
          _
        // Predicated region
        $region77: #{vit_forward.1} parent=11 // pred_check
          %p609 = pneg %p415
        $region78: #{vit_forward.1} parent=11 // pred_check_branch
          %611 = sbr.rel (%p609) target = $region80
        $region79: #{vit_forward.1} parent=11 // pred_region
          _
        $region80: #{vit_forward.1} parent=11 // pred_fallthru
          _
        // Predicated region
        $region81: #{vit_forward.1} parent=11 // pred_check
          %p612 = pneg %p436
        $region82: #{vit_forward.1} parent=11 // pred_check_branch
          %614 = sbr.rel (%p612) target = $region84
        $region83: #{vit_forward.1} parent=11 // pred_region
          _
        $region84: #{vit_forward.1} parent=11 // pred_fallthru
          _
        // Predicated region
        $region85: #{vit_forward.1} parent=11 // pred_check
          %p615 = pneg %p457
        $region86: #{vit_forward.1} parent=11 // pred_check_branch
          %617 = sbr.rel (%p615) target = $region88
        $region87: #{vit_forward.1} parent=11 // pred_region
          _
        $region88: #{vit_forward.1} parent=11 // pred_fallthru
          _
        // Predicated region
        $region89: #{vit_forward.1} parent=11 // pred_check
          %p618 = pneg %p478
        $region90: #{vit_forward.1} parent=11 // pred_check_branch
          %620 = sbr.rel (%p618) target = $region92
        $region91: #{vit_forward.1} parent=11 // pred_region
          _
        $region92: #{vit_forward.1} parent=11 // pred_fallthru
          _
        // Predicated region
        $region93: #{vit_forward.1} parent=11 // pred_check
          %p621 = pneg %p499
        $region94: #{vit_forward.1} parent=11 // pred_check_branch
          %623 = sbr.rel (%p621) target = $region96
        $region95: #{vit_forward.1} parent=11 // pred_region
          _
        $region96: #{vit_forward.1} parent=11 // pred_fallthru
          _
        // Predicated region
        $region97: #{vit_forward.1} parent=11 // pred_check
          %p624 = pneg %p520
        $region98: #{vit_forward.1} parent=11 // pred_check_branch
          %626 = sbr.rel (%p624) target = $region100
        $region99: #{vit_forward.1} parent=11 // pred_region
          _
        $region100: #{vit_forward.1} parent=11 // pred_fallthru
          _
      $region12: #{vit_forward.1} parent=5 // pred_fallthru
        _
      %p627 = scmp.lt.s32.totalorder %s32, 2
      // Predicated region
      $region101: #{vit_forward.1} parent=5 // pred_check
        %p628 = pneg %p627
      $region102: #{vit_forward.1} parent=5 // pred_check_branch
        %630 = sbr.rel (%p628) target = $region104
      $region103: #{vit_forward.1} parent=5 // pred_region
        // Predicated region
        $region105: #{vit_forward.1} parent=103 // pred_check
          %p631 = pneg %p52
        $region106: #{vit_forward.1} parent=103 // pred_check_branch
          %633 = sbr.rel (%p631) target = $region108
        $region107: #{vit_forward.1} parent=103 // pred_region
          %p634 = scmp.lt.s32.totalorder %s32, 1
          %s635 = scalar_select %p634, %s32, 1
          %s636 = smul.addr %s635, 6
          %s637 = smul.addr %s636, 8
          %s638 = scalar_lea.vmem %s0, %s637
        $region108: #{vit_forward.1} parent=103 // pred_fallthru
          _
      $region104: #{vit_forward.1} parent=5 // pred_fallthru
        _
      %p639 = scmp.le.s32.totalorder 1, %s32
      %p640 = scmp.lt.s32.totalorder %s32, 3
      %p641 = pnand %p639, %p640
      %p642 = pneg %p641
      // Predicated region
      $region109: #{vit_forward.1} parent=5 // pred_check
        _
      $region110: #{vit_forward.1} parent=5 // pred_check_branch
        %644 = sbr.rel (%p641) target = $region112
      $region111: #{vit_forward.1} parent=5 // pred_region
        %s645 = ssub.s32 %s32, 1
        %p646 = scmp.lt.s32.totalorder %s37, 1
        %s647 = scalar_select %p646, %s37, 1
        %s648 = smul.addr %s647, 6
        %s649 = smul.addr %s648, 8
        %s650 = scalar_lea.vmem %s0, %s649
        %p651 = pneg %p58
        %p652 = pneg %p55
        %p653 = pneg %p79
        %p654 = pneg %p76
        %p655 = pneg %p100
        %p656 = pneg %p97
        %p657 = pneg %p121
        %p658 = pneg %p118
        %p659 = pneg %p142
        %p660 = pneg %p139
        %p661 = pneg %p163
        %p662 = pneg %p160
        %p663 = pneg %p184
        %p664 = pneg %p181
        %p665 = pneg %p205
        %p666 = pneg %p202
        %p667 = pneg %p226
        %p668 = pneg %p223
        %p669 = pneg %p247
        %p670 = pneg %p244
        %p671 = pneg %p268
        %p672 = pneg %p265
        %p673 = pneg %p289
        %p674 = pneg %p286
        %p675 = pneg %p310
        %p676 = pneg %p307
        %p677 = pneg %p331
        %p678 = pneg %p328
        %p679 = pneg %p352
        %p680 = pneg %p349
        %p681 = pneg %p373
        %p682 = pneg %p370
        %p683 = pneg %p394
        %p684 = pneg %p391
        %p685 = pneg %p415
        %p686 = pneg %p412
        %p687 = pneg %p436
        %p688 = pneg %p433
        %p689 = pneg %p457
        %p690 = pneg %p454
        %p691 = pneg %p478
        %p692 = pneg %p475
        %p693 = pneg %p499
        %p694 = pneg %p496
        %p695 = pneg %p520
        %p696 = pneg %p517
        %p697 = pneg %p546
        %p698 = pneg %p543
        %s699 = sand.u32 %s533, 1
        %s700 = scalar_lea.sflag [#allocation3], %s699
        %s701 = sand.u32 %s533, 1
        %s702 = scalar_lea.vmem [#allocation2], %s701
        %p703 = scmp.lt.s32.totalorder %s37, 1
        %s704 = scalar_select %p703, %s37, 1
        %s705 = smul.addr %s704, 6
        %s706 = smul.addr %s705, 8
        %s707 = scalar_lea.vmem %s0, %s706
        %v708 = vld [vmem:[%s707] sm:$0x1f]
        %v709 = vld [vmem:[%s707 + $0x8] sm:$0x1f]
        %v710 = vld [vmem:[%s707 + $0x10] sm:$0x1f]
        %v711 = vld [vmem:[%s707 + $0x18] sm:$0x1f]
        %v712 = vld [vmem:[%s707 + $0x20] sm:$0x1f]
        %v713 = vld [vmem:[%s707 + $0x28] sm:$0x1f]
        %v714 = vld [vmem:[%s1] sm:$0xff]
        %v715 = vld [vmem:[%s1 + $0x8] sm:$0xff]
        %v716 = vld [vmem:[%s1 + $0x10] sm:$0xff]
        %v717 = vld [vmem:[%s1 + $0x18] sm:$0xff]
        %v718 = vld [vmem:[%s1 + $0x20] sm:$0xff]
        %v719 = vld [vmem:[%s1 + $0x28] sm:$0xff]
        %v720 = vld [vmem:[%s1 + $0x30] sm:$0xff]
        %v721 = vld [vmem:[%s1 + $0x38] sm:$0xff]
        %v722 = vld [vmem:[%s1 + $0x40] sm:$0xff]
        %v723 = vld [vmem:[%s1 + $0x48] sm:$0xff]
        %v724 = vld [vmem:[%s1 + $0x50] sm:$0xff]
        %v725 = vld [vmem:[%s1 + $0x58] sm:$0xff]
        %v726 = vld [vmem:[%s1 + $0x60] sm:$0xff]
        %v727 = vld [vmem:[%s1 + $0x68] sm:$0xff]
        %v728 = vld [vmem:[%s1 + $0x70] sm:$0xff]
        %v729 = vld [vmem:[%s1 + $0x78] sm:$0xff]
        %v730 = vld [vmem:[%s1 + $0x80] sm:$0xff]
        %v731 = vld [vmem:[%s1 + $0x88] sm:$0xff]
        %v732 = vld [vmem:[%s1 + $0x90] sm:$0xff]
        %v733 = vld [vmem:[%s1 + $0x98] sm:$0xff]
        %v734 = vld [vmem:[%s1 + $0xa0] sm:$0xff]
        %v735 = vld [vmem:[%s1 + $0xa8] sm:$0xff]
        %v736 = vld [vmem:[%s1 + $0xb0] sm:$0xff]
        %v737 = vld [vmem:[%s1 + $0xb8] sm:$0xff]
        %v738 = vld [vmem:[%s1 + $0xc0] sm:$0xff]
        %v739 = vld [vmem:[%s1 + $0xc8] sm:$0xff]
        %v740 = vld [vmem:[%s1 + $0xd0] sm:$0xff]
        %v741 = vld [vmem:[%s1 + $0xd8] sm:$0xff]
        %v742 = vld [vmem:[%s1 + $0xe0] sm:$0xff]
        %v743 = vld [vmem:[%s1 + $0xe8] sm:$0xff]
        %v744 = vld [vmem:[%s1 + $0xf0] sm:$0xff]
        %v745 = vld [vmem:[%s1 + $0xf8] sm:$0xff]
        %v746 = vld [vmem:[%s1 + $0x100] sm:$0xff]
        %v747 = vld [vmem:[%s1 + $0x108] sm:$0xff]
        %v748 = vld [vmem:[%s1 + $0x110] sm:$0xff]
        %v749 = vld [vmem:[%s1 + $0x118] sm:$0xff]
        %v750 = vld [vmem:[%s1 + $0x120] sm:$0xff]
        %v751 = vld [vmem:[%s1 + $0x128] sm:$0xff]
        %v752 = vld [vmem:[%s1 + $0x130] sm:$0xff]
        %v753 = vld [vmem:[%s1 + $0x138] sm:$0xff]
        %v754 = vld [vmem:[%s1 + $0x140] sm:$0xff]
        %v755 = vld [vmem:[%s1 + $0x148] sm:$0xff]
        %v756 = vld [vmem:[%s1 + $0x150] sm:$0xff]
        %v757 = vld [vmem:[%s1 + $0x158] sm:$0xff]
        %v758 = vld [vmem:[%s1 + $0x160] sm:$0xff]
        %v759 = vld [vmem:[%s1 + $0x168] sm:$0xff]
        %v760 = vld [vmem:[%s1 + $0x170] sm:$0xff]
        %v761 = vld [vmem:[%s1 + $0x178] sm:$0xff]
        %v762 = vld [vmem:[%s1 + $0x180] sm:$0xff]
        %v763 = vld [vmem:[%s1 + $0x188] sm:$0xff]
        %v764 = vld [vmem:[%s1 + $0x190] sm:$0xff]
        %v765 = vld [vmem:[%s1 + $0x198] sm:$0xff]
        %v766 = vld [vmem:[%s1 + $0x1a0] sm:$0xff]
        %v767 = vld [vmem:[%s1 + $0x1a8] sm:$0xff]
        %v768 = vld [vmem:[%s1 + $0x1b0] sm:$0xff]
        %v769 = vld [vmem:[%s1 + $0x1b8] sm:$0xff]
        %v770 = vld [vmem:[%s1 + $0x1c0] sm:$0xff]
        %v771 = vld [vmem:[%s1 + $0x1c8] sm:$0xff]
        %v772 = vld [vmem:[%s1 + $0x1d0] sm:$0xff]
        %v773 = vld [vmem:[%s1 + $0x1d8] sm:$0xff]
        %v774 = vld [vmem:[%s1 + $0x1e0] sm:$0xff]
        %v775 = vld [vmem:[%s1 + $0x1e8] sm:$0xff]
        %v776 = vld [vmem:[%s1 + $0x1f0] sm:$0xff]
        %v777 = vld [vmem:[%s1 + $0x1f8] sm:$0xff]
        %v778 = vld [vmem:[%s1 + $0x200] sm:$0xff]
        %v779 = vld [vmem:[%s1 + $0x208] sm:$0xff]
        %v780 = vld [vmem:[%s1 + $0x210] sm:$0xff]
        %v781 = vld [vmem:[%s1 + $0x218] sm:$0xff]
        %v782 = vld [vmem:[%s1 + $0x220] sm:$0xff]
        %v783 = vld [vmem:[%s1 + $0x228] sm:$0xff]
        %v784 = vld [vmem:[%s1 + $0x230] sm:$0xff]
        %v785 = vld [vmem:[%s1 + $0x238] sm:$0xff]
        %v786 = vld [vmem:[%s1 + $0x240] sm:$0xff]
        %v787 = vld [vmem:[%s1 + $0x248] sm:$0xff]
        %v788 = vld [vmem:[%s1 + $0x250] sm:$0xff]
        %v789 = vld [vmem:[%s1 + $0x258] sm:$0xff]
        %v790 = vld [vmem:[%s1 + $0x260] sm:$0xff]
        %v791 = vld [vmem:[%s1 + $0x268] sm:$0xff]
        %v792 = vld [vmem:[%s1 + $0x270] sm:$0xff]
        %v793 = vld [vmem:[%s1 + $0x278] sm:$0xff]
        %v794 = vld [vmem:[%s1 + $0x280] sm:$0xff]
        %v795 = vld [vmem:[%s1 + $0x288] sm:$0xff]
        %v796 = vld [vmem:[%s1 + $0x290] sm:$0xff]
        %v797 = vld [vmem:[%s1 + $0x298] sm:$0xff]
        %v798 = vld [vmem:[%s1 + $0x2a0] sm:$0xff]
        %v799 = vld [vmem:[%s1 + $0x2a8] sm:$0xff]
        %v800 = vld [vmem:[%s1 + $0x2b0] sm:$0xff]
        %v801 = vld [vmem:[%s1 + $0x2b8] sm:$0xff]
        %v802 = vld [vmem:[%s1 + $0x2c0] sm:$0xff]
        %v803 = vld [vmem:[%s1 + $0x2c8] sm:$0xff]
        %v804 = vld [vmem:[%s1 + $0x2d0] sm:$0xff]
        %v805 = vld [vmem:[%s1 + $0x2d8] sm:$0xff]
        %v806 = vld [vmem:[%s1 + $0x2e0] sm:$0xff]
        %v807 = vld [vmem:[%s1 + $0x2e8] sm:$0xff]
        %v808 = vld [vmem:[%s1 + $0x2f0] sm:$0xff]
        %v809 = vld [vmem:[%s1 + $0x2f8] sm:$0xff]
        %v810 = vld [vmem:[%s2] sm:$0x1f]
        %811 = vmatpush.msra.mxu0 %v729
        %812 = vmatpush.msra.mxu0 %v728
        %813 = vmatpush.msra.mxu0 %v727
        %814 = vmatpush.msra.mxu0 %v726
        %815 = vmatpush.msra.mxu0 %v725
        %816 = vmatpush.msra.mxu0 %v724
        %817 = vmatpush.msra.mxu0 %v723
        %818 = vmatpush.msra.mxu0 %v722
        %819 = vmatpush.msra.mxu0 %v721
        %820 = vmatpush.msra.mxu0 %v720
        %821 = vmatpush.msra.mxu0 %v719
        %822 = vmatpush.msra.mxu0 %v718
        %823 = vmatpush.msra.mxu0 %v717
        %824 = vmatpush.msra.mxu0 %v716
        %825 = vmatpush.msra.mxu0 %v715
        %826 = vmatpush.msra.mxu0 %v714
        %827 = vmatmul.f32.gmra.mxu0 %v708
        %v828 = vpop.f32.mrf.mxu0
        %v829 = vadd.f32 %v810, %v828
        %830 = vdwg.mxu0
        %831 = vmatpush.msra.mxu0 %v745
        %832 = vmatpush.msra.mxu0 %v744
        %833 = vmatpush.msra.mxu0 %v743
        %834 = vmatpush.msra.mxu0 %v742
        %835 = vmatpush.msra.mxu0 %v741
        %836 = vmatpush.msra.mxu0 %v740
        %837 = vmatpush.msra.mxu0 %v739
        %838 = vmatpush.msra.mxu0 %v738
        %839 = vmatpush.msra.mxu0 %v737
        %840 = vmatpush.msra.mxu0 %v736
        %841 = vmatpush.msra.mxu0 %v735
        %842 = vmatpush.msra.mxu0 %v734
        %843 = vmatpush.msra.mxu0 %v733
        %844 = vmatpush.msra.mxu0 %v732
        %845 = vmatpush.msra.mxu0 %v731
        %846 = vmatpush.msra.mxu0 %v730
        %847 = vmatmul.f32.gmra.mxu0 %v709
        %v848 = vpop.f32.mrf.mxu0
        %v849 = vadd.f32 %v829, %v848
        %850 = vdwg.mxu0
        %851 = vmatpush.msra.mxu0 %v761
        %852 = vmatpush.msra.mxu0 %v760
        %853 = vmatpush.msra.mxu0 %v759
        %854 = vmatpush.msra.mxu0 %v758
        %855 = vmatpush.msra.mxu0 %v757
        %856 = vmatpush.msra.mxu0 %v756
        %857 = vmatpush.msra.mxu0 %v755
        %858 = vmatpush.msra.mxu0 %v754
        %859 = vmatpush.msra.mxu0 %v753
        %860 = vmatpush.msra.mxu0 %v752
        %861 = vmatpush.msra.mxu0 %v751
        %862 = vmatpush.msra.mxu0 %v750
        %863 = vmatpush.msra.mxu0 %v749
        %864 = vmatpush.msra.mxu0 %v748
        %865 = vmatpush.msra.mxu0 %v747
        %866 = vmatpush.msra.mxu0 %v746
        %867 = vmatmul.f32.gmra.mxu0 %v710
        %v868 = vpop.f32.mrf.mxu0
        %v869 = vadd.f32 %v849, %v868
        %870 = vdwg.mxu0
        %871 = vmatpush.msra.mxu0 %v777
        %872 = vmatpush.msra.mxu0 %v776
        %873 = vmatpush.msra.mxu0 %v775
        %874 = vmatpush.msra.mxu0 %v774
        %875 = vmatpush.msra.mxu0 %v773
        %876 = vmatpush.msra.mxu0 %v772
        %877 = vmatpush.msra.mxu0 %v771
        %878 = vmatpush.msra.mxu0 %v770
        %879 = vmatpush.msra.mxu0 %v769
        %880 = vmatpush.msra.mxu0 %v768
        %881 = vmatpush.msra.mxu0 %v767
        %882 = vmatpush.msra.mxu0 %v766
        %883 = vmatpush.msra.mxu0 %v765
        %884 = vmatpush.msra.mxu0 %v764
        %885 = vmatpush.msra.mxu0 %v763
        %886 = vmatpush.msra.mxu0 %v762
        %887 = vmatmul.f32.gmra.mxu0 %v711
        %v888 = vpop.f32.mrf.mxu0
        %v889 = vadd.f32 %v869, %v888
        %890 = vdwg.mxu0
        %891 = vmatpush.msra.mxu0 %v793
        %892 = vmatpush.msra.mxu0 %v792
        %893 = vmatpush.msra.mxu0 %v791
        %894 = vmatpush.msra.mxu0 %v790
        %895 = vmatpush.msra.mxu0 %v789
        %896 = vmatpush.msra.mxu0 %v788
        %897 = vmatpush.msra.mxu0 %v787
        %898 = vmatpush.msra.mxu0 %v786
        %899 = vmatpush.msra.mxu0 %v785
        %900 = vmatpush.msra.mxu0 %v784
        %901 = vmatpush.msra.mxu0 %v783
        %902 = vmatpush.msra.mxu0 %v782
        %903 = vmatpush.msra.mxu0 %v781
        %904 = vmatpush.msra.mxu0 %v780
        %905 = vmatpush.msra.mxu0 %v779
        %906 = vmatpush.msra.mxu0 %v778
        %907 = vmatmul.f32.gmra.mxu0 %v712
        %v908 = vpop.f32.mrf.mxu0
        %v909 = vadd.f32 %v889, %v908
        %910 = vdwg.mxu0
        %911 = vmatpush.msra.mxu0 %v809
        %912 = vmatpush.msra.mxu0 %v808
        %913 = vmatpush.msra.mxu0 %v807
        %914 = vmatpush.msra.mxu0 %v806
        %915 = vmatpush.msra.mxu0 %v805
        %916 = vmatpush.msra.mxu0 %v804
        %917 = vmatpush.msra.mxu0 %v803
        %918 = vmatpush.msra.mxu0 %v802
        %919 = vmatpush.msra.mxu0 %v801
        %920 = vmatpush.msra.mxu0 %v800
        %921 = vmatpush.msra.mxu0 %v799
        %922 = vmatpush.msra.mxu0 %v798
        %923 = vmatpush.msra.mxu0 %v797
        %924 = vmatpush.msra.mxu0 %v796
        %925 = vmatpush.msra.mxu0 %v795
        %926 = vmatpush.msra.mxu0 %v794
        %927 = vmatmul.f32.gmra.mxu0 %v713
        %v928 = vpop.f32.mrf.mxu0
        %v929 = vadd.f32 %v909, %v928
        %930 = vdwg.mxu0
        %v931 = vld [vmem:[%s3] sm:$0x1]
        %v932 = vld [vmem:[%s4] sm:$0x1]
        %vm933 = vcmask 258048
        %v934 = vsel %vm933, %v929, 0.0
        %935 = vadd.xlane.f32.xlu0 %v934
        %v936 = vpop.xlane.xlu0 %935
        %v937 = vrcp.pop 32.0
        %v938 = vmul.f32 32.0, %v937
        %v939 = vsub.f32 1.0, %v938
        %v940 = vmul.f32 %v937, %v939
        %v941 = vadd.f32 %v937, %v940
        %vm942 = vweird.f32 %v937
        %v943 = vsel %vm942, %v937, %v941
        %v944 = vmul.f32 %v936, %v943
        %v945 = vsub.f32 %v929, %v944
        %v946 = vmul.f32 %v945, %v945
        %v947 = vsel %vm933, %v946, 0.0
        %948 = vadd.xlane.f32.xlu0 %v947
        %v949 = vpop.xlane.xlu0 %948
        %v950 = vmul.f32 %v949, %v943
        %v951 = vadd.f32 %v950, 1e-06
        %v952 = vrsqrt.pop %v951
        %v953 = vmul.f32 %v952, %v951
        %v954 = vmul.f32 %v953, %v952
        %v955 = vmul.f32 0.5, %v954
        %v956 = vsub.f32 1.5, %v955
        %v957 = vmul.f32 %v952, %v956
        %vm958 = vweird.f32 %v951
        %vm959 = vweird.f32 %v952
        %vm960 = vmor %vm958, %vm959
        %v961 = vsel %vm960, %v952, %v957
        %v962 = vmul.f32 %v945, %v961
        %v964 = vperm.slane %v931, 0
        %v966 = vmul.f32 %v962, %v964
        %v968 = vperm.slane %v932, 0
        %v970 = vadd.f32 %v966, %v968
        %v971 = vld [vmem:[%s5] sm:$0xff]
        %v972 = vld [vmem:[%s5 + $0x8] sm:$0xff]
        %v973 = vld [vmem:[%s5 + $0x10] sm:$0xff]
        %v974 = vld [vmem:[%s5 + $0x18] sm:$0xff]
        %v975 = vld [vmem:[%s5 + $0x20] sm:$0xff]
        %v976 = vld [vmem:[%s5 + $0x28] sm:$0xff]
        %v977 = vld [vmem:[%s5 + $0x30] sm:$0xff]
        %v978 = vld [vmem:[%s5 + $0x38] sm:$0xff]
        %v979 = vld [vmem:[%s5 + $0x40] sm:$0xff]
        %v980 = vld [vmem:[%s5 + $0x48] sm:$0xff]
        %v981 = vld [vmem:[%s5 + $0x50] sm:$0xff]
        %v982 = vld [vmem:[%s5 + $0x58] sm:$0xff]
        %v983 = vld [vmem:[%s5 + $0x60] sm:$0xff]
        %v984 = vld [vmem:[%s5 + $0x68] sm:$0xff]
        %v985 = vld [vmem:[%s5 + $0x70] sm:$0xff]
        %v986 = vld [vmem:[%s5 + $0x78] sm:$0xff]
        %v987 = vld [vmem:[%s6] sm:$0x1]
        %v988 = vld [vmem:[%s6 + $0x1] sm:$0x1]
        %v989 = vld [vmem:[%s6 + $0x2] sm:$0x1]
        %v990 = vld [vmem:[%s6 + $0x3] sm:$0x1]
        %v995 = vperm.slane %v987, 0
        %v996 = vperm.slane %v988, 0
        %v997 = vperm.slane %v989, 0
        %v998 = vperm.slane %v990, 0
        %vm1003 = vcmask 261120
        %v1005 = vsel %vm1003, %v970, 0
        %1007 = vmatpush.msra.mxu0 0.0
        %1008 = vmatpush.msra.mxu0 0.0
        %1009 = vmatpush.msra.mxu0 0.0
        %1010 = vmatpush.msra.mxu0 0.0
        %1011 = vmatpush.msra.mxu0 0.0
        %1012 = vmatpush.msra.mxu0 0.0
        %1013 = vmatpush.msra.mxu0 0.0
        %1014 = vmatpush.msra.mxu0 0.0
        %1015 = vmatpush.msra.mxu0 0.0
        %1016 = vmatpush.msra.mxu0 0.0
        %1017 = vmatpush.msra.mxu0 0.0
        %1018 = vmatpush.msra.mxu0 0.0
        %1019 = vmatpush.msra.mxu0 %v974
        %1020 = vmatpush.msra.mxu0 %v973
        %1021 = vmatpush.msra.mxu0 %v972
        %1022 = vmatpush.msra.mxu0 %v971
        %1023 = vmatmul.f32.gmra.mxu0 %v1005
        %v1024 = vpop.f32.mrf.mxu0
        %v1025 = vadd.f32 %v995, %v1024
        %1026 = vdwg.mxu0
        %1027 = vmatpush.msra.mxu0 0.0
        %1028 = vmatpush.msra.mxu0 0.0
        %1029 = vmatpush.msra.mxu0 0.0
        %1030 = vmatpush.msra.mxu0 0.0
        %1031 = vmatpush.msra.mxu0 0.0
        %1032 = vmatpush.msra.mxu0 0.0
        %1033 = vmatpush.msra.mxu0 0.0
        %1034 = vmatpush.msra.mxu0 0.0
        %1035 = vmatpush.msra.mxu0 0.0
        %1036 = vmatpush.msra.mxu0 0.0
        %1037 = vmatpush.msra.mxu0 0.0
        %1038 = vmatpush.msra.mxu0 0.0
        %1039 = vmatpush.msra.mxu0 %v978
        %1040 = vmatpush.msra.mxu0 %v977
        %1041 = vmatpush.msra.mxu0 %v976
        %1042 = vmatpush.msra.mxu0 %v975
        %1043 = vmatmul.f32.gmra.mxu0 %v1005
        %v1044 = vpop.f32.mrf.mxu0
        %v1045 = vadd.f32 %v996, %v1044
        %1046 = vdwg.mxu0
        %1047 = vmatpush.msra.mxu0 0.0
        %1048 = vmatpush.msra.mxu0 0.0
        %1049 = vmatpush.msra.mxu0 0.0
        %1050 = vmatpush.msra.mxu0 0.0
        %1051 = vmatpush.msra.mxu0 0.0
        %1052 = vmatpush.msra.mxu0 0.0
        %1053 = vmatpush.msra.mxu0 0.0
        %1054 = vmatpush.msra.mxu0 0.0
        %1055 = vmatpush.msra.mxu0 0.0
        %1056 = vmatpush.msra.mxu0 0.0
        %1057 = vmatpush.msra.mxu0 0.0
        %1058 = vmatpush.msra.mxu0 0.0
        %1059 = vmatpush.msra.mxu0 %v982
        %1060 = vmatpush.msra.mxu0 %v981
        %1061 = vmatpush.msra.mxu0 %v980
        %1062 = vmatpush.msra.mxu0 %v979
        %1063 = vmatmul.f32.gmra.mxu0 %v1005
        %v1064 = vpop.f32.mrf.mxu0
        %v1065 = vadd.f32 %v997, %v1064
        %1066 = vdwg.mxu0
        %1067 = vmatpush.msra.mxu0 0.0
        %1068 = vmatpush.msra.mxu0 0.0
        %1069 = vmatpush.msra.mxu0 0.0
        %1070 = vmatpush.msra.mxu0 0.0
        %1071 = vmatpush.msra.mxu0 0.0
        %1072 = vmatpush.msra.mxu0 0.0
        %1073 = vmatpush.msra.mxu0 0.0
        %1074 = vmatpush.msra.mxu0 0.0
        %1075 = vmatpush.msra.mxu0 0.0
        %1076 = vmatpush.msra.mxu0 0.0
        %1077 = vmatpush.msra.mxu0 0.0
        %1078 = vmatpush.msra.mxu0 0.0
        %1079 = vmatpush.msra.mxu0 %v986
        %1080 = vmatpush.msra.mxu0 %v985
        %1081 = vmatpush.msra.mxu0 %v984
        %1082 = vmatpush.msra.mxu0 %v983
        %1083 = vmatmul.f32.gmra.mxu0 %v1005
        %v1084 = vpop.f32.mrf.mxu0
        %v1085 = vadd.f32 %v998, %v1084
        %1086 = vdwg.mxu0
        %v1087 = vld [vmem:[%s7] sm:$0xff]
        %v1088 = vld [vmem:[%s7 + $0x8] sm:$0xff]
        %v1089 = vld [vmem:[%s7 + $0x10] sm:$0xff]
        %v1090 = vld [vmem:[%s7 + $0x18] sm:$0xff]
        %v1091 = vld [vmem:[%s7 + $0x20] sm:$0xff]
        %v1092 = vld [vmem:[%s7 + $0x28] sm:$0xff]
        %v1093 = vld [vmem:[%s7 + $0x30] sm:$0xff]
        %v1094 = vld [vmem:[%s7 + $0x38] sm:$0xff]
        %v1095 = vld [vmem:[%s7 + $0x40] sm:$0xff]
        %v1096 = vld [vmem:[%s7 + $0x48] sm:$0xff]
        %v1097 = vld [vmem:[%s7 + $0x50] sm:$0xff]
        %v1098 = vld [vmem:[%s7 + $0x58] sm:$0xff]
        %v1099 = vld [vmem:[%s7 + $0x60] sm:$0xff]
        %v1100 = vld [vmem:[%s7 + $0x68] sm:$0xff]
        %v1101 = vld [vmem:[%s7 + $0x70] sm:$0xff]
        %v1102 = vld [vmem:[%s7 + $0x78] sm:$0xff]
        %v1103 = vld [vmem:[%s8] sm:$0x1]
        %v1104 = vld [vmem:[%s8 + $0x1] sm:$0x1]
        %v1105 = vld [vmem:[%s8 + $0x2] sm:$0x1]
        %v1106 = vld [vmem:[%s8 + $0x3] sm:$0x1]
        %v1111 = vperm.slane %v1103, 0
        %v1112 = vperm.slane %v1104, 0
        %v1113 = vperm.slane %v1105, 0
        %v1114 = vperm.slane %v1106, 0
        %1119 = vmatpush.msra.mxu0 0.0
        %1120 = vmatpush.msra.mxu0 0.0
        %1121 = vmatpush.msra.mxu0 0.0
        %1122 = vmatpush.msra.mxu0 0.0
        %1123 = vmatpush.msra.mxu0 0.0
        %1124 = vmatpush.msra.mxu0 0.0
        %1125 = vmatpush.msra.mxu0 0.0
        %1126 = vmatpush.msra.mxu0 0.0
        %1127 = vmatpush.msra.mxu0 0.0
        %1128 = vmatpush.msra.mxu0 0.0
        %1129 = vmatpush.msra.mxu0 0.0
        %1130 = vmatpush.msra.mxu0 0.0
        %1131 = vmatpush.msra.mxu0 %v1090
        %1132 = vmatpush.msra.mxu0 %v1089
        %1133 = vmatpush.msra.mxu0 %v1088
        %1134 = vmatpush.msra.mxu0 %v1087
        %1135 = vmatmul.f32.gmra.mxu0 %v1005
        %v1136 = vpop.f32.mrf.mxu0
        %v1137 = vadd.f32 %v1111, %v1136
        %1138 = vdwg.mxu0
        %1139 = vmatpush.msra.mxu0 0.0
        %1140 = vmatpush.msra.mxu0 0.0
        %1141 = vmatpush.msra.mxu0 0.0
        %1142 = vmatpush.msra.mxu0 0.0
        %1143 = vmatpush.msra.mxu0 0.0
        %1144 = vmatpush.msra.mxu0 0.0
        %1145 = vmatpush.msra.mxu0 0.0
        %1146 = vmatpush.msra.mxu0 0.0
        %1147 = vmatpush.msra.mxu0 0.0
        %1148 = vmatpush.msra.mxu0 0.0
        %1149 = vmatpush.msra.mxu0 0.0
        %1150 = vmatpush.msra.mxu0 0.0
        %1151 = vmatpush.msra.mxu0 %v1094
        %1152 = vmatpush.msra.mxu0 %v1093
        %1153 = vmatpush.msra.mxu0 %v1092
        %1154 = vmatpush.msra.mxu0 %v1091
        %1155 = vmatmul.f32.gmra.mxu0 %v1005
        %v1156 = vpop.f32.mrf.mxu0
        %v1157 = vadd.f32 %v1112, %v1156
        %1158 = vdwg.mxu0
        %1159 = vmatpush.msra.mxu0 0.0
        %1160 = vmatpush.msra.mxu0 0.0
        %1161 = vmatpush.msra.mxu0 0.0
        %1162 = vmatpush.msra.mxu0 0.0
        %1163 = vmatpush.msra.mxu0 0.0
        %1164 = vmatpush.msra.mxu0 0.0
        %1165 = vmatpush.msra.mxu0 0.0
        %1166 = vmatpush.msra.mxu0 0.0
        %1167 = vmatpush.msra.mxu0 0.0
        %1168 = vmatpush.msra.mxu0 0.0
        %1169 = vmatpush.msra.mxu0 0.0
        %1170 = vmatpush.msra.mxu0 0.0
        %1171 = vmatpush.msra.mxu0 %v1098
        %1172 = vmatpush.msra.mxu0 %v1097
        %1173 = vmatpush.msra.mxu0 %v1096
        %1174 = vmatpush.msra.mxu0 %v1095
        %1175 = vmatmul.f32.gmra.mxu0 %v1005
        %v1176 = vpop.f32.mrf.mxu0
        %v1177 = vadd.f32 %v1113, %v1176
        %1178 = vdwg.mxu0
        %1179 = vmatpush.msra.mxu0 0.0
        %1180 = vmatpush.msra.mxu0 0.0
        %1181 = vmatpush.msra.mxu0 0.0
        %1182 = vmatpush.msra.mxu0 0.0
        %1183 = vmatpush.msra.mxu0 0.0
        %1184 = vmatpush.msra.mxu0 0.0
        %1185 = vmatpush.msra.mxu0 0.0
        %1186 = vmatpush.msra.mxu0 0.0
        %1187 = vmatpush.msra.mxu0 0.0
        %1188 = vmatpush.msra.mxu0 0.0
        %1189 = vmatpush.msra.mxu0 0.0
        %1190 = vmatpush.msra.mxu0 0.0
        %1191 = vmatpush.msra.mxu0 %v1102
        %1192 = vmatpush.msra.mxu0 %v1101
        %1193 = vmatpush.msra.mxu0 %v1100
        %1194 = vmatpush.msra.mxu0 %v1099
        %1195 = vmatmul.f32.gmra.mxu0 %v1005
        %v1196 = vpop.f32.mrf.mxu0
        %v1197 = vadd.f32 %v1114, %v1196
        %1198 = vdwg.mxu0
        %v1199 = vld [vmem:[%s9] sm:$0xff]
        %v1200 = vld [vmem:[%s9 + $0x8] sm:$0xff]
        %v1201 = vld [vmem:[%s9 + $0x10] sm:$0xff]
        %v1202 = vld [vmem:[%s9 + $0x18] sm:$0xff]
        %v1203 = vld [vmem:[%s9 + $0x20] sm:$0xff]
        %v1204 = vld [vmem:[%s9 + $0x28] sm:$0xff]
        %v1205 = vld [vmem:[%s9 + $0x30] sm:$0xff]
        %v1206 = vld [vmem:[%s9 + $0x38] sm:$0xff]
        %v1207 = vld [vmem:[%s9 + $0x40] sm:$0xff]
        %v1208 = vld [vmem:[%s9 + $0x48] sm:$0xff]
        %v1209 = vld [vmem:[%s9 + $0x50] sm:$0xff]
        %v1210 = vld [vmem:[%s9 + $0x58] sm:$0xff]
        %v1211 = vld [vmem:[%s9 + $0x60] sm:$0xff]
        %v1212 = vld [vmem:[%s9 + $0x68] sm:$0xff]
        %v1213 = vld [vmem:[%s9 + $0x70] sm:$0xff]
        %v1214 = vld [vmem:[%s9 + $0x78] sm:$0xff]
        %v1215 = vld [vmem:[%s10] sm:$0x1]
        %v1216 = vld [vmem:[%s10 + $0x1] sm:$0x1]
        %v1217 = vld [vmem:[%s10 + $0x2] sm:$0x1]
        %v1218 = vld [vmem:[%s10 + $0x3] sm:$0x1]
        %v1223 = vperm.slane %v1215, 0
        %v1224 = vperm.slane %v1216, 0
        %v1225 = vperm.slane %v1217, 0
        %v1226 = vperm.slane %v1218, 0
        %1231 = vmatpush.msra.mxu0 0.0
        %1232 = vmatpush.msra.mxu0 0.0
        %1233 = vmatpush.msra.mxu0 0.0
        %1234 = vmatpush.msra.mxu0 0.0
        %1235 = vmatpush.msra.mxu0 0.0
        %1236 = vmatpush.msra.mxu0 0.0
        %1237 = vmatpush.msra.mxu0 0.0
        %1238 = vmatpush.msra.mxu0 0.0
        %1239 = vmatpush.msra.mxu0 0.0
        %1240 = vmatpush.msra.mxu0 0.0
        %1241 = vmatpush.msra.mxu0 0.0
        %1242 = vmatpush.msra.mxu0 0.0
        %1243 = vmatpush.msra.mxu0 %v1202
        %1244 = vmatpush.msra.mxu0 %v1201
        %1245 = vmatpush.msra.mxu0 %v1200
        %1246 = vmatpush.msra.mxu0 %v1199
        %1247 = vmatmul.f32.gmra.mxu0 %v1005
        %v1248 = vpop.f32.mrf.mxu0
        %v1249 = vadd.f32 %v1223, %v1248
        %1250 = vdwg.mxu0
        %1251 = vmatpush.msra.mxu0 0.0
        %1252 = vmatpush.msra.mxu0 0.0
        %1253 = vmatpush.msra.mxu0 0.0
        %1254 = vmatpush.msra.mxu0 0.0
        %1255 = vmatpush.msra.mxu0 0.0
        %1256 = vmatpush.msra.mxu0 0.0
        %1257 = vmatpush.msra.mxu0 0.0
        %1258 = vmatpush.msra.mxu0 0.0
        %1259 = vmatpush.msra.mxu0 0.0
        %1260 = vmatpush.msra.mxu0 0.0
        %1261 = vmatpush.msra.mxu0 0.0
        %1262 = vmatpush.msra.mxu0 0.0
        %1263 = vmatpush.msra.mxu0 %v1206
        %1264 = vmatpush.msra.mxu0 %v1205
        %1265 = vmatpush.msra.mxu0 %v1204
        %1266 = vmatpush.msra.mxu0 %v1203
        %1267 = vmatmul.f32.gmra.mxu0 %v1005
        %v1268 = vpop.f32.mrf.mxu0
        %v1269 = vadd.f32 %v1224, %v1268
        %1270 = vdwg.mxu0
        %1271 = vmatpush.msra.mxu0 0.0
        %1272 = vmatpush.msra.mxu0 0.0
        %1273 = vmatpush.msra.mxu0 0.0
        %1274 = vmatpush.msra.mxu0 0.0
        %1275 = vmatpush.msra.mxu0 0.0
        %1276 = vmatpush.msra.mxu0 0.0
        %1277 = vmatpush.msra.mxu0 0.0
        %1278 = vmatpush.msra.mxu0 0.0
        %1279 = vmatpush.msra.mxu0 0.0
        %1280 = vmatpush.msra.mxu0 0.0
        %1281 = vmatpush.msra.mxu0 0.0
        %1282 = vmatpush.msra.mxu0 0.0
        %1283 = vmatpush.msra.mxu0 %v1210
        %1284 = vmatpush.msra.mxu0 %v1209
        %1285 = vmatpush.msra.mxu0 %v1208
        %1286 = vmatpush.msra.mxu0 %v1207
        %1287 = vmatmul.f32.gmra.mxu0 %v1005
        %v1288 = vpop.f32.mrf.mxu0
        %v1289 = vadd.f32 %v1225, %v1288
        %1290 = vdwg.mxu0
        %1291 = vmatpush.msra.mxu0 0.0
        %1292 = vmatpush.msra.mxu0 0.0
        %1293 = vmatpush.msra.mxu0 0.0
        %1294 = vmatpush.msra.mxu0 0.0
        %1295 = vmatpush.msra.mxu0 0.0
        %1296 = vmatpush.msra.mxu0 0.0
        %1297 = vmatpush.msra.mxu0 0.0
        %1298 = vmatpush.msra.mxu0 0.0
        %1299 = vmatpush.msra.mxu0 0.0
        %1300 = vmatpush.msra.mxu0 0.0
        %1301 = vmatpush.msra.mxu0 0.0
        %1302 = vmatpush.msra.mxu0 0.0
        %1303 = vmatpush.msra.mxu0 %v1214
        %1304 = vmatpush.msra.mxu0 %v1213
        %1305 = vmatpush.msra.mxu0 %v1212
        %1306 = vmatpush.msra.mxu0 %v1211
        %1307 = vmatmul.f32.gmra.mxu0 %v1005
        %v1308 = vpop.f32.mrf.mxu0
        %v1309 = vadd.f32 %v1226, %v1308
        %1310 = vdwg.mxu0
        %vm1311 = vcmask 64512
        %v1313 = vsel %vm1311, %v1025, 0
        %v1316 = vsel %vm1311, %v1137, 0
        %1318 = vmatpush.xpose.msra.mxu0 0.0
        %1319 = vmatpush.xpose.msra.mxu0 0.0
        %1320 = vmatpush.xpose.msra.mxu0 0.0
        %1321 = vmatpush.xpose.msra.mxu0 0.0
        %1322 = vmatpush.xpose.msra.mxu0 0.0
        %1323 = vmatpush.xpose.msra.mxu0 0.0
        %1324 = vmatpush.xpose.msra.mxu0 0.0
        %1325 = vmatpush.xpose.msra.mxu0 0.0
        %1326 = vmatpush.xpose.msra.mxu0 0.0
        %1327 = vmatpush.xpose.msra.mxu0 0.0
        %1328 = vmatpush.xpose.msra.mxu0 0.0
        %1329 = vmatpush.xpose.msra.mxu0 0.0
        %1330 = vmatpush.xpose.msra.mxu0 0.0
        %1331 = vmatpush.xpose.msra.mxu0 0.0
        %1332 = vmatpush.xpose.msra.mxu0 0.0
        %1333 = vmatpush.xpose.msra.mxu0 %v1316
        %1334 = vmatmul.f32.gmra.mxu0 %v1313
        %v1335 = vpop.f32.mrf.mxu0
        %v1336 = vadd.f32 0.0, %v1335
        %1337 = vdwg.mxu0
        %v1339 = vsel %vm1311, %v1045, 0
        %v1342 = vsel %vm1311, %v1157, 0
        %1344 = vmatpush.xpose.msra.mxu0 0.0
        %1345 = vmatpush.xpose.msra.mxu0 0.0
        %1346 = vmatpush.xpose.msra.mxu0 0.0
        %1347 = vmatpush.xpose.msra.mxu0 0.0
        %1348 = vmatpush.xpose.msra.mxu0 0.0
        %1349 = vmatpush.xpose.msra.mxu0 0.0
        %1350 = vmatpush.xpose.msra.mxu0 0.0
        %1351 = vmatpush.xpose.msra.mxu0 0.0
        %1352 = vmatpush.xpose.msra.mxu0 0.0
        %1353 = vmatpush.xpose.msra.mxu0 0.0
        %1354 = vmatpush.xpose.msra.mxu0 0.0
        %1355 = vmatpush.xpose.msra.mxu0 0.0
        %1356 = vmatpush.xpose.msra.mxu0 0.0
        %1357 = vmatpush.xpose.msra.mxu0 0.0
        %1358 = vmatpush.xpose.msra.mxu0 0.0
        %1359 = vmatpush.xpose.msra.mxu0 %v1342
        %1360 = vmatmul.f32.gmra.mxu0 %v1339
        %v1361 = vpop.f32.mrf.mxu0
        %v1362 = vadd.f32 0.0, %v1361
        %1363 = vdwg.mxu0
        %v1365 = vsel %vm1311, %v1065, 0
        %v1368 = vsel %vm1311, %v1177, 0
        %1370 = vmatpush.xpose.msra.mxu0 0.0
        %1371 = vmatpush.xpose.msra.mxu0 0.0
        %1372 = vmatpush.xpose.msra.mxu0 0.0
        %1373 = vmatpush.xpose.msra.mxu0 0.0
        %1374 = vmatpush.xpose.msra.mxu0 0.0
        %1375 = vmatpush.xpose.msra.mxu0 0.0
        %1376 = vmatpush.xpose.msra.mxu0 0.0
        %1377 = vmatpush.xpose.msra.mxu0 0.0
        %1378 = vmatpush.xpose.msra.mxu0 0.0
        %1379 = vmatpush.xpose.msra.mxu0 0.0
        %1380 = vmatpush.xpose.msra.mxu0 0.0
        %1381 = vmatpush.xpose.msra.mxu0 0.0
        %1382 = vmatpush.xpose.msra.mxu0 0.0
        %1383 = vmatpush.xpose.msra.mxu0 0.0
        %1384 = vmatpush.xpose.msra.mxu0 0.0
        %1385 = vmatpush.xpose.msra.mxu0 %v1368
        %1386 = vmatmul.f32.gmra.mxu0 %v1365
        %v1387 = vpop.f32.mrf.mxu0
        %v1388 = vadd.f32 0.0, %v1387
        %1389 = vdwg.mxu0
        %v1391 = vsel %vm1311, %v1085, 0
        %v1394 = vsel %vm1311, %v1197, 0
        %1396 = vmatpush.xpose.msra.mxu0 0.0
        %1397 = vmatpush.xpose.msra.mxu0 0.0
        %1398 = vmatpush.xpose.msra.mxu0 0.0
        %1399 = vmatpush.xpose.msra.mxu0 0.0
        %1400 = vmatpush.xpose.msra.mxu0 0.0
        %1401 = vmatpush.xpose.msra.mxu0 0.0
        %1402 = vmatpush.xpose.msra.mxu0 0.0
        %1403 = vmatpush.xpose.msra.mxu0 0.0
        %1404 = vmatpush.xpose.msra.mxu0 0.0
        %1405 = vmatpush.xpose.msra.mxu0 0.0
        %1406 = vmatpush.xpose.msra.mxu0 0.0
        %1407 = vmatpush.xpose.msra.mxu0 0.0
        %1408 = vmatpush.xpose.msra.mxu0 0.0
        %1409 = vmatpush.xpose.msra.mxu0 0.0
        %1410 = vmatpush.xpose.msra.mxu0 0.0
        %1411 = vmatpush.xpose.msra.mxu0 %v1394
        %1412 = vmatmul.f32.gmra.mxu0 %v1391
        %v1413 = vpop.f32.mrf.mxu0
        %v1414 = vadd.f32 0.0, %v1413
        %1415 = vdwg.mxu0
        %v1416 = vmul.f32 %v1336, 0.35355338
        %v1417 = vmul.f32 %v1362, 0.35355338
        %v1418 = vmul.f32 %v1388, 0.35355338
        %v1419 = vmul.f32 %v1414, 0.35355338
        %vm1420 = vcmask 36864
        %v1421 = vsel %vm1420, %v1416, -inf
        %1422 = vmax.xlane.f32.xlu0 %v1421
        %v1423 = vpop.xlane.xlu0 %1422
        %v1424 = vsel %vm1420, %v1417, -inf
        %1425 = vmax.xlane.f32.xlu0 %v1424
        %v1426 = vpop.xlane.xlu0 %1425
        %v1427 = vsel %vm1420, %v1418, -inf
        %1428 = vmax.xlane.f32.xlu0 %v1427
        %v1429 = vpop.xlane.xlu0 %1428
        %v1430 = vsel %vm1420, %v1419, -inf
        %1431 = vmax.xlane.f32.xlu0 %v1430
        %v1432 = vpop.xlane.xlu0 %1431
        %v1433 = vsub.f32 %v1416, %v1423
        %v1434 = vsub.f32 %v1417, %v1426
        %v1435 = vsub.f32 %v1418, %v1429
        %v1436 = vsub.f32 %v1419, %v1432
        %v1437 = vmul.f32 %v1433, 1.442695
        %v1438 = vpow.pop %v1437
        %v1439 = vmul.f32 %v1434, 1.442695
        %v1440 = vpow.pop %v1439
        %v1441 = vmul.f32 %v1435, 1.442695
        %v1442 = vpow.pop %v1441
        %v1443 = vmul.f32 %v1436, 1.442695
        %v1444 = vpow.pop %v1443
        %v1445 = vsel %vm1420, %v1438, 0.0
        %1446 = vadd.xlane.f32.xlu0 %v1445
        %v1447 = vpop.xlane.xlu0 %1446
        %v1448 = vsel %vm1420, %v1440, 0.0
        %1449 = vadd.xlane.f32.xlu0 %v1448
        %v1450 = vpop.xlane.xlu0 %1449
        %v1451 = vsel %vm1420, %v1442, 0.0
        %1452 = vadd.xlane.f32.xlu0 %v1451
        %v1453 = vpop.xlane.xlu0 %1452
        %v1454 = vsel %vm1420, %v1444, 0.0
        %1455 = vadd.xlane.f32.xlu0 %v1454
        %v1456 = vpop.xlane.xlu0 %1455
        %v1457 = vrcp.pop %v1447
        %v1458 = vmul.f32 %v1447, %v1457
        %v1459 = vsub.f32 1.0, %v1458
        %v1460 = vmul.f32 %v1457, %v1459
        %v1461 = vadd.f32 %v1457, %v1460
        %vm1462 = vweird.f32 %v1447
        %vm1463 = vweird.f32 %v1457
        %vm1464 = vmor %vm1462, %vm1463
        %v1465 = vsel %vm1464, %v1457, %v1461
        %v1466 = vand.u32 2147483647, %v1447
        %vm1467 = vcmp.eq.f32.partialorder %v1466, 8.507059e+37
        %v1468 = vand.u32 %v1447, 2147483648
        %v1469 = vor.u32 1.1754944e-38, %v1468
        %v1470 = vsel %vm1467, %v1469, %v1465
        %v1471 = vmul.f32 %v1438, %v1470
        %v1472 = vrcp.pop %v1450
        %v1473 = vmul.f32 %v1450, %v1472
        %v1474 = vsub.f32 1.0, %v1473
        %v1475 = vmul.f32 %v1472, %v1474
        %v1476 = vadd.f32 %v1472, %v1475
        %vm1477 = vweird.f32 %v1450
        %vm1478 = vweird.f32 %v1472
        %vm1479 = vmor %vm1477, %vm1478
        %v1480 = vsel %vm1479, %v1472, %v1476
        %v1481 = vand.u32 2147483647, %v1450
        %vm1482 = vcmp.eq.f32.partialorder %v1481, 8.507059e+37
        %v1483 = vand.u32 %v1450, 2147483648
        %v1484 = vor.u32 1.1754944e-38, %v1483
        %v1485 = vsel %vm1482, %v1484, %v1480
        %v1486 = vmul.f32 %v1440, %v1485
        %v1487 = vrcp.pop %v1453
        %v1488 = vmul.f32 %v1453, %v1487
        %v1489 = vsub.f32 1.0, %v1488
        %v1490 = vmul.f32 %v1487, %v1489
        %v1491 = vadd.f32 %v1487, %v1490
        %vm1492 = vweird.f32 %v1453
        %vm1493 = vweird.f32 %v1487
        %vm1494 = vmor %vm1492, %vm1493
        %v1495 = vsel %vm1494, %v1487, %v1491
        %v1496 = vand.u32 2147483647, %v1453
        %vm1497 = vcmp.eq.f32.partialorder %v1496, 8.507059e+37
        %v1498 = vand.u32 %v1453, 2147483648
        %v1499 = vor.u32 1.1754944e-38, %v1498
        %v1500 = vsel %vm1497, %v1499, %v1495
        %v1501 = vmul.f32 %v1442, %v1500
        %v1502 = vrcp.pop %v1456
        %v1503 = vmul.f32 %v1456, %v1502
        %v1504 = vsub.f32 1.0, %v1503
        %v1505 = vmul.f32 %v1502, %v1504
        %v1506 = vadd.f32 %v1502, %v1505
        %vm1507 = vweird.f32 %v1456
        %vm1508 = vweird.f32 %v1502
        %vm1509 = vmor %vm1507, %vm1508
        %v1510 = vsel %vm1509, %v1502, %v1506
        %v1511 = vand.u32 2147483647, %v1456
        %vm1512 = vcmp.eq.f32.partialorder %v1511, 8.507059e+37
        %v1513 = vand.u32 %v1456, 2147483648
        %v1514 = vor.u32 1.1754944e-38, %v1513
        %v1515 = vsel %vm1512, %v1514, %v1510
        %v1516 = vmul.f32 %v1444, %v1515
        %vm1517 = vcmask 39936
        %v1519 = vsel %vm1517, %v1471, 0
        %vm1521 = vcmask 1044480
        %v1523 = vsel %vm1521, %v1249, 0
        %1525 = vmatpush.msra.mxu0 0.0
        %1526 = vmatpush.msra.mxu0 0.0
        %1527 = vmatpush.msra.mxu0 0.0
        %1528 = vmatpush.msra.mxu0 0.0
        %1529 = vmatpush.msra.mxu0 0.0
        %1530 = vmatpush.msra.mxu0 0.0
        %1531 = vmatpush.msra.mxu0 0.0
        %1532 = vmatpush.msra.mxu0 0.0
        %1533 = vmatpush.msra.mxu0 0.0
        %1534 = vmatpush.msra.mxu0 0.0
        %1535 = vmatpush.msra.mxu0 0.0
        %1536 = vmatpush.msra.mxu0 0.0
        %1537 = vmatpush.msra.mxu0 0.0
        %1538 = vmatpush.msra.mxu0 0.0
        %1539 = vmatpush.msra.mxu0 0.0
        %1540 = vmatpush.msra.mxu0 %v1523
        %1541 = vmatmul.f32.gmra.mxu0 %v1519
        %v1542 = vpop.f32.mrf.mxu0
        %v1543 = vadd.f32 0.0, %v1542
        %1544 = vdwg.mxu0
        %v1546 = vsel %vm1517, %v1486, 0
        %v1549 = vsel %vm1521, %v1269, 0
        %1551 = vmatpush.msra.mxu0 0.0
        %1552 = vmatpush.msra.mxu0 0.0
        %1553 = vmatpush.msra.mxu0 0.0
        %1554 = vmatpush.msra.mxu0 0.0
        %1555 = vmatpush.msra.mxu0 0.0
        %1556 = vmatpush.msra.mxu0 0.0
        %1557 = vmatpush.msra.mxu0 0.0
        %1558 = vmatpush.msra.mxu0 0.0
        %1559 = vmatpush.msra.mxu0 0.0
        %1560 = vmatpush.msra.mxu0 0.0
        %1561 = vmatpush.msra.mxu0 0.0
        %1562 = vmatpush.msra.mxu0 0.0
        %1563 = vmatpush.msra.mxu0 0.0
        %1564 = vmatpush.msra.mxu0 0.0
        %1565 = vmatpush.msra.mxu0 0.0
        %1566 = vmatpush.msra.mxu0 %v1549
        %1567 = vmatmul.f32.gmra.mxu0 %v1546
        %v1568 = vpop.f32.mrf.mxu0
        %v1569 = vadd.f32 0.0, %v1568
        %1570 = vdwg.mxu0
        %v1572 = vsel %vm1517, %v1501, 0
        %v1575 = vsel %vm1521, %v1289, 0
        %1577 = vmatpush.msra.mxu0 0.0
        %1578 = vmatpush.msra.mxu0 0.0
        %1579 = vmatpush.msra.mxu0 0.0
        %1580 = vmatpush.msra.mxu0 0.0
        %1581 = vmatpush.msra.mxu0 0.0
        %1582 = vmatpush.msra.mxu0 0.0
        %1583 = vmatpush.msra.mxu0 0.0
        %1584 = vmatpush.msra.mxu0 0.0
        %1585 = vmatpush.msra.mxu0 0.0
        %1586 = vmatpush.msra.mxu0 0.0
        %1587 = vmatpush.msra.mxu0 0.0
        %1588 = vmatpush.msra.mxu0 0.0
        %1589 = vmatpush.msra.mxu0 0.0
        %1590 = vmatpush.msra.mxu0 0.0
        %1591 = vmatpush.msra.mxu0 0.0
        %1592 = vmatpush.msra.mxu0 %v1575
        %1593 = vmatmul.f32.gmra.mxu0 %v1572
        %v1594 = vpop.f32.mrf.mxu0
        %v1595 = vadd.f32 0.0, %v1594
        %1596 = vdwg.mxu0
        %v1598 = vsel %vm1517, %v1516, 0
        %v1601 = vsel %vm1521, %v1309, 0
        %1603 = vmatpush.msra.mxu0 0.0
        %1604 = vmatpush.msra.mxu0 0.0
        %1605 = vmatpush.msra.mxu0 0.0
        %1606 = vmatpush.msra.mxu0 0.0
        %1607 = vmatpush.msra.mxu0 0.0
        %1608 = vmatpush.msra.mxu0 0.0
        %1609 = vmatpush.msra.mxu0 0.0
        %1610 = vmatpush.msra.mxu0 0.0
        %1611 = vmatpush.msra.mxu0 0.0
        %1612 = vmatpush.msra.mxu0 0.0
        %1613 = vmatpush.msra.mxu0 0.0
        %1614 = vmatpush.msra.mxu0 0.0
        %1615 = vmatpush.msra.mxu0 0.0
        %1616 = vmatpush.msra.mxu0 0.0
        %1617 = vmatpush.msra.mxu0 0.0
        %1618 = vmatpush.msra.mxu0 %v1601
        %1619 = vmatmul.f32.gmra.mxu0 %v1598
        %v1620 = vpop.f32.mrf.mxu0
        %v1621 = vadd.f32 0.0, %v1620
        %1622 = vdwg.mxu0
        %v1623 = vld [vmem:[%s11] sm:$0xff]
        %v1624 = vld [vmem:[%s11 + $0x8] sm:$0xff]
        %v1625 = vld [vmem:[%s11 + $0x10] sm:$0xff]
        %v1626 = vld [vmem:[%s11 + $0x18] sm:$0xff]
        %v1628 = vsel %vm1311, %v1543, 0
        %1630 = vmatpush.msra.mxu0 0.0
        %1631 = vmatpush.msra.mxu0 0.0
        %1632 = vmatpush.msra.mxu0 0.0
        %1633 = vmatpush.msra.mxu0 0.0
        %1634 = vmatpush.msra.mxu0 0.0
        %1635 = vmatpush.msra.mxu0 0.0
        %1636 = vmatpush.msra.mxu0 0.0
        %1637 = vmatpush.msra.mxu0 0.0
        %1638 = vmatpush.msra.mxu0 0.0
        %1639 = vmatpush.msra.mxu0 0.0
        %1640 = vmatpush.msra.mxu0 0.0
        %1641 = vmatpush.msra.mxu0 0.0
        %1642 = vmatpush.msra.mxu0 0.0
        %1643 = vmatpush.msra.mxu0 0.0
        %1644 = vmatpush.msra.mxu0 0.0
        %1645 = vmatpush.msra.mxu0 %v1623
        %1646 = vmatmul.f32.gmra.mxu0 %v1628
        %v1647 = vpop.f32.mrf.mxu0
        %v1648 = vadd.f32 0.0, %v1647
        %1649 = vdwg.mxu0
        %v1651 = vsel %vm1311, %v1569, 0
        %1653 = vmatpush.msra.mxu0 0.0
        %1654 = vmatpush.msra.mxu0 0.0
        %1655 = vmatpush.msra.mxu0 0.0
        %1656 = vmatpush.msra.mxu0 0.0
        %1657 = vmatpush.msra.mxu0 0.0
        %1658 = vmatpush.msra.mxu0 0.0
        %1659 = vmatpush.msra.mxu0 0.0
        %1660 = vmatpush.msra.mxu0 0.0
        %1661 = vmatpush.msra.mxu0 0.0
        %1662 = vmatpush.msra.mxu0 0.0
        %1663 = vmatpush.msra.mxu0 0.0
        %1664 = vmatpush.msra.mxu0 0.0
        %1665 = vmatpush.msra.mxu0 0.0
        %1666 = vmatpush.msra.mxu0 0.0
        %1667 = vmatpush.msra.mxu0 0.0
        %1668 = vmatpush.msra.mxu0 %v1624
        %1669 = vmatmul.f32.gmra.mxu0 %v1651
        %v1670 = vpop.f32.mrf.mxu0
        %v1671 = vadd.f32 0.0, %v1670
        %1672 = vdwg.mxu0
        %v1674 = vsel %vm1311, %v1595, 0
        %1676 = vmatpush.msra.mxu0 0.0
        %1677 = vmatpush.msra.mxu0 0.0
        %1678 = vmatpush.msra.mxu0 0.0
        %1679 = vmatpush.msra.mxu0 0.0
        %1680 = vmatpush.msra.mxu0 0.0
        %1681 = vmatpush.msra.mxu0 0.0
        %1682 = vmatpush.msra.mxu0 0.0
        %1683 = vmatpush.msra.mxu0 0.0
        %1684 = vmatpush.msra.mxu0 0.0
        %1685 = vmatpush.msra.mxu0 0.0
        %1686 = vmatpush.msra.mxu0 0.0
        %1687 = vmatpush.msra.mxu0 0.0
        %1688 = vmatpush.msra.mxu0 0.0
        %1689 = vmatpush.msra.mxu0 0.0
        %1690 = vmatpush.msra.mxu0 0.0
        %1691 = vmatpush.msra.mxu0 %v1625
        %1692 = vmatmul.f32.gmra.mxu0 %v1674
        %v1693 = vpop.f32.mrf.mxu0
        %v1694 = vadd.f32 0.0, %v1693
        %1695 = vdwg.mxu0
        %v1697 = vsel %vm1311, %v1621, 0
        %1699 = vmatpush.msra.mxu0 0.0
        %1700 = vmatpush.msra.mxu0 0.0
        %1701 = vmatpush.msra.mxu0 0.0
        %1702 = vmatpush.msra.mxu0 0.0
        %1703 = vmatpush.msra.mxu0 0.0
        %1704 = vmatpush.msra.mxu0 0.0
        %1705 = vmatpush.msra.mxu0 0.0
        %1706 = vmatpush.msra.mxu0 0.0
        %1707 = vmatpush.msra.mxu0 0.0
        %1708 = vmatpush.msra.mxu0 0.0
        %1709 = vmatpush.msra.mxu0 0.0
        %1710 = vmatpush.msra.mxu0 0.0
        %1711 = vmatpush.msra.mxu0 0.0
        %1712 = vmatpush.msra.mxu0 0.0
        %1713 = vmatpush.msra.mxu0 0.0
        %1714 = vmatpush.msra.mxu0 %v1626
        %1715 = vmatmul.f32.gmra.mxu0 %v1697
        %v1716 = vpop.f32.mrf.mxu0
        %v1717 = vadd.f32 0.0, %v1716
        %1718 = vdwg.mxu0
        %v1719 = vsel %vm933, %v1648, 0.0
        %v1720 = vsel %vm933, %v1671, 0.0
        %v1721 = vadd.f32 %v1719, %v1720
        %v1722 = vsel %vm933, %v1694, 0.0
        %v1723 = vadd.f32 %v1721, %v1722
        %v1724 = vsel %vm933, %v1717, 0.0
        %v1725 = vadd.f32 %v1723, %v1724
        %v1726 = vld [vmem:[%s12] sm:$0x1]
        %v1728 = vperm.slane %v1726, 0
        %v1730 = vadd.f32 %v1725, %v1728
        %v1731 = vadd.f32 %v929, %v1730
        %v1732 = vld [vmem:[%s13] sm:$0x1]
        %v1733 = vld [vmem:[%s14] sm:$0x1]
        %v1734 = vsel %vm933, %v1731, 0.0
        %1735 = vadd.xlane.f32.xlu0 %v1734
        %v1736 = vpop.xlane.xlu0 %1735
        %v1737 = vmul.f32 %v1736, %v943
        %v1738 = vsub.f32 %v1731, %v1737
        %v1739 = vmul.f32 %v1738, %v1738
        %v1740 = vsel %vm933, %v1739, 0.0
        %1741 = vadd.xlane.f32.xlu0 %v1740
        %v1742 = vpop.xlane.xlu0 %1741
        %v1743 = vmul.f32 %v1742, %v943
        %v1744 = vadd.f32 %v1743, 1e-06
        %v1745 = vrsqrt.pop %v1744
        %v1746 = vmul.f32 %v1745, %v1744
        %v1747 = vmul.f32 %v1746, %v1745
        %v1748 = vmul.f32 0.5, %v1747
        %v1749 = vsub.f32 1.5, %v1748
        %v1750 = vmul.f32 %v1745, %v1749
        %vm1751 = vweird.f32 %v1744
        %vm1752 = vweird.f32 %v1745
        %vm1753 = vmor %vm1751, %vm1752
        %v1754 = vsel %vm1753, %v1745, %v1750
        %v1755 = vmul.f32 %v1738, %v1754
        %v1757 = vperm.slane %v1732, 0
        %v1759 = vmul.f32 %v1755, %v1757
        %v1761 = vperm.slane %v1733, 0
        %v1763 = vadd.f32 %v1759, %v1761
        %v1764 = vld [vmem:[%s15] sm:$0xff]
        %v1765 = vld [vmem:[%s15 + $0x8] sm:$0xff]
        %v1766 = vld [vmem:[%s15 + $0x10] sm:$0xff]
        %v1767 = vld [vmem:[%s15 + $0x18] sm:$0xff]
        %v1768 = vld [vmem:[%s16] sm:$0x1]
        %v1770 = vperm.slane %v1768, 0
        %v1773 = vsel %vm1003, %v1763, 0
        %1775 = vmatpush.msra.mxu0 0.0
        %1776 = vmatpush.msra.mxu0 0.0
        %1777 = vmatpush.msra.mxu0 0.0
        %1778 = vmatpush.msra.mxu0 0.0
        %1779 = vmatpush.msra.mxu0 0.0
        %1780 = vmatpush.msra.mxu0 0.0
        %1781 = vmatpush.msra.mxu0 0.0
        %1782 = vmatpush.msra.mxu0 0.0
        %1783 = vmatpush.msra.mxu0 0.0
        %1784 = vmatpush.msra.mxu0 0.0
        %1785 = vmatpush.msra.mxu0 0.0
        %1786 = vmatpush.msra.mxu0 0.0
        %1787 = vmatpush.msra.mxu0 %v1767
        %1788 = vmatpush.msra.mxu0 %v1766
        %1789 = vmatpush.msra.mxu0 %v1765
        %1790 = vmatpush.msra.mxu0 %v1764
        %1791 = vmatmul.f32.gmra.mxu0 %v1773
        %v1792 = vpop.f32.mrf.mxu0
        %v1793 = vadd.f32 %v1770, %v1792
        %1794 = vdwg.mxu0
        %v1795 = vmul.f32 %v1793, 0.5
        %v1796 = vmul.f32 %v1793, 0.70710677
        %v1797 = vmul.f32 %v1796, %v1796
        %v1798 = vmin.f32 16.0, %v1797
        %v1799 = vmul.f32 %v1798, 2.1237322e-06
        %v1800 = vadd.f32 %v1799, 0.00028619796
        %v1801 = vmul.f32 %v1798, %v1800
        %v1802 = vadd.f32 %v1801, 0.0036580483
        %v1803 = vmul.f32 %v1798, %v1802
        %v1804 = vadd.f32 %v1803, 0.05243302
        %v1805 = vmul.f32 %v1798, %v1804
        %v1806 = vadd.f32 %v1805, 0.18741608
        %v1807 = vmul.f32 %v1798, %v1806
        %v1808 = vadd.f32 %v1807, 1.1283791
        %v1809 = vmul.f32 %v1796, %v1808
        %v1810 = vmul.f32 %v1798, 3.8918573e-05
        %v1811 = vadd.f32 %v1810, 0.001143296
        %v1812 = vmul.f32 %v1798, %v1811
        %v1813 = vadd.f32 %v1812, 0.014752088
        %v1814 = vmul.f32 %v1798, %v1813
        %v1815 = vadd.f32 %v1814, 0.112945676
        %v1816 = vmul.f32 %v1798, %v1815
        %v1817 = vadd.f32 %v1816, 0.4994258
        %v1818 = vmul.f32 %v1798, %v1817
        %v1819 = vadd.f32 %v1818, 1.0
        %v1820 = vrcp.pop %v1819
        %v1821 = vmul.f32 %v1819, %v1820
        %v1822 = vsub.f32 1.0, %v1821
        %v1823 = vmul.f32 %v1820, %v1822
        %v1824 = vadd.f32 %v1820, %v1823
        %vm1825 = vweird.f32 %v1819
        %vm1826 = vweird.f32 %v1820
        %vm1827 = vmor %vm1825, %vm1826
        %v1828 = vsel %vm1827, %v1820, %v1824
        %v1829 = vand.u32 2147483647, %v1819
        %vm1830 = vcmp.eq.f32.partialorder %v1829, 8.507059e+37
        %v1831 = vand.u32 %v1819, 2147483648
        %v1832 = vor.u32 1.1754944e-38, %v1831
        %v1833 = vsel %vm1830, %v1832, %v1828
        %v1834 = vmul.f32 %v1809, %v1833
        %v1835 = vmin.f32 %v1834, 1.0
        %v1836 = vmax.f32 %v1835, -1.0
        %v1837 = vadd.f32 %v1836, 1.0
        %v1838 = vmul.f32 %v1795, %v1837
        %v1839 = vld [vmem:[%s17] sm:$0xff]
        %v1840 = vld [vmem:[%s17 + $0x8] sm:$0xff]
        %v1841 = vld [vmem:[%s17 + $0x10] sm:$0xff]
        %v1842 = vld [vmem:[%s17 + $0x18] sm:$0xff]
        %v1843 = vld [vmem:[%s17 + $0x20] sm:$0xff]
        %v1844 = vld [vmem:[%s17 + $0x28] sm:$0xff]
        %v1845 = vld [vmem:[%s17 + $0x30] sm:$0xff]
        %v1846 = vld [vmem:[%s17 + $0x38] sm:$0xff]
        %v1847 = vld [vmem:[%s17 + $0x40] sm:$0xff]
        %v1848 = vld [vmem:[%s17 + $0x48] sm:$0xff]
        %v1849 = vld [vmem:[%s17 + $0x50] sm:$0xff]
        %v1850 = vld [vmem:[%s17 + $0x58] sm:$0xff]
        %v1851 = vld [vmem:[%s17 + $0x60] sm:$0xff]
        %v1852 = vld [vmem:[%s17 + $0x68] sm:$0xff]
        %v1853 = vld [vmem:[%s17 + $0x70] sm:$0xff]
        %v1854 = vld [vmem:[%s17 + $0x78] sm:$0xff]
        %v1855 = vld [vmem:[%s18] sm:$0x1]
        %v1857 = vperm.slane %v1855, 0
        %1859 = vmatpush.msra.mxu0 %v1854
        %1860 = vmatpush.msra.mxu0 %v1853
        %1861 = vmatpush.msra.mxu0 %v1852
        %1862 = vmatpush.msra.mxu0 %v1851
        %1863 = vmatpush.msra.mxu0 %v1850
        %1864 = vmatpush.msra.mxu0 %v1849
        %1865 = vmatpush.msra.mxu0 %v1848
        %1866 = vmatpush.msra.mxu0 %v1847
        %1867 = vmatpush.msra.mxu0 %v1846
        %1868 = vmatpush.msra.mxu0 %v1845
        %1869 = vmatpush.msra.mxu0 %v1844
        %1870 = vmatpush.msra.mxu0 %v1843
        %1871 = vmatpush.msra.mxu0 %v1842
        %1872 = vmatpush.msra.mxu0 %v1841
        %1873 = vmatpush.msra.mxu0 %v1840
        %1874 = vmatpush.msra.mxu0 %v1839
        %1875 = vmatmul.f32.gmra.mxu0 %v1838
        %v1876 = vpop.f32.mrf.mxu0
        %v1877 = vadd.f32 %v1857, %v1876
        %1878 = vdwg.mxu0
        %v1879 = vadd.f32 %v1731, %v1877
        %s1880 = scalar_lea.vmem %s3, 1
        %v1881 = vld [vmem:[%s1880] sm:$0x1]
        %s1882 = scalar_lea.vmem %s4, 1
        %v1883 = vld [vmem:[%s1882] sm:$0x1]
        %v1884 = vsel %vm933, %v1879, 0.0
        %1885 = vadd.xlane.f32.xlu0 %v1884
        %v1886 = vpop.xlane.xlu0 %1885
        %v1887 = vmul.f32 %v1886, %v943
        %v1888 = vsub.f32 %v1879, %v1887
        %v1889 = vmul.f32 %v1888, %v1888
        %v1890 = vsel %vm933, %v1889, 0.0
        %1891 = vadd.xlane.f32.xlu0 %v1890
        %v1892 = vpop.xlane.xlu0 %1891
        %v1893 = vmul.f32 %v1892, %v943
        %v1894 = vadd.f32 %v1893, 1e-06
        %v1895 = vrsqrt.pop %v1894
        %v1896 = vmul.f32 %v1895, %v1894
        %v1897 = vmul.f32 %v1896, %v1895
        %v1898 = vmul.f32 0.5, %v1897
        %v1899 = vsub.f32 1.5, %v1898
        %v1900 = vmul.f32 %v1895, %v1899
        %vm1901 = vweird.f32 %v1894
        %vm1902 = vweird.f32 %v1895
        %vm1903 = vmor %vm1901, %vm1902
        %v1904 = vsel %vm1903, %v1895, %v1900
        %v1905 = vmul.f32 %v1888, %v1904
        %v1907 = vperm.slane %v1881, 0
        %v1909 = vmul.f32 %v1905, %v1907
        %v1911 = vperm.slane %v1883, 0
        %v1913 = vadd.f32 %v1909, %v1911
        %s1914 = scalar_lea.vmem %s5, 128
        %v1915 = vld [vmem:[%s1914] sm:$0xff]
        %v1916 = vld [vmem:[%s1914 + $0x8] sm:$0xff]
        %v1917 = vld [vmem:[%s1914 + $0x10] sm:$0xff]
        %v1918 = vld [vmem:[%s1914 + $0x18] sm:$0xff]
        %v1919 = vld [vmem:[%s1914 + $0x20] sm:$0xff]
        %v1920 = vld [vmem:[%s1914 + $0x28] sm:$0xff]
        %v1921 = vld [vmem:[%s1914 + $0x30] sm:$0xff]
        %v1922 = vld [vmem:[%s1914 + $0x38] sm:$0xff]
        %v1923 = vld [vmem:[%s1914 + $0x40] sm:$0xff]
        %v1924 = vld [vmem:[%s1914 + $0x48] sm:$0xff]
        %v1925 = vld [vmem:[%s1914 + $0x50] sm:$0xff]
        %v1926 = vld [vmem:[%s1914 + $0x58] sm:$0xff]
        %v1927 = vld [vmem:[%s1914 + $0x60] sm:$0xff]
        %v1928 = vld [vmem:[%s1914 + $0x68] sm:$0xff]
        %v1929 = vld [vmem:[%s1914 + $0x70] sm:$0xff]
        %v1930 = vld [vmem:[%s1914 + $0x78] sm:$0xff]
        %s1931 = scalar_lea.vmem %s6, 4
        %v1932 = vld [vmem:[%s1931] sm:$0x1]
        %v1933 = vld [vmem:[%s1931 + $0x1] sm:$0x1]
        %v1934 = vld [vmem:[%s1931 + $0x2] sm:$0x1]
        %v1935 = vld [vmem:[%s1931 + $0x3] sm:$0x1]
        %v1940 = vperm.slane %v1932, 0
        %v1941 = vperm.slane %v1933, 0
        %v1942 = vperm.slane %v1934, 0
        %v1943 = vperm.slane %v1935, 0
        %v1949 = vsel %vm1003, %v1913, 0
        %1951 = vmatpush.msra.mxu0 0.0
        %1952 = vmatpush.msra.mxu0 0.0
        %1953 = vmatpush.msra.mxu0 0.0
        %1954 = vmatpush.msra.mxu0 0.0
        %1955 = vmatpush.msra.mxu0 0.0
        %1956 = vmatpush.msra.mxu0 0.0
        %1957 = vmatpush.msra.mxu0 0.0
        %1958 = vmatpush.msra.mxu0 0.0
        %1959 = vmatpush.msra.mxu0 0.0
        %1960 = vmatpush.msra.mxu0 0.0
        %1961 = vmatpush.msra.mxu0 0.0
        %1962 = vmatpush.msra.mxu0 0.0
        %1963 = vmatpush.msra.mxu0 %v1918
        %1964 = vmatpush.msra.mxu0 %v1917
        %1965 = vmatpush.msra.mxu0 %v1916
        %1966 = vmatpush.msra.mxu0 %v1915
        %1967 = vmatmul.f32.gmra.mxu0 %v1949
        %v1968 = vpop.f32.mrf.mxu0
        %v1969 = vadd.f32 %v1940, %v1968
        %1970 = vdwg.mxu0
        %1971 = vmatpush.msra.mxu0 0.0
        %1972 = vmatpush.msra.mxu0 0.0
        %1973 = vmatpush.msra.mxu0 0.0
        %1974 = vmatpush.msra.mxu0 0.0
        %1975 = vmatpush.msra.mxu0 0.0
        %1976 = vmatpush.msra.mxu0 0.0
        %1977 = vmatpush.msra.mxu0 0.0
        %1978 = vmatpush.msra.mxu0 0.0
        %1979 = vmatpush.msra.mxu0 0.0
        %1980 = vmatpush.msra.mxu0 0.0
        %1981 = vmatpush.msra.mxu0 0.0
        %1982 = vmatpush.msra.mxu0 0.0
        %1983 = vmatpush.msra.mxu0 %v1922
        %1984 = vmatpush.msra.mxu0 %v1921
        %1985 = vmatpush.msra.mxu0 %v1920
        %1986 = vmatpush.msra.mxu0 %v1919
        %1987 = vmatmul.f32.gmra.mxu0 %v1949
        %v1988 = vpop.f32.mrf.mxu0
        %v1989 = vadd.f32 %v1941, %v1988
        %1990 = vdwg.mxu0
        %1991 = vmatpush.msra.mxu0 0.0
        %1992 = vmatpush.msra.mxu0 0.0
        %1993 = vmatpush.msra.mxu0 0.0
        %1994 = vmatpush.msra.mxu0 0.0
        %1995 = vmatpush.msra.mxu0 0.0
        %1996 = vmatpush.msra.mxu0 0.0
        %1997 = vmatpush.msra.mxu0 0.0
        %1998 = vmatpush.msra.mxu0 0.0
        %1999 = vmatpush.msra.mxu0 0.0
        %2000 = vmatpush.msra.mxu0 0.0
        %2001 = vmatpush.msra.mxu0 0.0
        %2002 = vmatpush.msra.mxu0 0.0
        %2003 = vmatpush.msra.mxu0 %v1926
        %2004 = vmatpush.msra.mxu0 %v1925
        %2005 = vmatpush.msra.mxu0 %v1924
        %2006 = vmatpush.msra.mxu0 %v1923
        %2007 = vmatmul.f32.gmra.mxu0 %v1949
        %v2008 = vpop.f32.mrf.mxu0
        %v2009 = vadd.f32 %v1942, %v2008
        %2010 = vdwg.mxu0
        %2011 = vmatpush.msra.mxu0 0.0
        %2012 = vmatpush.msra.mxu0 0.0
        %2013 = vmatpush.msra.mxu0 0.0
        %2014 = vmatpush.msra.mxu0 0.0
        %2015 = vmatpush.msra.mxu0 0.0
        %2016 = vmatpush.msra.mxu0 0.0
        %2017 = vmatpush.msra.mxu0 0.0
        %2018 = vmatpush.msra.mxu0 0.0
        %2019 = vmatpush.msra.mxu0 0.0
        %2020 = vmatpush.msra.mxu0 0.0
        %2021 = vmatpush.msra.mxu0 0.0
        %2022 = vmatpush.msra.mxu0 0.0
        %2023 = vmatpush.msra.mxu0 %v1930
        %2024 = vmatpush.msra.mxu0 %v1929
        %2025 = vmatpush.msra.mxu0 %v1928
        %2026 = vmatpush.msra.mxu0 %v1927
        %2027 = vmatmul.f32.gmra.mxu0 %v1949
        %v2028 = vpop.f32.mrf.mxu0
        %v2029 = vadd.f32 %v1943, %v2028
        %2030 = vdwg.mxu0
        %s2031 = scalar_lea.vmem %s7, 128
        %v2032 = vld [vmem:[%s2031] sm:$0xff]
        %v2033 = vld [vmem:[%s2031 + $0x8] sm:$0xff]
        %v2034 = vld [vmem:[%s2031 + $0x10] sm:$0xff]
        %v2035 = vld [vmem:[%s2031 + $0x18] sm:$0xff]
        %v2036 = vld [vmem:[%s2031 + $0x20] sm:$0xff]
        %v2037 = vld [vmem:[%s2031 + $0x28] sm:$0xff]
        %v2038 = vld [vmem:[%s2031 + $0x30] sm:$0xff]
        %v2039 = vld [vmem:[%s2031 + $0x38] sm:$0xff]
        %v2040 = vld [vmem:[%s2031 + $0x40] sm:$0xff]
        %v2041 = vld [vmem:[%s2031 + $0x48] sm:$0xff]
        %v2042 = vld [vmem:[%s2031 + $0x50] sm:$0xff]
        %v2043 = vld [vmem:[%s2031 + $0x58] sm:$0xff]
        %v2044 = vld [vmem:[%s2031 + $0x60] sm:$0xff]
        %v2045 = vld [vmem:[%s2031 + $0x68] sm:$0xff]
        %v2046 = vld [vmem:[%s2031 + $0x70] sm:$0xff]
        %v2047 = vld [vmem:[%s2031 + $0x78] sm:$0xff]
        %s2048 = scalar_lea.vmem %s8, 4
        %v2049 = vld [vmem:[%s2048] sm:$0x1]
        %v2050 = vld [vmem:[%s2048 + $0x1] sm:$0x1]
        %v2051 = vld [vmem:[%s2048 + $0x2] sm:$0x1]
        %v2052 = vld [vmem:[%s2048 + $0x3] sm:$0x1]
        %v2057 = vperm.slane %v2049, 0
        %v2058 = vperm.slane %v2050, 0
        %v2059 = vperm.slane %v2051, 0
        %v2060 = vperm.slane %v2052, 0
        %2065 = vmatpush.msra.mxu0 0.0
        %2066 = vmatpush.msra.mxu0 0.0
        %2067 = vmatpush.msra.mxu0 0.0
        %2068 = vmatpush.msra.mxu0 0.0
        %2069 = vmatpush.msra.mxu0 0.0
        %2070 = vmatpush.msra.mxu0 0.0
        %2071 = vmatpush.msra.mxu0 0.0
        %2072 = vmatpush.msra.mxu0 0.0
        %2073 = vmatpush.msra.mxu0 0.0
        %2074 = vmatpush.msra.mxu0 0.0
        %2075 = vmatpush.msra.mxu0 0.0
        %2076 = vmatpush.msra.mxu0 0.0
        %2077 = vmatpush.msra.mxu0 %v2035
        %2078 = vmatpush.msra.mxu0 %v2034
        %2079 = vmatpush.msra.mxu0 %v2033
        %2080 = vmatpush.msra.mxu0 %v2032
        %2081 = vmatmul.f32.gmra.mxu0 %v1949
        %v2082 = vpop.f32.mrf.mxu0
        %v2083 = vadd.f32 %v2057, %v2082
        %2084 = vdwg.mxu0
        %2085 = vmatpush.msra.mxu0 0.0
        %2086 = vmatpush.msra.mxu0 0.0
        %2087 = vmatpush.msra.mxu0 0.0
        %2088 = vmatpush.msra.mxu0 0.0
        %2089 = vmatpush.msra.mxu0 0.0
        %2090 = vmatpush.msra.mxu0 0.0
        %2091 = vmatpush.msra.mxu0 0.0
        %2092 = vmatpush.msra.mxu0 0.0
        %2093 = vmatpush.msra.mxu0 0.0
        %2094 = vmatpush.msra.mxu0 0.0
        %2095 = vmatpush.msra.mxu0 0.0
        %2096 = vmatpush.msra.mxu0 0.0
        %2097 = vmatpush.msra.mxu0 %v2039
        %2098 = vmatpush.msra.mxu0 %v2038
        %2099 = vmatpush.msra.mxu0 %v2037
        %2100 = vmatpush.msra.mxu0 %v2036
        %2101 = vmatmul.f32.gmra.mxu0 %v1949
        %v2102 = vpop.f32.mrf.mxu0
        %v2103 = vadd.f32 %v2058, %v2102
        %2104 = vdwg.mxu0
        %2105 = vmatpush.msra.mxu0 0.0
        %2106 = vmatpush.msra.mxu0 0.0
        %2107 = vmatpush.msra.mxu0 0.0
        %2108 = vmatpush.msra.mxu0 0.0
        %2109 = vmatpush.msra.mxu0 0.0
        %2110 = vmatpush.msra.mxu0 0.0
        %2111 = vmatpush.msra.mxu0 0.0
        %2112 = vmatpush.msra.mxu0 0.0
        %2113 = vmatpush.msra.mxu0 0.0
        %2114 = vmatpush.msra.mxu0 0.0
        %2115 = vmatpush.msra.mxu0 0.0
        %2116 = vmatpush.msra.mxu0 0.0
        %2117 = vmatpush.msra.mxu0 %v2043
        %2118 = vmatpush.msra.mxu0 %v2042
        %2119 = vmatpush.msra.mxu0 %v2041
        %2120 = vmatpush.msra.mxu0 %v2040
        %2121 = vmatmul.f32.gmra.mxu0 %v1949
        %v2122 = vpop.f32.mrf.mxu0
        %v2123 = vadd.f32 %v2059, %v2122
        %2124 = vdwg.mxu0
        %2125 = vmatpush.msra.mxu0 0.0
        %2126 = vmatpush.msra.mxu0 0.0
        %2127 = vmatpush.msra.mxu0 0.0
        %2128 = vmatpush.msra.mxu0 0.0
        %2129 = vmatpush.msra.mxu0 0.0
        %2130 = vmatpush.msra.mxu0 0.0
        %2131 = vmatpush.msra.mxu0 0.0
        %2132 = vmatpush.msra.mxu0 0.0
        %2133 = vmatpush.msra.mxu0 0.0
        %2134 = vmatpush.msra.mxu0 0.0
        %2135 = vmatpush.msra.mxu0 0.0
        %2136 = vmatpush.msra.mxu0 0.0
        %2137 = vmatpush.msra.mxu0 %v2047
        %2138 = vmatpush.msra.mxu0 %v2046
        %2139 = vmatpush.msra.mxu0 %v2045
        %2140 = vmatpush.msra.mxu0 %v2044
        %2141 = vmatmul.f32.gmra.mxu0 %v1949
        %v2142 = vpop.f32.mrf.mxu0
        %v2143 = vadd.f32 %v2060, %v2142
        %2144 = vdwg.mxu0
        %s2145 = scalar_lea.vmem %s9, 128
        %v2146 = vld [vmem:[%s2145] sm:$0xff]
        %v2147 = vld [vmem:[%s2145 + $0x8] sm:$0xff]
        %v2148 = vld [vmem:[%s2145 + $0x10] sm:$0xff]
        %v2149 = vld [vmem:[%s2145 + $0x18] sm:$0xff]
        %v2150 = vld [vmem:[%s2145 + $0x20] sm:$0xff]
        %v2151 = vld [vmem:[%s2145 + $0x28] sm:$0xff]
        %v2152 = vld [vmem:[%s2145 + $0x30] sm:$0xff]
        %v2153 = vld [vmem:[%s2145 + $0x38] sm:$0xff]
        %v2154 = vld [vmem:[%s2145 + $0x40] sm:$0xff]
        %v2155 = vld [vmem:[%s2145 + $0x48] sm:$0xff]
        %v2156 = vld [vmem:[%s2145 + $0x50] sm:$0xff]
        %v2157 = vld [vmem:[%s2145 + $0x58] sm:$0xff]
        %v2158 = vld [vmem:[%s2145 + $0x60] sm:$0xff]
        %v2159 = vld [vmem:[%s2145 + $0x68] sm:$0xff]
        %v2160 = vld [vmem:[%s2145 + $0x70] sm:$0xff]
        %v2161 = vld [vmem:[%s2145 + $0x78] sm:$0xff]
        %s2162 = scalar_lea.vmem %s10, 4
        %v2163 = vld [vmem:[%s2162] sm:$0x1]
        %v2164 = vld [vmem:[%s2162 + $0x1] sm:$0x1]
        %v2165 = vld [vmem:[%s2162 + $0x2] sm:$0x1]
        %v2166 = vld [vmem:[%s2162 + $0x3] sm:$0x1]
        %v2171 = vperm.slane %v2163, 0
        %v2172 = vperm.slane %v2164, 0
        %v2173 = vperm.slane %v2165, 0
        %v2174 = vperm.slane %v2166, 0
        %2179 = vmatpush.msra.mxu0 0.0
        %2180 = vmatpush.msra.mxu0 0.0
        %2181 = vmatpush.msra.mxu0 0.0
        %2182 = vmatpush.msra.mxu0 0.0
        %2183 = vmatpush.msra.mxu0 0.0
        %2184 = vmatpush.msra.mxu0 0.0
        %2185 = vmatpush.msra.mxu0 0.0
        %2186 = vmatpush.msra.mxu0 0.0
        %2187 = vmatpush.msra.mxu0 0.0
        %2188 = vmatpush.msra.mxu0 0.0
        %2189 = vmatpush.msra.mxu0 0.0
        %2190 = vmatpush.msra.mxu0 0.0
        %2191 = vmatpush.msra.mxu0 %v2149
        %2192 = vmatpush.msra.mxu0 %v2148
        %2193 = vmatpush.msra.mxu0 %v2147
        %2194 = vmatpush.msra.mxu0 %v2146
        %2195 = vmatmul.f32.gmra.mxu0 %v1949
        %v2196 = vpop.f32.mrf.mxu0
        %v2197 = vadd.f32 %v2171, %v2196
        %2198 = vdwg.mxu0
        %2199 = vmatpush.msra.mxu0 0.0
        %2200 = vmatpush.msra.mxu0 0.0
        %2201 = vmatpush.msra.mxu0 0.0
        %2202 = vmatpush.msra.mxu0 0.0
        %2203 = vmatpush.msra.mxu0 0.0
        %2204 = vmatpush.msra.mxu0 0.0
        %2205 = vmatpush.msra.mxu0 0.0
        %2206 = vmatpush.msra.mxu0 0.0
        %2207 = vmatpush.msra.mxu0 0.0
        %2208 = vmatpush.msra.mxu0 0.0
        %2209 = vmatpush.msra.mxu0 0.0
        %2210 = vmatpush.msra.mxu0 0.0
        %2211 = vmatpush.msra.mxu0 %v2153
        %2212 = vmatpush.msra.mxu0 %v2152
        %2213 = vmatpush.msra.mxu0 %v2151
        %2214 = vmatpush.msra.mxu0 %v2150
        %2215 = vmatmul.f32.gmra.mxu0 %v1949
        %v2216 = vpop.f32.mrf.mxu0
        %v2217 = vadd.f32 %v2172, %v2216
        %2218 = vdwg.mxu0
        %2219 = vmatpush.msra.mxu0 0.0
        %2220 = vmatpush.msra.mxu0 0.0
        %2221 = vmatpush.msra.mxu0 0.0
        %2222 = vmatpush.msra.mxu0 0.0
        %2223 = vmatpush.msra.mxu0 0.0
        %2224 = vmatpush.msra.mxu0 0.0
        %2225 = vmatpush.msra.mxu0 0.0
        %2226 = vmatpush.msra.mxu0 0.0
        %2227 = vmatpush.msra.mxu0 0.0
        %2228 = vmatpush.msra.mxu0 0.0
        %2229 = vmatpush.msra.mxu0 0.0
        %2230 = vmatpush.msra.mxu0 0.0
        %2231 = vmatpush.msra.mxu0 %v2157
        %2232 = vmatpush.msra.mxu0 %v2156
        %2233 = vmatpush.msra.mxu0 %v2155
        %2234 = vmatpush.msra.mxu0 %v2154
        %2235 = vmatmul.f32.gmra.mxu0 %v1949
        %v2236 = vpop.f32.mrf.mxu0
        %v2237 = vadd.f32 %v2173, %v2236
        %2238 = vdwg.mxu0
        %2239 = vmatpush.msra.mxu0 0.0
        %2240 = vmatpush.msra.mxu0 0.0
        %2241 = vmatpush.msra.mxu0 0.0
        %2242 = vmatpush.msra.mxu0 0.0
        %2243 = vmatpush.msra.mxu0 0.0
        %2244 = vmatpush.msra.mxu0 0.0
        %2245 = vmatpush.msra.mxu0 0.0
        %2246 = vmatpush.msra.mxu0 0.0
        %2247 = vmatpush.msra.mxu0 0.0
        %2248 = vmatpush.msra.mxu0 0.0
        %2249 = vmatpush.msra.mxu0 0.0
        %2250 = vmatpush.msra.mxu0 0.0
        %2251 = vmatpush.msra.mxu0 %v2161
        %2252 = vmatpush.msra.mxu0 %v2160
        %2253 = vmatpush.msra.mxu0 %v2159
        %2254 = vmatpush.msra.mxu0 %v2158
        %2255 = vmatmul.f32.gmra.mxu0 %v1949
        %v2256 = vpop.f32.mrf.mxu0
        %v2257 = vadd.f32 %v2174, %v2256
        %2258 = vdwg.mxu0
        %v2260 = vsel %vm1311, %v1969, 0
        %v2263 = vsel %vm1311, %v2083, 0
        %2265 = vmatpush.xpose.msra.mxu0 0.0
        %2266 = vmatpush.xpose.msra.mxu0 0.0
        %2267 = vmatpush.xpose.msra.mxu0 0.0
        %2268 = vmatpush.xpose.msra.mxu0 0.0
        %2269 = vmatpush.xpose.msra.mxu0 0.0
        %2270 = vmatpush.xpose.msra.mxu0 0.0
        %2271 = vmatpush.xpose.msra.mxu0 0.0
        %2272 = vmatpush.xpose.msra.mxu0 0.0
        %2273 = vmatpush.xpose.msra.mxu0 0.0
        %2274 = vmatpush.xpose.msra.mxu0 0.0
        %2275 = vmatpush.xpose.msra.mxu0 0.0
        %2276 = vmatpush.xpose.msra.mxu0 0.0
        %2277 = vmatpush.xpose.msra.mxu0 0.0
        %2278 = vmatpush.xpose.msra.mxu0 0.0
        %2279 = vmatpush.xpose.msra.mxu0 0.0
        %2280 = vmatpush.xpose.msra.mxu0 %v2263
        %2281 = vmatmul.f32.gmra.mxu0 %v2260
        %v2282 = vpop.f32.mrf.mxu0
        %v2283 = vadd.f32 0.0, %v2282
        %2284 = vdwg.mxu0
        %v2286 = vsel %vm1311, %v1989, 0
        %v2289 = vsel %vm1311, %v2103, 0
        %2291 = vmatpush.xpose.msra.mxu0 0.0
        %2292 = vmatpush.xpose.msra.mxu0 0.0
        %2293 = vmatpush.xpose.msra.mxu0 0.0
        %2294 = vmatpush.xpose.msra.mxu0 0.0
        %2295 = vmatpush.xpose.msra.mxu0 0.0
        %2296 = vmatpush.xpose.msra.mxu0 0.0
        %2297 = vmatpush.xpose.msra.mxu0 0.0
        %2298 = vmatpush.xpose.msra.mxu0 0.0
        %2299 = vmatpush.xpose.msra.mxu0 0.0
        %2300 = vmatpush.xpose.msra.mxu0 0.0
        %2301 = vmatpush.xpose.msra.mxu0 0.0
        %2302 = vmatpush.xpose.msra.mxu0 0.0
        %2303 = vmatpush.xpose.msra.mxu0 0.0
        %2304 = vmatpush.xpose.msra.mxu0 0.0
        %2305 = vmatpush.xpose.msra.mxu0 0.0
        %2306 = vmatpush.xpose.msra.mxu0 %v2289
        %2307 = vmatmul.f32.gmra.mxu0 %v2286
        %v2308 = vpop.f32.mrf.mxu0
        %v2309 = vadd.f32 0.0, %v2308
        %2310 = vdwg.mxu0
        %v2312 = vsel %vm1311, %v2009, 0
        %v2315 = vsel %vm1311, %v2123, 0
        %2317 = vmatpush.xpose.msra.mxu0 0.0
        %2318 = vmatpush.xpose.msra.mxu0 0.0
        %2319 = vmatpush.xpose.msra.mxu0 0.0
        %2320 = vmatpush.xpose.msra.mxu0 0.0
        %2321 = vmatpush.xpose.msra.mxu0 0.0
        %2322 = vmatpush.xpose.msra.mxu0 0.0
        %2323 = vmatpush.xpose.msra.mxu0 0.0
        %2324 = vmatpush.xpose.msra.mxu0 0.0
        %2325 = vmatpush.xpose.msra.mxu0 0.0
        %2326 = vmatpush.xpose.msra.mxu0 0.0
        %2327 = vmatpush.xpose.msra.mxu0 0.0
        %2328 = vmatpush.xpose.msra.mxu0 0.0
        %2329 = vmatpush.xpose.msra.mxu0 0.0
        %2330 = vmatpush.xpose.msra.mxu0 0.0
        %2331 = vmatpush.xpose.msra.mxu0 0.0
        %2332 = vmatpush.xpose.msra.mxu0 %v2315
        %2333 = vmatmul.f32.gmra.mxu0 %v2312
        %v2334 = vpop.f32.mrf.mxu0
        %v2335 = vadd.f32 0.0, %v2334
        %2336 = vdwg.mxu0
        %v2338 = vsel %vm1311, %v2029, 0
        %v2341 = vsel %vm1311, %v2143, 0
        %2343 = vmatpush.xpose.msra.mxu0 0.0
        %2344 = vmatpush.xpose.msra.mxu0 0.0
        %2345 = vmatpush.xpose.msra.mxu0 0.0
        %2346 = vmatpush.xpose.msra.mxu0 0.0
        %2347 = vmatpush.xpose.msra.mxu0 0.0
        %2348 = vmatpush.xpose.msra.mxu0 0.0
        %2349 = vmatpush.xpose.msra.mxu0 0.0
        %2350 = vmatpush.xpose.msra.mxu0 0.0
        %2351 = vmatpush.xpose.msra.mxu0 0.0
        %2352 = vmatpush.xpose.msra.mxu0 0.0
        %2353 = vmatpush.xpose.msra.mxu0 0.0
        %2354 = vmatpush.xpose.msra.mxu0 0.0
        %2355 = vmatpush.xpose.msra.mxu0 0.0
        %2356 = vmatpush.xpose.msra.mxu0 0.0
        %2357 = vmatpush.xpose.msra.mxu0 0.0
        %2358 = vmatpush.xpose.msra.mxu0 %v2341
        %2359 = vmatmul.f32.gmra.mxu0 %v2338
        %v2360 = vpop.f32.mrf.mxu0
        %v2361 = vadd.f32 0.0, %v2360
        %2362 = vdwg.mxu0
        %v2363 = vmul.f32 %v2283, 0.35355338
        %v2364 = vmul.f32 %v2309, 0.35355338
        %v2365 = vmul.f32 %v2335, 0.35355338
        %v2366 = vmul.f32 %v2361, 0.35355338
        %v2367 = vsel %vm1420, %v2363, -inf
        %2368 = vmax.xlane.f32.xlu0 %v2367
        %v2369 = vpop.xlane.xlu0 %2368
        %v2370 = vsel %vm1420, %v2364, -inf
        %2371 = vmax.xlane.f32.xlu0 %v2370
        %v2372 = vpop.xlane.xlu0 %2371
        %v2373 = vsel %vm1420, %v2365, -inf
        %2374 = vmax.xlane.f32.xlu0 %v2373
        %v2375 = vpop.xlane.xlu0 %2374
        %v2376 = vsel %vm1420, %v2366, -inf
        %2377 = vmax.xlane.f32.xlu0 %v2376
        %v2378 = vpop.xlane.xlu0 %2377
        %v2379 = vsub.f32 %v2363, %v2369
        %v2380 = vsub.f32 %v2364, %v2372
        %v2381 = vsub.f32 %v2365, %v2375
        %v2382 = vsub.f32 %v2366, %v2378
        %v2383 = vmul.f32 %v2379, 1.442695
        %v2384 = vpow.pop %v2383
        %v2385 = vmul.f32 %v2380, 1.442695
        %v2386 = vpow.pop %v2385
        %v2387 = vmul.f32 %v2381, 1.442695
        %v2388 = vpow.pop %v2387
        %v2389 = vmul.f32 %v2382, 1.442695
        %v2390 = vpow.pop %v2389
        %v2391 = vsel %vm1420, %v2384, 0.0
        %2392 = vadd.xlane.f32.xlu0 %v2391
        %v2393 = vpop.xlane.xlu0 %2392
        %v2394 = vsel %vm1420, %v2386, 0.0
        %2395 = vadd.xlane.f32.xlu0 %v2394
        %v2396 = vpop.xlane.xlu0 %2395
        %v2397 = vsel %vm1420, %v2388, 0.0
        %2398 = vadd.xlane.f32.xlu0 %v2397
        %v2399 = vpop.xlane.xlu0 %2398
        %v2400 = vsel %vm1420, %v2390, 0.0
        %2401 = vadd.xlane.f32.xlu0 %v2400
        %v2402 = vpop.xlane.xlu0 %2401
        %v2403 = vrcp.pop %v2393
        %v2404 = vmul.f32 %v2393, %v2403
        %v2405 = vsub.f32 1.0, %v2404
        %v2406 = vmul.f32 %v2403, %v2405
        %v2407 = vadd.f32 %v2403, %v2406
        %vm2408 = vweird.f32 %v2393
        %vm2409 = vweird.f32 %v2403
        %vm2410 = vmor %vm2408, %vm2409
        %v2411 = vsel %vm2410, %v2403, %v2407
        %v2412 = vand.u32 2147483647, %v2393
        %vm2413 = vcmp.eq.f32.partialorder %v2412, 8.507059e+37
        %v2414 = vand.u32 %v2393, 2147483648
        %v2415 = vor.u32 1.1754944e-38, %v2414
        %v2416 = vsel %vm2413, %v2415, %v2411
        %v2417 = vmul.f32 %v2384, %v2416
        %v2418 = vrcp.pop %v2396
        %v2419 = vmul.f32 %v2396, %v2418
        %v2420 = vsub.f32 1.0, %v2419
        %v2421 = vmul.f32 %v2418, %v2420
        %v2422 = vadd.f32 %v2418, %v2421
        %vm2423 = vweird.f32 %v2396
        %vm2424 = vweird.f32 %v2418
        %vm2425 = vmor %vm2423, %vm2424
        %v2426 = vsel %vm2425, %v2418, %v2422
        %v2427 = vand.u32 2147483647, %v2396
        %vm2428 = vcmp.eq.f32.partialorder %v2427, 8.507059e+37
        %v2429 = vand.u32 %v2396, 2147483648
        %v2430 = vor.u32 1.1754944e-38, %v2429
        %v2431 = vsel %vm2428, %v2430, %v2426
        %v2432 = vmul.f32 %v2386, %v2431
        %v2433 = vrcp.pop %v2399
        %v2434 = vmul.f32 %v2399, %v2433
        %v2435 = vsub.f32 1.0, %v2434
        %v2436 = vmul.f32 %v2433, %v2435
        %v2437 = vadd.f32 %v2433, %v2436
        %vm2438 = vweird.f32 %v2399
        %vm2439 = vweird.f32 %v2433
        %vm2440 = vmor %vm2438, %vm2439
        %v2441 = vsel %vm2440, %v2433, %v2437
        %v2442 = vand.u32 2147483647, %v2399
        %vm2443 = vcmp.eq.f32.partialorder %v2442, 8.507059e+37
        %v2444 = vand.u32 %v2399, 2147483648
        %v2445 = vor.u32 1.1754944e-38, %v2444
        %v2446 = vsel %vm2443, %v2445, %v2441
        %v2447 = vmul.f32 %v2388, %v2446
        %v2448 = vrcp.pop %v2402
        %v2449 = vmul.f32 %v2402, %v2448
        %v2450 = vsub.f32 1.0, %v2449
        %v2451 = vmul.f32 %v2448, %v2450
        %v2452 = vadd.f32 %v2448, %v2451
        %vm2453 = vweird.f32 %v2402
        %vm2454 = vweird.f32 %v2448
        %vm2455 = vmor %vm2453, %vm2454
        %v2456 = vsel %vm2455, %v2448, %v2452
        %v2457 = vand.u32 2147483647, %v2402
        %vm2458 = vcmp.eq.f32.partialorder %v2457, 8.507059e+37
        %v2459 = vand.u32 %v2402, 2147483648
        %v2460 = vor.u32 1.1754944e-38, %v2459
        %v2461 = vsel %vm2458, %v2460, %v2456
        %v2462 = vmul.f32 %v2390, %v2461
        %v2464 = vsel %vm1517, %v2417, 0
        %v2467 = vsel %vm1521, %v2197, 0
        %2469 = vmatpush.msra.mxu0 0.0
        %2470 = vmatpush.msra.mxu0 0.0
        %2471 = vmatpush.msra.mxu0 0.0
        %2472 = vmatpush.msra.mxu0 0.0
        %2473 = vmatpush.msra.mxu0 0.0
        %2474 = vmatpush.msra.mxu0 0.0
        %2475 = vmatpush.msra.mxu0 0.0
        %2476 = vmatpush.msra.mxu0 0.0
        %2477 = vmatpush.msra.mxu0 0.0
        %2478 = vmatpush.msra.mxu0 0.0
        %2479 = vmatpush.msra.mxu0 0.0
        %2480 = vmatpush.msra.mxu0 0.0
        %2481 = vmatpush.msra.mxu0 0.0
        %2482 = vmatpush.msra.mxu0 0.0
        %2483 = vmatpush.msra.mxu0 0.0
        %2484 = vmatpush.msra.mxu0 %v2467
        %2485 = vmatmul.f32.gmra.mxu0 %v2464
        %v2486 = vpop.f32.mrf.mxu0
        %v2487 = vadd.f32 0.0, %v2486
        %2488 = vdwg.mxu0
        %v2490 = vsel %vm1517, %v2432, 0
        %v2493 = vsel %vm1521, %v2217, 0
        %2495 = vmatpush.msra.mxu0 0.0
        %2496 = vmatpush.msra.mxu0 0.0
        %2497 = vmatpush.msra.mxu0 0.0
        %2498 = vmatpush.msra.mxu0 0.0
        %2499 = vmatpush.msra.mxu0 0.0
        %2500 = vmatpush.msra.mxu0 0.0
        %2501 = vmatpush.msra.mxu0 0.0
        %2502 = vmatpush.msra.mxu0 0.0
        %2503 = vmatpush.msra.mxu0 0.0
        %2504 = vmatpush.msra.mxu0 0.0
        %2505 = vmatpush.msra.mxu0 0.0
        %2506 = vmatpush.msra.mxu0 0.0
        %2507 = vmatpush.msra.mxu0 0.0
        %2508 = vmatpush.msra.mxu0 0.0
        %2509 = vmatpush.msra.mxu0 0.0
        %2510 = vmatpush.msra.mxu0 %v2493
        %2511 = vmatmul.f32.gmra.mxu0 %v2490
        %v2512 = vpop.f32.mrf.mxu0
        %v2513 = vadd.f32 0.0, %v2512
        %2514 = vdwg.mxu0
        %v2516 = vsel %vm1517, %v2447, 0
        %v2519 = vsel %vm1521, %v2237, 0
        %2521 = vmatpush.msra.mxu0 0.0
        %2522 = vmatpush.msra.mxu0 0.0
        %2523 = vmatpush.msra.mxu0 0.0
        %2524 = vmatpush.msra.mxu0 0.0
        %2525 = vmatpush.msra.mxu0 0.0
        %2526 = vmatpush.msra.mxu0 0.0
        %2527 = vmatpush.msra.mxu0 0.0
        %2528 = vmatpush.msra.mxu0 0.0
        %2529 = vmatpush.msra.mxu0 0.0
        %2530 = vmatpush.msra.mxu0 0.0
        %2531 = vmatpush.msra.mxu0 0.0
        %2532 = vmatpush.msra.mxu0 0.0
        %2533 = vmatpush.msra.mxu0 0.0
        %2534 = vmatpush.msra.mxu0 0.0
        %2535 = vmatpush.msra.mxu0 0.0
        %2536 = vmatpush.msra.mxu0 %v2519
        %2537 = vmatmul.f32.gmra.mxu0 %v2516
        %v2538 = vpop.f32.mrf.mxu0
        %v2539 = vadd.f32 0.0, %v2538
        %2540 = vdwg.mxu0
        %v2542 = vsel %vm1517, %v2462, 0
        %v2545 = vsel %vm1521, %v2257, 0
        %2547 = vmatpush.msra.mxu0 0.0
        %2548 = vmatpush.msra.mxu0 0.0
        %2549 = vmatpush.msra.mxu0 0.0
        %2550 = vmatpush.msra.mxu0 0.0
        %2551 = vmatpush.msra.mxu0 0.0
        %2552 = vmatpush.msra.mxu0 0.0
        %2553 = vmatpush.msra.mxu0 0.0
        %2554 = vmatpush.msra.mxu0 0.0
        %2555 = vmatpush.msra.mxu0 0.0
        %2556 = vmatpush.msra.mxu0 0.0
        %2557 = vmatpush.msra.mxu0 0.0
        %2558 = vmatpush.msra.mxu0 0.0
        %2559 = vmatpush.msra.mxu0 0.0
        %2560 = vmatpush.msra.mxu0 0.0
        %2561 = vmatpush.msra.mxu0 0.0
        %2562 = vmatpush.msra.mxu0 %v2545
        %2563 = vmatmul.f32.gmra.mxu0 %v2542
        %v2564 = vpop.f32.mrf.mxu0
        %v2565 = vadd.f32 0.0, %v2564
        %2566 = vdwg.mxu0
        %s2567 = scalar_lea.vmem %s11, 32
        %v2568 = vld [vmem:[%s2567] sm:$0xff]
        %v2569 = vld [vmem:[%s2567 + $0x8] sm:$0xff]
        %v2570 = vld [vmem:[%s2567 + $0x10] sm:$0xff]
        %v2571 = vld [vmem:[%s2567 + $0x18] sm:$0xff]
        %v2573 = vsel %vm1311, %v2487, 0
        %2575 = vmatpush.msra.mxu0 0.0
        %2576 = vmatpush.msra.mxu0 0.0
        %2577 = vmatpush.msra.mxu0 0.0
        %2578 = vmatpush.msra.mxu0 0.0
        %2579 = vmatpush.msra.mxu0 0.0
        %2580 = vmatpush.msra.mxu0 0.0
        %2581 = vmatpush.msra.mxu0 0.0
        %2582 = vmatpush.msra.mxu0 0.0
        %2583 = vmatpush.msra.mxu0 0.0
        %2584 = vmatpush.msra.mxu0 0.0
        %2585 = vmatpush.msra.mxu0 0.0
        %2586 = vmatpush.msra.mxu0 0.0
        %2587 = vmatpush.msra.mxu0 0.0
        %2588 = vmatpush.msra.mxu0 0.0
        %2589 = vmatpush.msra.mxu0 0.0
        %2590 = vmatpush.msra.mxu0 %v2568
        %2591 = vmatmul.f32.gmra.mxu0 %v2573
        %v2592 = vpop.f32.mrf.mxu0
        %v2593 = vadd.f32 0.0, %v2592
        %2594 = vdwg.mxu0
        %v2596 = vsel %vm1311, %v2513, 0
        %2598 = vmatpush.msra.mxu0 0.0
        %2599 = vmatpush.msra.mxu0 0.0
        %2600 = vmatpush.msra.mxu0 0.0
        %2601 = vmatpush.msra.mxu0 0.0
        %2602 = vmatpush.msra.mxu0 0.0
        %2603 = vmatpush.msra.mxu0 0.0
        %2604 = vmatpush.msra.mxu0 0.0
        %2605 = vmatpush.msra.mxu0 0.0
        %2606 = vmatpush.msra.mxu0 0.0
        %2607 = vmatpush.msra.mxu0 0.0
        %2608 = vmatpush.msra.mxu0 0.0
        %2609 = vmatpush.msra.mxu0 0.0
        %2610 = vmatpush.msra.mxu0 0.0
        %2611 = vmatpush.msra.mxu0 0.0
        %2612 = vmatpush.msra.mxu0 0.0
        %2613 = vmatpush.msra.mxu0 %v2569
        %2614 = vmatmul.f32.gmra.mxu0 %v2596
        %v2615 = vpop.f32.mrf.mxu0
        %v2616 = vadd.f32 0.0, %v2615
        %2617 = vdwg.mxu0
        %v2619 = vsel %vm1311, %v2539, 0
        %2621 = vmatpush.msra.mxu0 0.0
        %2622 = vmatpush.msra.mxu0 0.0
        %2623 = vmatpush.msra.mxu0 0.0
        %2624 = vmatpush.msra.mxu0 0.0
        %2625 = vmatpush.msra.mxu0 0.0
        %2626 = vmatpush.msra.mxu0 0.0
        %2627 = vmatpush.msra.mxu0 0.0
        %2628 = vmatpush.msra.mxu0 0.0
        %2629 = vmatpush.msra.mxu0 0.0
        %2630 = vmatpush.msra.mxu0 0.0
        %2631 = vmatpush.msra.mxu0 0.0
        %2632 = vmatpush.msra.mxu0 0.0
        %2633 = vmatpush.msra.mxu0 0.0
        %2634 = vmatpush.msra.mxu0 0.0
        %2635 = vmatpush.msra.mxu0 0.0
        %2636 = vmatpush.msra.mxu0 %v2570
        %2637 = vmatmul.f32.gmra.mxu0 %v2619
        %v2638 = vpop.f32.mrf.mxu0
        %v2639 = vadd.f32 0.0, %v2638
        %2640 = vdwg.mxu0
        %v2642 = vsel %vm1311, %v2565, 0
        %2644 = vmatpush.msra.mxu0 0.0
        %2645 = vmatpush.msra.mxu0 0.0
        %2646 = vmatpush.msra.mxu0 0.0
        %2647 = vmatpush.msra.mxu0 0.0
        %2648 = vmatpush.msra.mxu0 0.0
        %2649 = vmatpush.msra.mxu0 0.0
        %2650 = vmatpush.msra.mxu0 0.0
        %2651 = vmatpush.msra.mxu0 0.0
        %2652 = vmatpush.msra.mxu0 0.0
        %2653 = vmatpush.msra.mxu0 0.0
        %2654 = vmatpush.msra.mxu0 0.0
        %2655 = vmatpush.msra.mxu0 0.0
        %2656 = vmatpush.msra.mxu0 0.0
        %2657 = vmatpush.msra.mxu0 0.0
        %2658 = vmatpush.msra.mxu0 0.0
        %2659 = vmatpush.msra.mxu0 %v2571
        %2660 = vmatmul.f32.gmra.mxu0 %v2642
        %v2661 = vpop.f32.mrf.mxu0
        %v2662 = vadd.f32 0.0, %v2661
        %2663 = vdwg.mxu0
        %v2664 = vsel %vm933, %v2593, 0.0
        %v2665 = vsel %vm933, %v2616, 0.0
        %v2666 = vadd.f32 %v2664, %v2665
        %v2667 = vsel %vm933, %v2639, 0.0
        %v2668 = vadd.f32 %v2666, %v2667
        %v2669 = vsel %vm933, %v2662, 0.0
        %v2670 = vadd.f32 %v2668, %v2669
        %s2671 = scalar_lea.vmem %s12, 1
        %v2672 = vld [vmem:[%s2671] sm:$0x1]
        %v2674 = vperm.slane %v2672, 0
        %v2676 = vadd.f32 %v2670, %v2674
        %v2677 = vadd.f32 %v1879, %v2676
        %s2678 = scalar_lea.vmem %s13, 1
        %v2679 = vld [vmem:[%s2678] sm:$0x1]
        %s2680 = scalar_lea.vmem %s14, 1
        %v2681 = vld [vmem:[%s2680] sm:$0x1]
        %v2682 = vsel %vm933, %v2677, 0.0
        %2683 = vadd.xlane.f32.xlu0 %v2682
        %v2684 = vpop.xlane.xlu0 %2683
        %v2685 = vmul.f32 %v2684, %v943
        %v2686 = vsub.f32 %v2677, %v2685
        %v2687 = vmul.f32 %v2686, %v2686
        %v2688 = vsel %vm933, %v2687, 0.0
        %2689 = vadd.xlane.f32.xlu0 %v2688
        %v2690 = vpop.xlane.xlu0 %2689
        %v2691 = vmul.f32 %v2690, %v943
        %v2692 = vadd.f32 %v2691, 1e-06
        %v2693 = vrsqrt.pop %v2692
        %v2694 = vmul.f32 %v2693, %v2692
        %v2695 = vmul.f32 %v2694, %v2693
        %v2696 = vmul.f32 0.5, %v2695
        %v2697 = vsub.f32 1.5, %v2696
        %v2698 = vmul.f32 %v2693, %v2697
        %vm2699 = vweird.f32 %v2692
        %vm2700 = vweird.f32 %v2693
        %vm2701 = vmor %vm2699, %vm2700
        %v2702 = vsel %vm2701, %v2693, %v2698
        %v2703 = vmul.f32 %v2686, %v2702
        %v2705 = vperm.slane %v2679, 0
        %v2707 = vmul.f32 %v2703, %v2705
        %v2709 = vperm.slane %v2681, 0
        %v2711 = vadd.f32 %v2707, %v2709
        %s2712 = scalar_lea.vmem %s15, 32
        %v2713 = vld [vmem:[%s2712] sm:$0xff]
        %v2714 = vld [vmem:[%s2712 + $0x8] sm:$0xff]
        %v2715 = vld [vmem:[%s2712 + $0x10] sm:$0xff]
        %v2716 = vld [vmem:[%s2712 + $0x18] sm:$0xff]
        %s2717 = scalar_lea.vmem %s16, 1
        %v2718 = vld [vmem:[%s2717] sm:$0x1]
        %v2720 = vperm.slane %v2718, 0
        %v2723 = vsel %vm1003, %v2711, 0
        %2725 = vmatpush.msra.mxu0 0.0
        %2726 = vmatpush.msra.mxu0 0.0
        %2727 = vmatpush.msra.mxu0 0.0
        %2728 = vmatpush.msra.mxu0 0.0
        %2729 = vmatpush.msra.mxu0 0.0
        %2730 = vmatpush.msra.mxu0 0.0
        %2731 = vmatpush.msra.mxu0 0.0
        %2732 = vmatpush.msra.mxu0 0.0
        %2733 = vmatpush.msra.mxu0 0.0
        %2734 = vmatpush.msra.mxu0 0.0
        %2735 = vmatpush.msra.mxu0 0.0
        %2736 = vmatpush.msra.mxu0 0.0
        %2737 = vmatpush.msra.mxu0 %v2716
        %2738 = vmatpush.msra.mxu0 %v2715
        %2739 = vmatpush.msra.mxu0 %v2714
        %2740 = vmatpush.msra.mxu0 %v2713
        %2741 = vmatmul.f32.gmra.mxu0 %v2723
        %v2742 = vpop.f32.mrf.mxu0
        %v2743 = vadd.f32 %v2720, %v2742
        %2744 = vdwg.mxu0
        %v2745 = vmul.f32 %v2743, 0.5
        %v2746 = vmul.f32 %v2743, 0.70710677
        %v2747 = vmul.f32 %v2746, %v2746
        %v2748 = vmin.f32 16.0, %v2747
        %v2749 = vmul.f32 %v2748, 2.1237322e-06
        %v2750 = vadd.f32 %v2749, 0.00028619796
        %v2751 = vmul.f32 %v2748, %v2750
        %v2752 = vadd.f32 %v2751, 0.0036580483
        %v2753 = vmul.f32 %v2748, %v2752
        %v2754 = vadd.f32 %v2753, 0.05243302
        %v2755 = vmul.f32 %v2748, %v2754
        %v2756 = vadd.f32 %v2755, 0.18741608
        %v2757 = vmul.f32 %v2748, %v2756
        %v2758 = vadd.f32 %v2757, 1.1283791
        %v2759 = vmul.f32 %v2746, %v2758
        %v2760 = vmul.f32 %v2748, 3.8918573e-05
        %v2761 = vadd.f32 %v2760, 0.001143296
        %v2762 = vmul.f32 %v2748, %v2761
        %v2763 = vadd.f32 %v2762, 0.014752088
        %v2764 = vmul.f32 %v2748, %v2763
        %v2765 = vadd.f32 %v2764, 0.112945676
        %v2766 = vmul.f32 %v2748, %v2765
        %v2767 = vadd.f32 %v2766, 0.4994258
        %v2768 = vmul.f32 %v2748, %v2767
        %v2769 = vadd.f32 %v2768, 1.0
        %v2770 = vrcp.pop %v2769
        %v2771 = vmul.f32 %v2769, %v2770
        %v2772 = vsub.f32 1.0, %v2771
        %v2773 = vmul.f32 %v2770, %v2772
        %v2774 = vadd.f32 %v2770, %v2773
        %vm2775 = vweird.f32 %v2769
        %vm2776 = vweird.f32 %v2770
        %vm2777 = vmor %vm2775, %vm2776
        %v2778 = vsel %vm2777, %v2770, %v2774
        %v2779 = vand.u32 2147483647, %v2769
        %vm2780 = vcmp.eq.f32.partialorder %v2779, 8.507059e+37
        %v2781 = vand.u32 %v2769, 2147483648
        %v2782 = vor.u32 1.1754944e-38, %v2781
        %v2783 = vsel %vm2780, %v2782, %v2778
        %v2784 = vmul.f32 %v2759, %v2783
        %v2785 = vmin.f32 %v2784, 1.0
        %v2786 = vmax.f32 %v2785, -1.0
        %v2787 = vadd.f32 %v2786, 1.0
        %v2788 = vmul.f32 %v2745, %v2787
        %s2789 = scalar_lea.vmem %s17, 128
        %v2790 = vld [vmem:[%s2789] sm:$0xff]
        %v2791 = vld [vmem:[%s2789 + $0x8] sm:$0xff]
        %v2792 = vld [vmem:[%s2789 + $0x10] sm:$0xff]
        %v2793 = vld [vmem:[%s2789 + $0x18] sm:$0xff]
        %v2794 = vld [vmem:[%s2789 + $0x20] sm:$0xff]
        %v2795 = vld [vmem:[%s2789 + $0x28] sm:$0xff]
        %v2796 = vld [vmem:[%s2789 + $0x30] sm:$0xff]
        %v2797 = vld [vmem:[%s2789 + $0x38] sm:$0xff]
        %v2798 = vld [vmem:[%s2789 + $0x40] sm:$0xff]
        %v2799 = vld [vmem:[%s2789 + $0x48] sm:$0xff]
        %v2800 = vld [vmem:[%s2789 + $0x50] sm:$0xff]
        %v2801 = vld [vmem:[%s2789 + $0x58] sm:$0xff]
        %v2802 = vld [vmem:[%s2789 + $0x60] sm:$0xff]
        %v2803 = vld [vmem:[%s2789 + $0x68] sm:$0xff]
        %v2804 = vld [vmem:[%s2789 + $0x70] sm:$0xff]
        %v2805 = vld [vmem:[%s2789 + $0x78] sm:$0xff]
        %s2806 = scalar_lea.vmem %s18, 1
        %v2807 = vld [vmem:[%s2806] sm:$0x1]
        %v2809 = vperm.slane %v2807, 0
        %2811 = vmatpush.msra.mxu0 %v2805
        %2812 = vmatpush.msra.mxu0 %v2804
        %2813 = vmatpush.msra.mxu0 %v2803
        %2814 = vmatpush.msra.mxu0 %v2802
        %2815 = vmatpush.msra.mxu0 %v2801
        %2816 = vmatpush.msra.mxu0 %v2800
        %2817 = vmatpush.msra.mxu0 %v2799
        %2818 = vmatpush.msra.mxu0 %v2798
        %2819 = vmatpush.msra.mxu0 %v2797
        %2820 = vmatpush.msra.mxu0 %v2796
        %2821 = vmatpush.msra.mxu0 %v2795
        %2822 = vmatpush.msra.mxu0 %v2794
        %2823 = vmatpush.msra.mxu0 %v2793
        %2824 = vmatpush.msra.mxu0 %v2792
        %2825 = vmatpush.msra.mxu0 %v2791
        %2826 = vmatpush.msra.mxu0 %v2790
        %2827 = vmatmul.f32.gmra.mxu0 %v2788
        %v2828 = vpop.f32.mrf.mxu0
        %v2829 = vadd.f32 %v2809, %v2828
        %2830 = vdwg.mxu0
        %v2831 = vadd.f32 %v2677, %v2829
        %v2832 = vld [vmem:[%s19] sm:$0x1]
        %v2833 = vld [vmem:[%s20] sm:$0x1]
        %vm2834 = vcmask 253952
        %v2835 = vsel %vm2834, %v2831, 0.0
        %2836 = vadd.xlane.f32.xlu0 %v2835
        %v2837 = vpop.xlane.xlu0 %2836
        %v2838 = vmul.f32 %v2837, %v943
        %v2839 = vsub.f32 %v2831, %v2838
        %v2840 = vmul.f32 %v2839, %v2839
        %v2841 = vsel %vm2834, %v2840, 0.0
        %2842 = vadd.xlane.f32.xlu0 %v2841
        %v2843 = vpop.xlane.xlu0 %2842
        %v2844 = vmul.f32 %v2843, %v943
        %v2845 = vadd.f32 %v2844, 1e-06
        %v2846 = vrsqrt.pop %v2845
        %v2847 = vmul.f32 %v2846, %v2845
        %v2848 = vmul.f32 %v2847, %v2846
        %v2849 = vmul.f32 0.5, %v2848
        %v2850 = vsub.f32 1.5, %v2849
        %v2851 = vmul.f32 %v2846, %v2850
        %vm2852 = vweird.f32 %v2845
        %vm2853 = vweird.f32 %v2846
        %vm2854 = vmor %vm2852, %vm2853
        %v2855 = vsel %vm2854, %v2846, %v2851
        %v2856 = vmul.f32 %v2839, %v2855
        %v2857 = vmul.f32 %v2856, %v2832
        %v2858 = vadd.f32 %v2857, %v2833
        %v2859 = vld [vmem:[%s21] sm:$0xff]
        %v2860 = vld [vmem:[%s21 + $0x8] sm:$0xff]
        %v2861 = vld [vmem:[%s21 + $0x10] sm:$0xff]
        %v2862 = vld [vmem:[%s21 + $0x18] sm:$0xff]
        %v2863 = vld [vmem:[%s22] sm:$0x1]
        %v2865 = vsel %vm1003, %v2858, 0
        %2867 = vmatpush.msra.mxu0 0.0
        %2868 = vmatpush.msra.mxu0 0.0
        %2869 = vmatpush.msra.mxu0 0.0
        %2870 = vmatpush.msra.mxu0 0.0
        %2871 = vmatpush.msra.mxu0 0.0
        %2872 = vmatpush.msra.mxu0 0.0
        %2873 = vmatpush.msra.mxu0 0.0
        %2874 = vmatpush.msra.mxu0 0.0
        %2875 = vmatpush.msra.mxu0 0.0
        %2876 = vmatpush.msra.mxu0 0.0
        %2877 = vmatpush.msra.mxu0 0.0
        %2878 = vmatpush.msra.mxu0 0.0
        %2879 = vmatpush.msra.mxu0 %v2862
        %2880 = vmatpush.msra.mxu0 %v2861
        %2881 = vmatpush.msra.mxu0 %v2860
        %2882 = vmatpush.msra.mxu0 %v2859
        %2883 = vmatmul.f32.gmra.mxu0 %v2865
        %v2884 = vpop.f32.mrf.mxu0
        %v2885 = vadd.f32 %v2863, %v2884
        %2886 = vdwg.mxu0
        %2887 = vst [vmem:[%s702] sm:$0x1] %v2885
        %s2888 = sand.u32 %s533, 1
        %s2889 = scalar_lea.sflag [#allocation3], %s2888
        %s2890 = sand.u32 %s533, 1
        %s2891 = scalar_lea.vmem [#allocation2], %s2890
        // Predicated region
        $region113: #{vit_forward.1} parent=111 // pred_check
          %p2892 = pneg %p543
        $region114: #{vit_forward.1} parent=111 // pred_check_branch
          %2894 = sbr.rel (%p2892) target = $region116
        $region115: #{vit_forward.1} parent=111 // pred_region
          %2896 = vsyncadd %s2889, 0
          %s2897 = scalar_lea.hbm %s23, %s37
          %s2899 = sshll.u32 %s2891, 4
          %s2900 = int_to_ptr.vmem [resolvable:$true] %s2899
          %s2901 = sshll.u32 %s2897, 4
          %s2902 = int_to_ptr.hbm [resolvable:$true] %s2901
          %2904 = dma.vmem_to_hbm [thread:$0]  %s2900, 16, %s2902, %s2889
        $region116: #{vit_forward.1} parent=111 // pred_fallthru
          _
      $region112: #{vit_forward.1} parent=5 // pred_fallthru
        _
      %p2905 = scmp.le.s32.totalorder 2, %s32
      // Predicated region
      $region117: #{vit_forward.1} parent=5 // pred_check
        %p2906 = pneg %p2905
      $region118: #{vit_forward.1} parent=5 // pred_check_branch
        %2908 = sbr.rel (%p2906) target = $region120
      $region119: #{vit_forward.1} parent=5 // pred_region
        %s2909 = ssub.s32 %s32, 2
        // Predicated region
        $region121: #{vit_forward.1} parent=119 // pred_check
          %p2910 = pneg %p549
        $region122: #{vit_forward.1} parent=119 // pred_check_branch
          %2912 = sbr.rel (%p2910) target = $region124
        $region123: #{vit_forward.1} parent=119 // pred_region
          %s2913 = sand.u32 %s534, 1
          %s2914 = scalar_lea.sflag [#allocation3], %s2913
          %s2915 = sand.u32 %s534, 1
          %s2916 = scalar_lea.vmem [#allocation2], %s2915
          %2918 = dma.done %s2914, 16
        $region124: #{vit_forward.1} parent=119 // pred_fallthru
          _
      $region120: #{vit_forward.1} parent=5 // pred_fallthru
        _
    $region6: #{vit_forward.1} parent=1 // loop_footer
      %s36 = sadd.s32 1, %s32
    $region7: #{vit_forward.1} parent=1 // loop_footer_branch
      %31 = sbr.rel target = $region3
    $region8: #{vit_forward.1} parent=1 // loop_exit
      _
    %2919 = vsyncpa [#allocation3], 1
    %s2920 = scalar_lea.sflag [#allocation3], 1
    %2921 = vsyncpa %s2920, 1

</llo_original>
